<compile_context>
chip_gen: v7x
topology: tpu7x:2x2x1
jax: 0.10.0
libtpu: 0.0.40
codegen_flags: <defaults>
</compile_context>

<pallas_src>
import math

import numpy as np
import jax
import jax.numpy as jnp
from jax import lax
from jax.experimental import pallas as pl
from jax.experimental.pallas import tpu as pltpu

# ---------------- model config (small, deterministic) ----------------
B = 2            # batch
L = 8            # sequence length (power of two -> cheap row-in-seq via bitand)
BL = B * L       # flattened rows
D = 32           # encoder_dim
H = 2            # encoder_head
DK = D // H      # per-head dim (d_k == d_v)
D_FF = 64        # encoder_conv1d_filter_size
K1 = 9           # first conv kernel size (padding K1//2)
N_LAYERS = 2     # decoder_n_layer
PAD = 0          # PAD index
MAX_SEQ = 16     # max_seq_len (n_position = MAX_SEQ + 1)
EPS = 1e-5       # nn.LayerNorm default eps
_BF16 = jnp.bfloat16


# ---------------- fused decoder kernel ----------------
def decoder_kernel(x_ref, pos_ref, nonpad_ref, bias_ref,
                   wqkv_ref, bqkv_ref, wo_ref, bo_ref, ln1g_ref, ln1b_ref,
                   w1_ref, b1_ref, w2_ref, b2_ref, ln2g_ref, ln2b_ref,
                   out_ref):
    """pos-add + N_LAYERS FFT blocks, full flattened batch, single invocation."""
    x = x_ref[...] + pos_ref[...]                         # [BL, D]  f32
    nonpad = nonpad_ref[...]                              # [BL, 1]  1.0 where token != PAD
    bias = bias_ref[...]                                  # [BL, BL] additive attn bias (0 / -1e9)

    # per-tap validity masks for the k=9 conv (within-sequence only, no cross-batch
    # leakage, no out-of-array wrap); computed once, reused by every layer.
    rows = lax.broadcasted_iota(jnp.int32, (BL, 1), 0)
    pos_in_seq = jnp.bitwise_and(rows, L - 1)             # rows % L  (L is a power of two)
    tap_mask = []
    for kk in range(K1):
        sft = kk - K1 // 2
        valid = jnp.logical_and(pos_in_seq + sft >= 0, pos_in_seq + sft < L)
        tap_mask.append(valid.astype(jnp.float32))        # [BL, 1] 0/1

    for l in range(N_LAYERS):                             # unrolled; weights stay in VMEM
        # ---- multi-head self-attention: fused QKV projection ----
        # (1/sqrt(d_k) is pre-folded into the Q columns of wqkv host-side)
        qkv = jnp.dot(x.astype(_BF16), wqkv_ref[l],
                      preferred_element_type=jnp.float32) + bqkv_ref[l]      # [BL, 3D]
        ctxs = []
        for h in range(H):
            lo, hi = h * DK, (h + 1) * DK
            qh = qkv[:, lo:hi].astype(_BF16)
            kh = qkv[:, D + lo:D + hi].astype(_BF16)
            vh = qkv[:, 2 * D + lo:2 * D + hi].astype(_BF16)
            s = jnp.einsum('td,sd->ts', qh, kh,
                           preferred_element_type=jnp.float32) + bias        # [BL, BL]
            m = jnp.max(s, axis=-1, keepdims=True)
            e = jnp.exp(s - m)
            p = e * pl.reciprocal(jnp.sum(e, axis=-1, keepdims=True), approx=True)
            ctxs.append(jnp.dot(p.astype(_BF16), vh,
                                preferred_element_type=jnp.float32))         # [BL, DK]
        ctx = jnp.concatenate(ctxs, axis=-1)                                 # register concat
        att = jnp.dot(ctx.astype(_BF16), wo_ref[l],
                      preferred_element_type=jnp.float32) + bo_ref[l]        # fused out-proj

        # residual + LayerNorm + non-pad mask
        o = att + x
        mu = jnp.mean(o, axis=-1, keepdims=True)
        var = jnp.mean((o - mu) ** 2, axis=-1, keepdims=True)
        o = (o - mu) * lax.rsqrt(var + EPS) * ln1g_ref[l] + ln1b_ref[l]
        o = o * nonpad

        # ---- position-wise FFN: conv1d(k=9,pad=4) via in-register rolled taps ----
        # tap_kk[t] = o[t + kk - 4] within the same batch element, 0 outside; the
        # 9 taps are accumulated as 9 small MXU matmuls (no im2col scratch).
        # TODO(synk): when loading real checkpoints verify w1 repack: tap block kk == W_conv[:, :, kk].T
        acc = jnp.zeros((BL, D_FF), jnp.float32)
        for kk in range(K1):
            sft = kk - K1 // 2
            if sft == 0:
                tap = o
            else:
                tap = pltpu.roll(o, shift=(-sft) % BL, axis=0) * tap_mask[kk]
            acc = acc + jnp.dot(tap.astype(_BF16), w1_ref[l * K1 + kk],
                                preferred_element_type=jnp.float32)
        h1 = jnp.maximum(acc + b1_ref[l], 0.0)                               # [BL, D_FF]
        h2 = jnp.dot(h1.astype(_BF16), w2_ref[l],
                     preferred_element_type=jnp.float32) + b2_ref[l]         # [BL, D]

        # residual + LayerNorm + non-pad mask
        y = h2 + o
        mu2 = jnp.mean(y, axis=-1, keepdims=True)
        var2 = jnp.mean((y - mu2) ** 2, axis=-1, keepdims=True)
        y = (y - mu2) * lax.rsqrt(var2 + EPS) * ln2g_ref[l] + ln2b_ref[l]
        x = y * nonpad

    out_ref[...] = x.astype(out_ref.dtype)


# ---------------- wrapper ----------------
def decoder_forward(enc_seq, enc_pos, pos_table, packed):
    # masks + embedding gather (data-dependent) in plain XLA; everything else fused in Pallas
    nonpad = (enc_pos != PAD).astype(jnp.float32).reshape(BL, 1)
    batch_id = jnp.arange(BL, dtype=jnp.int32) // L
    cross = batch_id[:, None] != batch_id[None, :]           # block off cross-batch attention
    keypad = (enc_pos == PAD).reshape(BL)[None, :]            # key-pad mask
    attn_bias = jnp.where(cross | keypad,
                          jnp.float32(-1e9), jnp.float32(0.0))   # [BL, BL] additive bias
    pos_emb = pos_table[enc_pos].reshape(BL, D)               # embedding gather
    x = enc_seq.reshape(BL, D)

    out = pl.pallas_call(
        decoder_kernel,
        out_shape=jax.ShapeDtypeStruct((BL, D), jnp.float32),
    )(x, pos_emb, nonpad, attn_bias,
      packed['wqkv'], packed['bqkv'], packed['wo'], packed['bo'],
      packed['ln1g'], packed['ln1b'],
      packed['w1'], packed['b1'], packed['w2'], packed['b2'],
      packed['ln2g'], packed['ln2b'])
    return out.reshape(B, L, D)


# ---------------- deterministic parameters ----------------
def sinusoid_table(n_position, d):
    pos = np.arange(n_position)[:, None].astype(np.float64)
    i = np.arange(d)[None, :]
    angle = pos / np.power(10000.0, 2.0 * (i // 2) / d)
    tab = np.zeros((n_position, d), np.float32)
    tab[:, 0::2] = np.sin(angle[:, 0::2])
    tab[:, 1::2] = np.cos(angle[:, 1::2])
    tab[PAD] = 0.0                                   # nn.Embedding padding_idx row == 0
    return jnp.asarray(tab)


def init_params(key):
    def nrm(k, shape):
        return 0.05 * jax.random.normal(k, shape, jnp.float32)

    ks = jax.random.split(key, 4 * N_LAYERS)
    wqkv = jnp.stack([nrm(ks[4 * l + 0], (D, 3 * D)) for l in range(N_LAYERS)])
    wo = jnp.stack([nrm(ks[4 * l + 1], (D, D)) for l in range(N_LAYERS)])
    w1 = jnp.stack([nrm(ks[4 * l + 2], (K1 * D, D_FF)) for l in range(N_LAYERS)])  # tap-major
    w2 = jnp.stack([nrm(ks[4 * l + 3], (D_FF, D)) for l in range(N_LAYERS)])
    zeros = lambda shape: jnp.zeros((N_LAYERS,) + shape, jnp.float32)
    ones = lambda shape: jnp.ones((N_LAYERS,) + shape, jnp.float32)
    return dict(
        wqkv=wqkv, bqkv=zeros((1, 3 * D)),
        wo=wo, bo=zeros((1, D)),
        ln1g=ones((1, D)), ln1b=zeros((1, D)),
        w1=w1, b1=zeros((1, D_FF)),
        w2=w2, b2=zeros((1, D)),
        ln2g=ones((1, D)), ln2b=zeros((1, D)),
    )


def pack_params(params):
    """One-time host-side weight transform: fold the 1/sqrt(d_k) attention scale
    into the Q columns of wqkv, cast matmul weights to bf16 (halves weight DMA),
    and lay out w1 as [N_LAYERS*K1, D, D_FF] for per-tap static indexing.
    Biases and LayerNorm params stay f32."""
    scale = 1.0 / math.sqrt(DK)
    wqkv = params['wqkv'].at[:, :, :D].multiply(scale)
    return dict(
        wqkv=wqkv.astype(_BF16),
        bqkv=params['bqkv'],
        wo=params['wo'].astype(_BF16),
        bo=params['bo'],
        ln1g=params['ln1g'], ln1b=params['ln1b'],
        w1=params['w1'].reshape(N_LAYERS * K1, D, D_FF).astype(_BF16),
        b1=params['b1'],
        w2=params['w2'].astype(_BF16),
        b2=params['b2'],
        ln2g=params['ln2g'], ln2b=params['ln2b'],
    )


if __name__ == "__main__":
    key = jax.random.PRNGKey(0)
    kparam, kdata = jax.random.split(key)
    params = init_params(kparam)
    packed = pack_params(params)          # host-side, one-time
    pos_table = sinusoid_table(MAX_SEQ + 1, D)

    enc_seq = jax.random.normal(kdata, (B, L, D), jnp.float32)
    # positions (1-based), trailing PAD(=0) tokens in the second sequence
    enc_pos = jnp.array([[1, 2, 3, 4, 5, 6, 7, 8],
                         [1, 2, 3, 4, 5, 6, 0, 0]], dtype=jnp.int32)

    out = decoder_forward(enc_seq, enc_pos, pos_table, packed)
    jax.block_until_ready(out)
    assert out.shape == (B, L, D) and out.dtype == jnp.float32
    print("KERNEL_OK")
</pallas_src>

<mosaic_0001>
module attributes {stable_mosaic.version = 11 : i64} {
  func.func @decoder_kernel(%arg0: memref<16x32xf32, #tpu.memory_space<vmem>>, %arg1: memref<16x32xf32, #tpu.memory_space<vmem>>, %arg2: memref<16x1xf32, #tpu.memory_space<vmem>>, %arg3: memref<16x16xf32, #tpu.memory_space<vmem>>, %arg4: memref<2x32x96xbf16, #tpu.memory_space<vmem>>, %arg5: memref<2x1x96xf32, #tpu.memory_space<vmem>>, %arg6: memref<2x32x32xbf16, #tpu.memory_space<vmem>>, %arg7: memref<2x1x32xf32, #tpu.memory_space<vmem>>, %arg8: memref<2x1x32xf32, #tpu.memory_space<vmem>>, %arg9: memref<2x1x32xf32, #tpu.memory_space<vmem>>, %arg10: memref<18x32x64xbf16, #tpu.memory_space<vmem>>, %arg11: memref<2x1x64xf32, #tpu.memory_space<vmem>>, %arg12: memref<2x64x32xbf16, #tpu.memory_space<vmem>>, %arg13: memref<2x1x32xf32, #tpu.memory_space<vmem>>, %arg14: memref<2x1x32xf32, #tpu.memory_space<vmem>>, %arg15: memref<2x1x32xf32, #tpu.memory_space<vmem>>, %arg16: memref<16x32xf32, #tpu.memory_space<vmem>>) attributes {dimension_semantics = [], scalar_prefetch = 0 : i64, scratch_operands = 0 : i64, tpu.core_type = #tpu.core_type<tc>} {
    %c0 = arith.constant 0 : index
    %c0_0 = arith.constant 0 : index
    %0 = vector.load %arg0[%c0, %c0_0] : memref<16x32xf32, #tpu.memory_space<vmem>>, vector<16x32xf32>
    %c0_1 = arith.constant 0 : index
    %c0_2 = arith.constant 0 : index
    %1 = vector.load %arg1[%c0_1, %c0_2] : memref<16x32xf32, #tpu.memory_space<vmem>>, vector<16x32xf32>
    %2 = arith.addf %0, %1 : vector<16x32xf32>
    %c0_3 = arith.constant 0 : index
    %c0_4 = arith.constant 0 : index
    %3 = vector.load %arg2[%c0_3, %c0_4] : memref<16x1xf32, #tpu.memory_space<vmem>>, vector<16x1xf32>
    %c0_5 = arith.constant 0 : index
    %c0_6 = arith.constant 0 : index
    %4 = vector.load %arg3[%c0_5, %c0_6] : memref<16x16xf32, #tpu.memory_space<vmem>>, vector<16x16xf32>
    %5 = tpu.iota {dimensions = array<i32: 0>} : vector<16x1xi32>
    %c7_i32 = arith.constant 7 : i32
    %6 = vector.broadcast %c7_i32 : i32 to vector<16x1xi32>
    %7 = arith.andi %5, %6 : vector<16x1xi32>
    %c-4_i32 = arith.constant -4 : i32
    %8 = vector.broadcast %c-4_i32 : i32 to vector<16x1xi32>
    %9 = arith.addi %7, %8 : vector<16x1xi32>
    %c0_i32 = arith.constant 0 : i32
    %10 = vector.broadcast %c0_i32 : i32 to vector<16x1xi32>
    %11 = arith.cmpi sge, %9, %10 : vector<16x1xi32>
    %c-4_i32_7 = arith.constant -4 : i32
    %12 = vector.broadcast %c-4_i32_7 : i32 to vector<16x1xi32>
    %13 = arith.addi %7, %12 : vector<16x1xi32>
    %c8_i32 = arith.constant 8 : i32
    %14 = vector.broadcast %c8_i32 : i32 to vector<16x1xi32>
    %15 = arith.cmpi slt, %13, %14 : vector<16x1xi32>
    %16 = arith.andi %11, %15 : vector<16x1xi1>
    %17 = arith.extui %16 : vector<16x1xi1> to vector<16x1xi32>
    %18 = arith.sitofp %17 : vector<16x1xi32> to vector<16x1xf32>
    %c-3_i32 = arith.constant -3 : i32
    %19 = vector.broadcast %c-3_i32 : i32 to vector<16x1xi32>
    %20 = arith.addi %7, %19 : vector<16x1xi32>
    %c0_i32_8 = arith.constant 0 : i32
    %21 = vector.broadcast %c0_i32_8 : i32 to vector<16x1xi32>
    %22 = arith.cmpi sge, %20, %21 : vector<16x1xi32>
    %c-3_i32_9 = arith.constant -3 : i32
    %23 = vector.broadcast %c-3_i32_9 : i32 to vector<16x1xi32>
    %24 = arith.addi %7, %23 : vector<16x1xi32>
    %c8_i32_10 = arith.constant 8 : i32
    %25 = vector.broadcast %c8_i32_10 : i32 to vector<16x1xi32>
    %26 = arith.cmpi slt, %24, %25 : vector<16x1xi32>
    %27 = arith.andi %22, %26 : vector<16x1xi1>
    %28 = arith.extui %27 : vector<16x1xi1> to vector<16x1xi32>
    %29 = arith.sitofp %28 : vector<16x1xi32> to vector<16x1xf32>
    %c-2_i32 = arith.constant -2 : i32
    %30 = vector.broadcast %c-2_i32 : i32 to vector<16x1xi32>
    %31 = arith.addi %7, %30 : vector<16x1xi32>
    %c0_i32_11 = arith.constant 0 : i32
    %32 = vector.broadcast %c0_i32_11 : i32 to vector<16x1xi32>
    %33 = arith.cmpi sge, %31, %32 : vector<16x1xi32>
    %c-2_i32_12 = arith.constant -2 : i32
    %34 = vector.broadcast %c-2_i32_12 : i32 to vector<16x1xi32>
    %35 = arith.addi %7, %34 : vector<16x1xi32>
    %c8_i32_13 = arith.constant 8 : i32
    %36 = vector.broadcast %c8_i32_13 : i32 to vector<16x1xi32>
    %37 = arith.cmpi slt, %35, %36 : vector<16x1xi32>
    %38 = arith.andi %33, %37 : vector<16x1xi1>
    %39 = arith.extui %38 : vector<16x1xi1> to vector<16x1xi32>
    %40 = arith.sitofp %39 : vector<16x1xi32> to vector<16x1xf32>
    %c-1_i32 = arith.constant -1 : i32
    %41 = vector.broadcast %c-1_i32 : i32 to vector<16x1xi32>
    %42 = arith.addi %7, %41 : vector<16x1xi32>
    %c0_i32_14 = arith.constant 0 : i32
    %43 = vector.broadcast %c0_i32_14 : i32 to vector<16x1xi32>
    %44 = arith.cmpi sge, %42, %43 : vector<16x1xi32>
    %c-1_i32_15 = arith.constant -1 : i32
    %45 = vector.broadcast %c-1_i32_15 : i32 to vector<16x1xi32>
    %46 = arith.addi %7, %45 : vector<16x1xi32>
    %c8_i32_16 = arith.constant 8 : i32
    %47 = vector.broadcast %c8_i32_16 : i32 to vector<16x1xi32>
    %48 = arith.cmpi slt, %46, %47 : vector<16x1xi32>
    %49 = arith.andi %44, %48 : vector<16x1xi1>
    %50 = arith.extui %49 : vector<16x1xi1> to vector<16x1xi32>
    %51 = arith.sitofp %50 : vector<16x1xi32> to vector<16x1xf32>
    %c1_i32 = arith.constant 1 : i32
    %52 = vector.broadcast %c1_i32 : i32 to vector<16x1xi32>
    %53 = arith.addi %7, %52 : vector<16x1xi32>
    %c0_i32_17 = arith.constant 0 : i32
    %54 = vector.broadcast %c0_i32_17 : i32 to vector<16x1xi32>
    %55 = arith.cmpi sge, %53, %54 : vector<16x1xi32>
    %c1_i32_18 = arith.constant 1 : i32
    %56 = vector.broadcast %c1_i32_18 : i32 to vector<16x1xi32>
    %57 = arith.addi %7, %56 : vector<16x1xi32>
    %c8_i32_19 = arith.constant 8 : i32
    %58 = vector.broadcast %c8_i32_19 : i32 to vector<16x1xi32>
    %59 = arith.cmpi slt, %57, %58 : vector<16x1xi32>
    %60 = arith.andi %55, %59 : vector<16x1xi1>
    %61 = arith.extui %60 : vector<16x1xi1> to vector<16x1xi32>
    %62 = arith.sitofp %61 : vector<16x1xi32> to vector<16x1xf32>
    %c2_i32 = arith.constant 2 : i32
    %63 = vector.broadcast %c2_i32 : i32 to vector<16x1xi32>
    %64 = arith.addi %7, %63 : vector<16x1xi32>
    %c0_i32_20 = arith.constant 0 : i32
    %65 = vector.broadcast %c0_i32_20 : i32 to vector<16x1xi32>
    %66 = arith.cmpi sge, %64, %65 : vector<16x1xi32>
    %c2_i32_21 = arith.constant 2 : i32
    %67 = vector.broadcast %c2_i32_21 : i32 to vector<16x1xi32>
    %68 = arith.addi %7, %67 : vector<16x1xi32>
    %c8_i32_22 = arith.constant 8 : i32
    %69 = vector.broadcast %c8_i32_22 : i32 to vector<16x1xi32>
    %70 = arith.cmpi slt, %68, %69 : vector<16x1xi32>
    %71 = arith.andi %66, %70 : vector<16x1xi1>
    %72 = arith.extui %71 : vector<16x1xi1> to vector<16x1xi32>
    %73 = arith.sitofp %72 : vector<16x1xi32> to vector<16x1xf32>
    %c3_i32 = arith.constant 3 : i32
    %74 = vector.broadcast %c3_i32 : i32 to vector<16x1xi32>
    %75 = arith.addi %7, %74 : vector<16x1xi32>
    %c0_i32_23 = arith.constant 0 : i32
    %76 = vector.broadcast %c0_i32_23 : i32 to vector<16x1xi32>
    %77 = arith.cmpi sge, %75, %76 : vector<16x1xi32>
    %c3_i32_24 = arith.constant 3 : i32
    %78 = vector.broadcast %c3_i32_24 : i32 to vector<16x1xi32>
    %79 = arith.addi %7, %78 : vector<16x1xi32>
    %c8_i32_25 = arith.constant 8 : i32
    %80 = vector.broadcast %c8_i32_25 : i32 to vector<16x1xi32>
    %81 = arith.cmpi slt, %79, %80 : vector<16x1xi32>
    %82 = arith.andi %77, %81 : vector<16x1xi1>
    %83 = arith.extui %82 : vector<16x1xi1> to vector<16x1xi32>
    %84 = arith.sitofp %83 : vector<16x1xi32> to vector<16x1xf32>
    %c4_i32 = arith.constant 4 : i32
    %85 = vector.broadcast %c4_i32 : i32 to vector<16x1xi32>
    %86 = arith.addi %7, %85 : vector<16x1xi32>
    %c0_i32_26 = arith.constant 0 : i32
    %87 = vector.broadcast %c0_i32_26 : i32 to vector<16x1xi32>
    %88 = arith.cmpi sge, %86, %87 : vector<16x1xi32>
    %c4_i32_27 = arith.constant 4 : i32
    %89 = vector.broadcast %c4_i32_27 : i32 to vector<16x1xi32>
    %90 = arith.addi %7, %89 : vector<16x1xi32>
    %c8_i32_28 = arith.constant 8 : i32
    %91 = vector.broadcast %c8_i32_28 : i32 to vector<16x1xi32>
    %92 = arith.cmpi slt, %90, %91 : vector<16x1xi32>
    %93 = arith.andi %88, %92 : vector<16x1xi1>
    %94 = arith.extui %93 : vector<16x1xi1> to vector<16x1xi32>
    %95 = arith.sitofp %94 : vector<16x1xi32> to vector<16x1xf32>
    %96 = arith.truncf %2 : vector<16x32xf32> to vector<16x32xbf16>
    %c0_29 = arith.constant 0 : index
    %c0_30 = arith.constant 0 : index
    %c0_31 = arith.constant 0 : index
    %97 = vector.load %arg4[%c0_29, %c0_30, %c0_31] : memref<2x32x96xbf16, #tpu.memory_space<vmem>>, vector<1x32x96xbf16>
    %98 = vector.shape_cast %97 : vector<1x32x96xbf16> to vector<32x96xbf16>
    %cst = arith.constant dense<0.000000e+00> : vector<16x96xf32>
    %99 = tpu.matmul %96, %98, %cst {dimension_numbers = #tpu.dot_dimension_numbers<[1], [0], [0], [1], [0, 0, 1, 1], [], []>} : vector<16x32xbf16>, vector<32x96xbf16>, vector<16x96xf32> -> vector<16x96xf32>
    %c0_32 = arith.constant 0 : index
    %c0_33 = arith.constant 0 : index
    %c0_34 = arith.constant 0 : index
    %100 = vector.load %arg5[%c0_32, %c0_33, %c0_34] : memref<2x1x96xf32, #tpu.memory_space<vmem>>, vector<1x1x96xf32>
    %101 = vector.shape_cast %100 : vector<1x1x96xf32> to vector<1x96xf32>
    %102 = vector.broadcast %101 : vector<1x96xf32> to vector<16x96xf32>
    %103 = arith.addf %99, %102 : vector<16x96xf32>
    %104 = vector.extract_strided_slice %103 {offsets = [0, 0], sizes = [16, 16], strides = [1, 1]} : vector<16x96xf32> to vector<16x16xf32>
    %105 = arith.truncf %104 : vector<16x16xf32> to vector<16x16xbf16>
    %106 = vector.extract_strided_slice %103 {offsets = [0, 32], sizes = [16, 16], strides = [1, 1]} : vector<16x96xf32> to vector<16x16xf32>
    %107 = arith.truncf %106 : vector<16x16xf32> to vector<16x16xbf16>
    %108 = vector.extract_strided_slice %103 {offsets = [0, 64], sizes = [16, 16], strides = [1, 1]} : vector<16x96xf32> to vector<16x16xf32>
    %109 = arith.truncf %108 : vector<16x16xf32> to vector<16x16xbf16>
    "tpu.trace_start"() <{level = 10 : i32, message = "td,sd->ts"}> : () -> ()
    %cst_35 = arith.constant dense<0.000000e+00> : vector<16x16xf32>
    %110 = tpu.matmul %105, %107, %cst_35 {dimension_numbers = #tpu.dot_dimension_numbers<[1], [1], [0], [0], [0, 0, 1, 0], [], []>} : vector<16x16xbf16>, vector<16x16xbf16>, vector<16x16xf32> -> vector<16x16xf32>
    "tpu.trace_stop"() : () -> ()
    %111 = arith.addf %110, %4 : vector<16x16xf32>
    %cst_36 = arith.constant dense<0xFF800000> : vector<16xf32>
    %112 = vector.multi_reduction <maximumf>, %111, %cst_36 [1] : vector<16x16xf32> to vector<16xf32>
    %113 = vector.shape_cast %112 : vector<16xf32> to vector<16x1xf32>
    %114 = vector.broadcast %113 : vector<16x1xf32> to vector<16x16xf32>
    %115 = arith.subf %111, %114 : vector<16x16xf32>
    %116 = math.exp %115 : vector<16x16xf32>
    %cst_37 = arith.constant dense<0.000000e+00> : vector<16xf32>
    %117 = vector.multi_reduction <add>, %116, %cst_37 [1] : vector<16x16xf32> to vector<16xf32>
    %118 = vector.shape_cast %117 : vector<16xf32> to vector<16x1xf32>
    %119 = tpu.reciprocal %118 {approx = true} : vector<16x1xf32> -> vector<16x1xf32>
    %120 = vector.broadcast %119 : vector<16x1xf32> to vector<16x16xf32>
    %121 = arith.mulf %116, %120 : vector<16x16xf32>
    %122 = arith.truncf %121 : vector<16x16xf32> to vector<16x16xbf16>
    %cst_38 = arith.constant dense<0.000000e+00> : vector<16x16xf32>
    %123 = tpu.matmul %122, %109, %cst_38 {dimension_numbers = #tpu.dot_dimension_numbers<[1], [0], [0], [1], [0, 0, 1, 1], [], []>} : vector<16x16xbf16>, vector<16x16xbf16>, vector<16x16xf32> -> vector<16x16xf32>
    %124 = vector.extract_strided_slice %103 {offsets = [0, 16], sizes = [16, 16], strides = [1, 1]} : vector<16x96xf32> to vector<16x16xf32>
    %125 = arith.truncf %124 : vector<16x16xf32> to vector<16x16xbf16>
    %126 = vector.extract_strided_slice %103 {offsets = [0, 48], sizes = [16, 16], strides = [1, 1]} : vector<16x96xf32> to vector<16x16xf32>
    %127 = arith.truncf %126 : vector<16x16xf32> to vector<16x16xbf16>
    %128 = vector.extract_strided_slice %103 {offsets = [0, 80], sizes = [16, 16], strides = [1, 1]} : vector<16x96xf32> to vector<16x16xf32>
    %129 = arith.truncf %128 : vector<16x16xf32> to vector<16x16xbf16>
    "tpu.trace_start"() <{level = 10 : i32, message = "td,sd->ts"}> : () -> ()
    %cst_39 = arith.constant dense<0.000000e+00> : vector<16x16xf32>
    %130 = tpu.matmul %125, %127, %cst_39 {dimension_numbers = #tpu.dot_dimension_numbers<[1], [1], [0], [0], [0, 0, 1, 0], [], []>} : vector<16x16xbf16>, vector<16x16xbf16>, vector<16x16xf32> -> vector<16x16xf32>
    "tpu.trace_stop"() : () -> ()
    %131 = arith.addf %130, %4 : vector<16x16xf32>
    %cst_40 = arith.constant dense<0xFF800000> : vector<16xf32>
    %132 = vector.multi_reduction <maximumf>, %131, %cst_40 [1] : vector<16x16xf32> to vector<16xf32>
    %133 = vector.shape_cast %132 : vector<16xf32> to vector<16x1xf32>
    %134 = vector.broadcast %133 : vector<16x1xf32> to vector<16x16xf32>
    %135 = arith.subf %131, %134 : vector<16x16xf32>
    %136 = math.exp %135 : vector<16x16xf32>
    %cst_41 = arith.constant dense<0.000000e+00> : vector<16xf32>
    %137 = vector.multi_reduction <add>, %136, %cst_41 [1] : vector<16x16xf32> to vector<16xf32>
    %138 = vector.shape_cast %137 : vector<16xf32> to vector<16x1xf32>
    %139 = tpu.reciprocal %138 {approx = true} : vector<16x1xf32> -> vector<16x1xf32>
    %140 = vector.broadcast %139 : vector<16x1xf32> to vector<16x16xf32>
    %141 = arith.mulf %136, %140 : vector<16x16xf32>
    %142 = arith.truncf %141 : vector<16x16xf32> to vector<16x16xbf16>
    %cst_42 = arith.constant dense<0.000000e+00> : vector<16x16xf32>
    %143 = tpu.matmul %142, %129, %cst_42 {dimension_numbers = #tpu.dot_dimension_numbers<[1], [0], [0], [1], [0, 0, 1, 1], [], []>} : vector<16x16xbf16>, vector<16x16xbf16>, vector<16x16xf32> -> vector<16x16xf32>
    %144 = tpu.concatenate %123, %143 in 1 : vector<16x16xf32>, vector<16x16xf32> -> vector<16x32xf32>
    %145 = arith.truncf %144 : vector<16x32xf32> to vector<16x32xbf16>
    %c0_43 = arith.constant 0 : index
    %c0_44 = arith.constant 0 : index
    %c0_45 = arith.constant 0 : index
    %146 = vector.load %arg6[%c0_43, %c0_44, %c0_45] : memref<2x32x32xbf16, #tpu.memory_space<vmem>>, vector<1x32x32xbf16>
    %147 = vector.shape_cast %146 : vector<1x32x32xbf16> to vector<32x32xbf16>
    %cst_46 = arith.constant dense<0.000000e+00> : vector<16x32xf32>
    %148 = tpu.matmul %145, %147, %cst_46 {dimension_numbers = #tpu.dot_dimension_numbers<[1], [0], [0], [1], [0, 0, 1, 1], [], []>} : vector<16x32xbf16>, vector<32x32xbf16>, vector<16x32xf32> -> vector<16x32xf32>
    %c0_47 = arith.constant 0 : index
    %c0_48 = arith.constant 0 : index
    %c0_49 = arith.constant 0 : index
    %149 = vector.load %arg7[%c0_47, %c0_48, %c0_49] : memref<2x1x32xf32, #tpu.memory_space<vmem>>, vector<1x1x32xf32>
    %150 = vector.shape_cast %149 : vector<1x1x32xf32> to vector<1x32xf32>
    %151 = vector.broadcast %150 : vector<1x32xf32> to vector<16x32xf32>
    %152 = arith.addf %148, %151 : vector<16x32xf32>
    %153 = arith.addf %152, %2 : vector<16x32xf32>
    %cst_50 = arith.constant dense<0.000000e+00> : vector<16xf32>
    %154 = vector.multi_reduction <add>, %153, %cst_50 [1] : vector<16x32xf32> to vector<16xf32>
    %155 = vector.shape_cast %154 : vector<16xf32> to vector<16x1xf32>
    %cst_51 = arith.constant 3.200000e+01 : f32
    %156 = vector.broadcast %cst_51 : f32 to vector<16x1xf32>
    %157 = arith.divf %155, %156 : vector<16x1xf32>
    %158 = vector.broadcast %157 : vector<16x1xf32> to vector<16x32xf32>
    %159 = arith.subf %153, %158 : vector<16x32xf32>
    %160 = arith.mulf %159, %159 : vector<16x32xf32>
    %cst_52 = arith.constant dense<0.000000e+00> : vector<16xf32>
    %161 = vector.multi_reduction <add>, %160, %cst_52 [1] : vector<16x32xf32> to vector<16xf32>
    %162 = vector.shape_cast %161 : vector<16xf32> to vector<16x1xf32>
    %cst_53 = arith.constant 3.200000e+01 : f32
    %163 = vector.broadcast %cst_53 : f32 to vector<16x1xf32>
    %164 = arith.divf %162, %163 : vector<16x1xf32>
    %165 = vector.broadcast %157 : vector<16x1xf32> to vector<16x32xf32>
    %166 = arith.subf %153, %165 : vector<16x32xf32>
    %cst_54 = arith.constant 9.99999974E-6 : f32
    %167 = vector.broadcast %cst_54 : f32 to vector<16x1xf32>
    %168 = arith.addf %164, %167 : vector<16x1xf32>
    %169 = math.rsqrt %168 : vector<16x1xf32>
    %170 = vector.broadcast %169 : vector<16x1xf32> to vector<16x32xf32>
    %171 = arith.mulf %166, %170 : vector<16x32xf32>
    %c0_55 = arith.constant 0 : index
    %c0_56 = arith.constant 0 : index
    %c0_57 = arith.constant 0 : index
    %172 = vector.load %arg8[%c0_55, %c0_56, %c0_57] : memref<2x1x32xf32, #tpu.memory_space<vmem>>, vector<1x1x32xf32>
    %173 = vector.shape_cast %172 : vector<1x1x32xf32> to vector<1x32xf32>
    %174 = vector.broadcast %173 : vector<1x32xf32> to vector<16x32xf32>
    %175 = arith.mulf %171, %174 : vector<16x32xf32>
    %c0_58 = arith.constant 0 : index
    %c0_59 = arith.constant 0 : index
    %c0_60 = arith.constant 0 : index
    %176 = vector.load %arg9[%c0_58, %c0_59, %c0_60] : memref<2x1x32xf32, #tpu.memory_space<vmem>>, vector<1x1x32xf32>
    %177 = vector.shape_cast %176 : vector<1x1x32xf32> to vector<1x32xf32>
    %178 = vector.broadcast %177 : vector<1x32xf32> to vector<16x32xf32>
    %179 = arith.addf %175, %178 : vector<16x32xf32>
    %180 = vector.broadcast %3 : vector<16x1xf32> to vector<16x32xf32>
    %181 = arith.mulf %179, %180 : vector<16x32xf32>
    %cst_61 = arith.constant 0.000000e+00 : f32
    %182 = vector.broadcast %cst_61 : f32 to vector<16x64xf32>
    %c4_i32_62 = arith.constant 4 : i32
    %183 = tpu.dynamic_rotate %181 by %c4_i32_62 dim 0 : vector<16x32xf32>, i32 -> vector<16x32xf32>
    %184 = vector.broadcast %18 : vector<16x1xf32> to vector<16x32xf32>
    %185 = arith.mulf %183, %184 : vector<16x32xf32>
    %186 = arith.truncf %185 : vector<16x32xf32> to vector<16x32xbf16>
    %c0_63 = arith.constant 0 : index
    %c0_64 = arith.constant 0 : index
    %c0_65 = arith.constant 0 : index
    %187 = vector.load %arg10[%c0_63, %c0_64, %c0_65] : memref<18x32x64xbf16, #tpu.memory_space<vmem>>, vector<1x32x64xbf16>
    %188 = vector.shape_cast %187 : vector<1x32x64xbf16> to vector<32x64xbf16>
    %cst_66 = arith.constant dense<0.000000e+00> : vector<16x64xf32>
    %189 = tpu.matmul %186, %188, %cst_66 {dimension_numbers = #tpu.dot_dimension_numbers<[1], [0], [0], [1], [0, 0, 1, 1], [], []>} : vector<16x32xbf16>, vector<32x64xbf16>, vector<16x64xf32> -> vector<16x64xf32>
    %190 = arith.addf %182, %189 : vector<16x64xf32>
    %c3_i32_67 = arith.constant 3 : i32
    %191 = tpu.dynamic_rotate %181 by %c3_i32_67 dim 0 : vector<16x32xf32>, i32 -> vector<16x32xf32>
    %192 = vector.broadcast %29 : vector<16x1xf32> to vector<16x32xf32>
    %193 = arith.mulf %191, %192 : vector<16x32xf32>
    %194 = arith.truncf %193 : vector<16x32xf32> to vector<16x32xbf16>
    %c1 = arith.constant 1 : index
    %c0_68 = arith.constant 0 : index
    %c0_69 = arith.constant 0 : index
    %195 = vector.load %arg10[%c1, %c0_68, %c0_69] : memref<18x32x64xbf16, #tpu.memory_space<vmem>>, vector<1x32x64xbf16>
    %196 = vector.shape_cast %195 : vector<1x32x64xbf16> to vector<32x64xbf16>
    %cst_70 = arith.constant dense<0.000000e+00> : vector<16x64xf32>
    %197 = tpu.matmul %194, %196, %cst_70 {dimension_numbers = #tpu.dot_dimension_numbers<[1], [0], [0], [1], [0, 0, 1, 1], [], []>} : vector<16x32xbf16>, vector<32x64xbf16>, vector<16x64xf32> -> vector<16x64xf32>
    %198 = arith.addf %190, %197 : vector<16x64xf32>
    %c2_i32_71 = arith.constant 2 : i32
    %199 = tpu.dynamic_rotate %181 by %c2_i32_71 dim 0 : vector<16x32xf32>, i32 -> vector<16x32xf32>
    %200 = vector.broadcast %40 : vector<16x1xf32> to vector<16x32xf32>
    %201 = arith.mulf %199, %200 : vector<16x32xf32>
    %202 = arith.truncf %201 : vector<16x32xf32> to vector<16x32xbf16>
    %c2 = arith.constant 2 : index
    %c0_72 = arith.constant 0 : index
    %c0_73 = arith.constant 0 : index
    %203 = vector.load %arg10[%c2, %c0_72, %c0_73] : memref<18x32x64xbf16, #tpu.memory_space<vmem>>, vector<1x32x64xbf16>
    %204 = vector.shape_cast %203 : vector<1x32x64xbf16> to vector<32x64xbf16>
    %cst_74 = arith.constant dense<0.000000e+00> : vector<16x64xf32>
    %205 = tpu.matmul %202, %204, %cst_74 {dimension_numbers = #tpu.dot_dimension_numbers<[1], [0], [0], [1], [0, 0, 1, 1], [], []>} : vector<16x32xbf16>, vector<32x64xbf16>, vector<16x64xf32> -> vector<16x64xf32>
    %206 = arith.addf %198, %205 : vector<16x64xf32>
    %c1_i32_75 = arith.constant 1 : i32
    %207 = tpu.dynamic_rotate %181 by %c1_i32_75 dim 0 : vector<16x32xf32>, i32 -> vector<16x32xf32>
    %208 = vector.broadcast %51 : vector<16x1xf32> to vector<16x32xf32>
    %209 = arith.mulf %207, %208 : vector<16x32xf32>
    %210 = arith.truncf %209 : vector<16x32xf32> to vector<16x32xbf16>
    %c3 = arith.constant 3 : index
    %c0_76 = arith.constant 0 : index
    %c0_77 = arith.constant 0 : index
    %211 = vector.load %arg10[%c3, %c0_76, %c0_77] : memref<18x32x64xbf16, #tpu.memory_space<vmem>>, vector<1x32x64xbf16>
    %212 = vector.shape_cast %211 : vector<1x32x64xbf16> to vector<32x64xbf16>
    %cst_78 = arith.constant dense<0.000000e+00> : vector<16x64xf32>
    %213 = tpu.matmul %210, %212, %cst_78 {dimension_numbers = #tpu.dot_dimension_numbers<[1], [0], [0], [1], [0, 0, 1, 1], [], []>} : vector<16x32xbf16>, vector<32x64xbf16>, vector<16x64xf32> -> vector<16x64xf32>
    %214 = arith.addf %206, %213 : vector<16x64xf32>
    %215 = arith.truncf %181 : vector<16x32xf32> to vector<16x32xbf16>
    %c4 = arith.constant 4 : index
    %c0_79 = arith.constant 0 : index
    %c0_80 = arith.constant 0 : index
    %216 = vector.load %arg10[%c4, %c0_79, %c0_80] : memref<18x32x64xbf16, #tpu.memory_space<vmem>>, vector<1x32x64xbf16>
    %217 = vector.shape_cast %216 : vector<1x32x64xbf16> to vector<32x64xbf16>
    %cst_81 = arith.constant dense<0.000000e+00> : vector<16x64xf32>
    %218 = tpu.matmul %215, %217, %cst_81 {dimension_numbers = #tpu.dot_dimension_numbers<[1], [0], [0], [1], [0, 0, 1, 1], [], []>} : vector<16x32xbf16>, vector<32x64xbf16>, vector<16x64xf32> -> vector<16x64xf32>
    %219 = arith.addf %214, %218 : vector<16x64xf32>
    %c15_i32 = arith.constant 15 : i32
    %220 = tpu.dynamic_rotate %181 by %c15_i32 dim 0 : vector<16x32xf32>, i32 -> vector<16x32xf32>
    %221 = vector.broadcast %62 : vector<16x1xf32> to vector<16x32xf32>
    %222 = arith.mulf %220, %221 : vector<16x32xf32>
    %223 = arith.truncf %222 : vector<16x32xf32> to vector<16x32xbf16>
    %c5 = arith.constant 5 : index
    %c0_82 = arith.constant 0 : index
    %c0_83 = arith.constant 0 : index
    %224 = vector.load %arg10[%c5, %c0_82, %c0_83] : memref<18x32x64xbf16, #tpu.memory_space<vmem>>, vector<1x32x64xbf16>
    %225 = vector.shape_cast %224 : vector<1x32x64xbf16> to vector<32x64xbf16>
    %cst_84 = arith.constant dense<0.000000e+00> : vector<16x64xf32>
    %226 = tpu.matmul %223, %225, %cst_84 {dimension_numbers = #tpu.dot_dimension_numbers<[1], [0], [0], [1], [0, 0, 1, 1], [], []>} : vector<16x32xbf16>, vector<32x64xbf16>, vector<16x64xf32> -> vector<16x64xf32>
    %227 = arith.addf %219, %226 : vector<16x64xf32>
    %c14_i32 = arith.constant 14 : i32
    %228 = tpu.dynamic_rotate %181 by %c14_i32 dim 0 : vector<16x32xf32>, i32 -> vector<16x32xf32>
    %229 = vector.broadcast %73 : vector<16x1xf32> to vector<16x32xf32>
    %230 = arith.mulf %228, %229 : vector<16x32xf32>
    %231 = arith.truncf %230 : vector<16x32xf32> to vector<16x32xbf16>
    %c6 = arith.constant 6 : index
    %c0_85 = arith.constant 0 : index
    %c0_86 = arith.constant 0 : index
    %232 = vector.load %arg10[%c6, %c0_85, %c0_86] : memref<18x32x64xbf16, #tpu.memory_space<vmem>>, vector<1x32x64xbf16>
    %233 = vector.shape_cast %232 : vector<1x32x64xbf16> to vector<32x64xbf16>
    %cst_87 = arith.constant dense<0.000000e+00> : vector<16x64xf32>
    %234 = tpu.matmul %231, %233, %cst_87 {dimension_numbers = #tpu.dot_dimension_numbers<[1], [0], [0], [1], [0, 0, 1, 1], [], []>} : vector<16x32xbf16>, vector<32x64xbf16>, vector<16x64xf32> -> vector<16x64xf32>
    %235 = arith.addf %227, %234 : vector<16x64xf32>
    %c13_i32 = arith.constant 13 : i32
    %236 = tpu.dynamic_rotate %181 by %c13_i32 dim 0 : vector<16x32xf32>, i32 -> vector<16x32xf32>
    %237 = vector.broadcast %84 : vector<16x1xf32> to vector<16x32xf32>
    %238 = arith.mulf %236, %237 : vector<16x32xf32>
    %239 = arith.truncf %238 : vector<16x32xf32> to vector<16x32xbf16>
    %c7 = arith.constant 7 : index
    %c0_88 = arith.constant 0 : index
    %c0_89 = arith.constant 0 : index
    %240 = vector.load %arg10[%c7, %c0_88, %c0_89] : memref<18x32x64xbf16, #tpu.memory_space<vmem>>, vector<1x32x64xbf16>
    %241 = vector.shape_cast %240 : vector<1x32x64xbf16> to vector<32x64xbf16>
    %cst_90 = arith.constant dense<0.000000e+00> : vector<16x64xf32>
    %242 = tpu.matmul %239, %241, %cst_90 {dimension_numbers = #tpu.dot_dimension_numbers<[1], [0], [0], [1], [0, 0, 1, 1], [], []>} : vector<16x32xbf16>, vector<32x64xbf16>, vector<16x64xf32> -> vector<16x64xf32>
    %243 = arith.addf %235, %242 : vector<16x64xf32>
    %c12_i32 = arith.constant 12 : i32
    %244 = tpu.dynamic_rotate %181 by %c12_i32 dim 0 : vector<16x32xf32>, i32 -> vector<16x32xf32>
    %245 = vector.broadcast %95 : vector<16x1xf32> to vector<16x32xf32>
    %246 = arith.mulf %244, %245 : vector<16x32xf32>
    %247 = arith.truncf %246 : vector<16x32xf32> to vector<16x32xbf16>
    %c8 = arith.constant 8 : index
    %c0_91 = arith.constant 0 : index
    %c0_92 = arith.constant 0 : index
    %248 = vector.load %arg10[%c8, %c0_91, %c0_92] : memref<18x32x64xbf16, #tpu.memory_space<vmem>>, vector<1x32x64xbf16>
    %249 = vector.shape_cast %248 : vector<1x32x64xbf16> to vector<32x64xbf16>
    %cst_93 = arith.constant dense<0.000000e+00> : vector<16x64xf32>
    %250 = tpu.matmul %247, %249, %cst_93 {dimension_numbers = #tpu.dot_dimension_numbers<[1], [0], [0], [1], [0, 0, 1, 1], [], []>} : vector<16x32xbf16>, vector<32x64xbf16>, vector<16x64xf32> -> vector<16x64xf32>
    %251 = arith.addf %243, %250 : vector<16x64xf32>
    %c0_94 = arith.constant 0 : index
    %c0_95 = arith.constant 0 : index
    %c0_96 = arith.constant 0 : index
    %252 = vector.load %arg11[%c0_94, %c0_95, %c0_96] : memref<2x1x64xf32, #tpu.memory_space<vmem>>, vector<1x1x64xf32>
    %253 = vector.shape_cast %252 : vector<1x1x64xf32> to vector<1x64xf32>
    %254 = vector.broadcast %253 : vector<1x64xf32> to vector<16x64xf32>
    %255 = arith.addf %251, %254 : vector<16x64xf32>
    %cst_97 = arith.constant 0.000000e+00 : f32
    %256 = vector.broadcast %cst_97 : f32 to vector<16x64xf32>
    %257 = arith.maximumf %255, %256 : vector<16x64xf32>
    %258 = arith.truncf %257 : vector<16x64xf32> to vector<16x64xbf16>
    %c0_98 = arith.constant 0 : index
    %c0_99 = arith.constant 0 : index
    %c0_100 = arith.constant 0 : index
    %259 = vector.load %arg12[%c0_98, %c0_99, %c0_100] : memref<2x64x32xbf16, #tpu.memory_space<vmem>>, vector<1x64x32xbf16>
    %260 = vector.shape_cast %259 : vector<1x64x32xbf16> to vector<64x32xbf16>
    %cst_101 = arith.constant dense<0.000000e+00> : vector<16x32xf32>
    %261 = tpu.matmul %258, %260, %cst_101 {dimension_numbers = #tpu.dot_dimension_numbers<[1], [0], [0], [1], [0, 0, 1, 1], [], []>} : vector<16x64xbf16>, vector<64x32xbf16>, vector<16x32xf32> -> vector<16x32xf32>
    %c0_102 = arith.constant 0 : index
    %c0_103 = arith.constant 0 : index
    %c0_104 = arith.constant 0 : index
    %262 = vector.load %arg13[%c0_102, %c0_103, %c0_104] : memref<2x1x32xf32, #tpu.memory_space<vmem>>, vector<1x1x32xf32>
    %263 = vector.shape_cast %262 : vector<1x1x32xf32> to vector<1x32xf32>
    %264 = vector.broadcast %263 : vector<1x32xf32> to vector<16x32xf32>
    %265 = arith.addf %261, %264 : vector<16x32xf32>
    %266 = arith.addf %265, %181 : vector<16x32xf32>
    %cst_105 = arith.constant dense<0.000000e+00> : vector<16xf32>
    %267 = vector.multi_reduction <add>, %266, %cst_105 [1] : vector<16x32xf32> to vector<16xf32>
    %268 = vector.shape_cast %267 : vector<16xf32> to vector<16x1xf32>
    %cst_106 = arith.constant 3.200000e+01 : f32
    %269 = vector.broadcast %cst_106 : f32 to vector<16x1xf32>
    %270 = arith.divf %268, %269 : vector<16x1xf32>
    %271 = vector.broadcast %270 : vector<16x1xf32> to vector<16x32xf32>
    %272 = arith.subf %266, %271 : vector<16x32xf32>
    %273 = arith.mulf %272, %272 : vector<16x32xf32>
    %cst_107 = arith.constant dense<0.000000e+00> : vector<16xf32>
    %274 = vector.multi_reduction <add>, %273, %cst_107 [1] : vector<16x32xf32> to vector<16xf32>
    %275 = vector.shape_cast %274 : vector<16xf32> to vector<16x1xf32>
    %cst_108 = arith.constant 3.200000e+01 : f32
    %276 = vector.broadcast %cst_108 : f32 to vector<16x1xf32>
    %277 = arith.divf %275, %276 : vector<16x1xf32>
    %278 = vector.broadcast %270 : vector<16x1xf32> to vector<16x32xf32>
    %279 = arith.subf %266, %278 : vector<16x32xf32>
    %cst_109 = arith.constant 9.99999974E-6 : f32
    %280 = vector.broadcast %cst_109 : f32 to vector<16x1xf32>
    %281 = arith.addf %277, %280 : vector<16x1xf32>
    %282 = math.rsqrt %281 : vector<16x1xf32>
    %283 = vector.broadcast %282 : vector<16x1xf32> to vector<16x32xf32>
    %284 = arith.mulf %279, %283 : vector<16x32xf32>
    %c0_110 = arith.constant 0 : index
    %c0_111 = arith.constant 0 : index
    %c0_112 = arith.constant 0 : index
    %285 = vector.load %arg14[%c0_110, %c0_111, %c0_112] : memref<2x1x32xf32, #tpu.memory_space<vmem>>, vector<1x1x32xf32>
    %286 = vector.shape_cast %285 : vector<1x1x32xf32> to vector<1x32xf32>
    %287 = vector.broadcast %286 : vector<1x32xf32> to vector<16x32xf32>
    %288 = arith.mulf %284, %287 : vector<16x32xf32>
    %c0_113 = arith.constant 0 : index
    %c0_114 = arith.constant 0 : index
    %c0_115 = arith.constant 0 : index
    %289 = vector.load %arg15[%c0_113, %c0_114, %c0_115] : memref<2x1x32xf32, #tpu.memory_space<vmem>>, vector<1x1x32xf32>
    %290 = vector.shape_cast %289 : vector<1x1x32xf32> to vector<1x32xf32>
    %291 = vector.broadcast %290 : vector<1x32xf32> to vector<16x32xf32>
    %292 = arith.addf %288, %291 : vector<16x32xf32>
    %293 = vector.broadcast %3 : vector<16x1xf32> to vector<16x32xf32>
    %294 = arith.mulf %292, %293 : vector<16x32xf32>
    %295 = arith.truncf %294 : vector<16x32xf32> to vector<16x32xbf16>
    %c1_116 = arith.constant 1 : index
    %c0_117 = arith.constant 0 : index
    %c0_118 = arith.constant 0 : index
    %296 = vector.load %arg4[%c1_116, %c0_117, %c0_118] : memref<2x32x96xbf16, #tpu.memory_space<vmem>>, vector<1x32x96xbf16>
    %297 = vector.shape_cast %296 : vector<1x32x96xbf16> to vector<32x96xbf16>
    %cst_119 = arith.constant dense<0.000000e+00> : vector<16x96xf32>
    %298 = tpu.matmul %295, %297, %cst_119 {dimension_numbers = #tpu.dot_dimension_numbers<[1], [0], [0], [1], [0, 0, 1, 1], [], []>} : vector<16x32xbf16>, vector<32x96xbf16>, vector<16x96xf32> -> vector<16x96xf32>
    %c1_120 = arith.constant 1 : index
    %c0_121 = arith.constant 0 : index
    %c0_122 = arith.constant 0 : index
    %299 = vector.load %arg5[%c1_120, %c0_121, %c0_122] : memref<2x1x96xf32, #tpu.memory_space<vmem>>, vector<1x1x96xf32>
    %300 = vector.shape_cast %299 : vector<1x1x96xf32> to vector<1x96xf32>
    %301 = vector.broadcast %300 : vector<1x96xf32> to vector<16x96xf32>
    %302 = arith.addf %298, %301 : vector<16x96xf32>
    %303 = vector.extract_strided_slice %302 {offsets = [0, 0], sizes = [16, 16], strides = [1, 1]} : vector<16x96xf32> to vector<16x16xf32>
    %304 = arith.truncf %303 : vector<16x16xf32> to vector<16x16xbf16>
    %305 = vector.extract_strided_slice %302 {offsets = [0, 32], sizes = [16, 16], strides = [1, 1]} : vector<16x96xf32> to vector<16x16xf32>
    %306 = arith.truncf %305 : vector<16x16xf32> to vector<16x16xbf16>
    %307 = vector.extract_strided_slice %302 {offsets = [0, 64], sizes = [16, 16], strides = [1, 1]} : vector<16x96xf32> to vector<16x16xf32>
    %308 = arith.truncf %307 : vector<16x16xf32> to vector<16x16xbf16>
    "tpu.trace_start"() <{level = 10 : i32, message = "td,sd->ts"}> : () -> ()
    %cst_123 = arith.constant dense<0.000000e+00> : vector<16x16xf32>
    %309 = tpu.matmul %304, %306, %cst_123 {dimension_numbers = #tpu.dot_dimension_numbers<[1], [1], [0], [0], [0, 0, 1, 0], [], []>} : vector<16x16xbf16>, vector<16x16xbf16>, vector<16x16xf32> -> vector<16x16xf32>
    "tpu.trace_stop"() : () -> ()
    %310 = arith.addf %309, %4 : vector<16x16xf32>
    %cst_124 = arith.constant dense<0xFF800000> : vector<16xf32>
    %311 = vector.multi_reduction <maximumf>, %310, %cst_124 [1] : vector<16x16xf32> to vector<16xf32>
    %312 = vector.shape_cast %311 : vector<16xf32> to vector<16x1xf32>
    %313 = vector.broadcast %312 : vector<16x1xf32> to vector<16x16xf32>
    %314 = arith.subf %310, %313 : vector<16x16xf32>
    %315 = math.exp %314 : vector<16x16xf32>
    %cst_125 = arith.constant dense<0.000000e+00> : vector<16xf32>
    %316 = vector.multi_reduction <add>, %315, %cst_125 [1] : vector<16x16xf32> to vector<16xf32>
    %317 = vector.shape_cast %316 : vector<16xf32> to vector<16x1xf32>
    %318 = tpu.reciprocal %317 {approx = true} : vector<16x1xf32> -> vector<16x1xf32>
    %319 = vector.broadcast %318 : vector<16x1xf32> to vector<16x16xf32>
    %320 = arith.mulf %315, %319 : vector<16x16xf32>
    %321 = arith.truncf %320 : vector<16x16xf32> to vector<16x16xbf16>
    %cst_126 = arith.constant dense<0.000000e+00> : vector<16x16xf32>
    %322 = tpu.matmul %321, %308, %cst_126 {dimension_numbers = #tpu.dot_dimension_numbers<[1], [0], [0], [1], [0, 0, 1, 1], [], []>} : vector<16x16xbf16>, vector<16x16xbf16>, vector<16x16xf32> -> vector<16x16xf32>
    %323 = vector.extract_strided_slice %302 {offsets = [0, 16], sizes = [16, 16], strides = [1, 1]} : vector<16x96xf32> to vector<16x16xf32>
    %324 = arith.truncf %323 : vector<16x16xf32> to vector<16x16xbf16>
    %325 = vector.extract_strided_slice %302 {offsets = [0, 48], sizes = [16, 16], strides = [1, 1]} : vector<16x96xf32> to vector<16x16xf32>
    %326 = arith.truncf %325 : vector<16x16xf32> to vector<16x16xbf16>
    %327 = vector.extract_strided_slice %302 {offsets = [0, 80], sizes = [16, 16], strides = [1, 1]} : vector<16x96xf32> to vector<16x16xf32>
    %328 = arith.truncf %327 : vector<16x16xf32> to vector<16x16xbf16>
    "tpu.trace_start"() <{level = 10 : i32, message = "td,sd->ts"}> : () -> ()
    %cst_127 = arith.constant dense<0.000000e+00> : vector<16x16xf32>
    %329 = tpu.matmul %324, %326, %cst_127 {dimension_numbers = #tpu.dot_dimension_numbers<[1], [1], [0], [0], [0, 0, 1, 0], [], []>} : vector<16x16xbf16>, vector<16x16xbf16>, vector<16x16xf32> -> vector<16x16xf32>
    "tpu.trace_stop"() : () -> ()
    %330 = arith.addf %329, %4 : vector<16x16xf32>
    %cst_128 = arith.constant dense<0xFF800000> : vector<16xf32>
    %331 = vector.multi_reduction <maximumf>, %330, %cst_128 [1] : vector<16x16xf32> to vector<16xf32>
    %332 = vector.shape_cast %331 : vector<16xf32> to vector<16x1xf32>
    %333 = vector.broadcast %332 : vector<16x1xf32> to vector<16x16xf32>
    %334 = arith.subf %330, %333 : vector<16x16xf32>
    %335 = math.exp %334 : vector<16x16xf32>
    %cst_129 = arith.constant dense<0.000000e+00> : vector<16xf32>
    %336 = vector.multi_reduction <add>, %335, %cst_129 [1] : vector<16x16xf32> to vector<16xf32>
    %337 = vector.shape_cast %336 : vector<16xf32> to vector<16x1xf32>
    %338 = tpu.reciprocal %337 {approx = true} : vector<16x1xf32> -> vector<16x1xf32>
    %339 = vector.broadcast %338 : vector<16x1xf32> to vector<16x16xf32>
    %340 = arith.mulf %335, %339 : vector<16x16xf32>
    %341 = arith.truncf %340 : vector<16x16xf32> to vector<16x16xbf16>
    %cst_130 = arith.constant dense<0.000000e+00> : vector<16x16xf32>
    %342 = tpu.matmul %341, %328, %cst_130 {dimension_numbers = #tpu.dot_dimension_numbers<[1], [0], [0], [1], [0, 0, 1, 1], [], []>} : vector<16x16xbf16>, vector<16x16xbf16>, vector<16x16xf32> -> vector<16x16xf32>
    %343 = tpu.concatenate %322, %342 in 1 : vector<16x16xf32>, vector<16x16xf32> -> vector<16x32xf32>
    %344 = arith.truncf %343 : vector<16x32xf32> to vector<16x32xbf16>
    %c1_131 = arith.constant 1 : index
    %c0_132 = arith.constant 0 : index
    %c0_133 = arith.constant 0 : index
    %345 = vector.load %arg6[%c1_131, %c0_132, %c0_133] : memref<2x32x32xbf16, #tpu.memory_space<vmem>>, vector<1x32x32xbf16>
    %346 = vector.shape_cast %345 : vector<1x32x32xbf16> to vector<32x32xbf16>
    %cst_134 = arith.constant dense<0.000000e+00> : vector<16x32xf32>
    %347 = tpu.matmul %344, %346, %cst_134 {dimension_numbers = #tpu.dot_dimension_numbers<[1], [0], [0], [1], [0, 0, 1, 1], [], []>} : vector<16x32xbf16>, vector<32x32xbf16>, vector<16x32xf32> -> vector<16x32xf32>
    %c1_135 = arith.constant 1 : index
    %c0_136 = arith.constant 0 : index
    %c0_137 = arith.constant 0 : index
    %348 = vector.load %arg7[%c1_135, %c0_136, %c0_137] : memref<2x1x32xf32, #tpu.memory_space<vmem>>, vector<1x1x32xf32>
    %349 = vector.shape_cast %348 : vector<1x1x32xf32> to vector<1x32xf32>
    %350 = vector.broadcast %349 : vector<1x32xf32> to vector<16x32xf32>
    %351 = arith.addf %347, %350 : vector<16x32xf32>
    %352 = arith.addf %351, %294 : vector<16x32xf32>
    %cst_138 = arith.constant dense<0.000000e+00> : vector<16xf32>
    %353 = vector.multi_reduction <add>, %352, %cst_138 [1] : vector<16x32xf32> to vector<16xf32>
    %354 = vector.shape_cast %353 : vector<16xf32> to vector<16x1xf32>
    %cst_139 = arith.constant 3.200000e+01 : f32
    %355 = vector.broadcast %cst_139 : f32 to vector<16x1xf32>
    %356 = arith.divf %354, %355 : vector<16x1xf32>
    %357 = vector.broadcast %356 : vector<16x1xf32> to vector<16x32xf32>
    %358 = arith.subf %352, %357 : vector<16x32xf32>
    %359 = arith.mulf %358, %358 : vector<16x32xf32>
    %cst_140 = arith.constant dense<0.000000e+00> : vector<16xf32>
    %360 = vector.multi_reduction <add>, %359, %cst_140 [1] : vector<16x32xf32> to vector<16xf32>
    %361 = vector.shape_cast %360 : vector<16xf32> to vector<16x1xf32>
    %cst_141 = arith.constant 3.200000e+01 : f32
    %362 = vector.broadcast %cst_141 : f32 to vector<16x1xf32>
    %363 = arith.divf %361, %362 : vector<16x1xf32>
    %364 = vector.broadcast %356 : vector<16x1xf32> to vector<16x32xf32>
    %365 = arith.subf %352, %364 : vector<16x32xf32>
    %cst_142 = arith.constant 9.99999974E-6 : f32
    %366 = vector.broadcast %cst_142 : f32 to vector<16x1xf32>
    %367 = arith.addf %363, %366 : vector<16x1xf32>
    %368 = math.rsqrt %367 : vector<16x1xf32>
    %369 = vector.broadcast %368 : vector<16x1xf32> to vector<16x32xf32>
    %370 = arith.mulf %365, %369 : vector<16x32xf32>
    %c1_143 = arith.constant 1 : index
    %c0_144 = arith.constant 0 : index
    %c0_145 = arith.constant 0 : index
    %371 = vector.load %arg8[%c1_143, %c0_144, %c0_145] : memref<2x1x32xf32, #tpu.memory_space<vmem>>, vector<1x1x32xf32>
    %372 = vector.shape_cast %371 : vector<1x1x32xf32> to vector<1x32xf32>
    %373 = vector.broadcast %372 : vector<1x32xf32> to vector<16x32xf32>
    %374 = arith.mulf %370, %373 : vector<16x32xf32>
    %c1_146 = arith.constant 1 : index
    %c0_147 = arith.constant 0 : index
    %c0_148 = arith.constant 0 : index
    %375 = vector.load %arg9[%c1_146, %c0_147, %c0_148] : memref<2x1x32xf32, #tpu.memory_space<vmem>>, vector<1x1x32xf32>
    %376 = vector.shape_cast %375 : vector<1x1x32xf32> to vector<1x32xf32>
    %377 = vector.broadcast %376 : vector<1x32xf32> to vector<16x32xf32>
    %378 = arith.addf %374, %377 : vector<16x32xf32>
    %379 = vector.broadcast %3 : vector<16x1xf32> to vector<16x32xf32>
    %380 = arith.mulf %378, %379 : vector<16x32xf32>
    %cst_149 = arith.constant 0.000000e+00 : f32
    %381 = vector.broadcast %cst_149 : f32 to vector<16x64xf32>
    %c4_i32_150 = arith.constant 4 : i32
    %382 = tpu.dynamic_rotate %380 by %c4_i32_150 dim 0 : vector<16x32xf32>, i32 -> vector<16x32xf32>
    %383 = vector.broadcast %18 : vector<16x1xf32> to vector<16x32xf32>
    %384 = arith.mulf %382, %383 : vector<16x32xf32>
    %385 = arith.truncf %384 : vector<16x32xf32> to vector<16x32xbf16>
    %c9 = arith.constant 9 : index
    %c0_151 = arith.constant 0 : index
    %c0_152 = arith.constant 0 : index
    %386 = vector.load %arg10[%c9, %c0_151, %c0_152] : memref<18x32x64xbf16, #tpu.memory_space<vmem>>, vector<1x32x64xbf16>
    %387 = vector.shape_cast %386 : vector<1x32x64xbf16> to vector<32x64xbf16>
    %cst_153 = arith.constant dense<0.000000e+00> : vector<16x64xf32>
    %388 = tpu.matmul %385, %387, %cst_153 {dimension_numbers = #tpu.dot_dimension_numbers<[1], [0], [0], [1], [0, 0, 1, 1], [], []>} : vector<16x32xbf16>, vector<32x64xbf16>, vector<16x64xf32> -> vector<16x64xf32>
    %389 = arith.addf %381, %388 : vector<16x64xf32>
    %c3_i32_154 = arith.constant 3 : i32
    %390 = tpu.dynamic_rotate %380 by %c3_i32_154 dim 0 : vector<16x32xf32>, i32 -> vector<16x32xf32>
    %391 = vector.broadcast %29 : vector<16x1xf32> to vector<16x32xf32>
    %392 = arith.mulf %390, %391 : vector<16x32xf32>
    %393 = arith.truncf %392 : vector<16x32xf32> to vector<16x32xbf16>
    %c10 = arith.constant 10 : index
    %c0_155 = arith.constant 0 : index
    %c0_156 = arith.constant 0 : index
    %394 = vector.load %arg10[%c10, %c0_155, %c0_156] : memref<18x32x64xbf16, #tpu.memory_space<vmem>>, vector<1x32x64xbf16>
    %395 = vector.shape_cast %394 : vector<1x32x64xbf16> to vector<32x64xbf16>
    %cst_157 = arith.constant dense<0.000000e+00> : vector<16x64xf32>
    %396 = tpu.matmul %393, %395, %cst_157 {dimension_numbers = #tpu.dot_dimension_numbers<[1], [0], [0], [1], [0, 0, 1, 1], [], []>} : vector<16x32xbf16>, vector<32x64xbf16>, vector<16x64xf32> -> vector<16x64xf32>
    %397 = arith.addf %389, %396 : vector<16x64xf32>
    %c2_i32_158 = arith.constant 2 : i32
    %398 = tpu.dynamic_rotate %380 by %c2_i32_158 dim 0 : vector<16x32xf32>, i32 -> vector<16x32xf32>
    %399 = vector.broadcast %40 : vector<16x1xf32> to vector<16x32xf32>
    %400 = arith.mulf %398, %399 : vector<16x32xf32>
    %401 = arith.truncf %400 : vector<16x32xf32> to vector<16x32xbf16>
    %c11 = arith.constant 11 : index
    %c0_159 = arith.constant 0 : index
    %c0_160 = arith.constant 0 : index
    %402 = vector.load %arg10[%c11, %c0_159, %c0_160] : memref<18x32x64xbf16, #tpu.memory_space<vmem>>, vector<1x32x64xbf16>
    %403 = vector.shape_cast %402 : vector<1x32x64xbf16> to vector<32x64xbf16>
    %cst_161 = arith.constant dense<0.000000e+00> : vector<16x64xf32>
    %404 = tpu.matmul %401, %403, %cst_161 {dimension_numbers = #tpu.dot_dimension_numbers<[1], [0], [0], [1], [0, 0, 1, 1], [], []>} : vector<16x32xbf16>, vector<32x64xbf16>, vector<16x64xf32> -> vector<16x64xf32>
    %405 = arith.addf %397, %404 : vector<16x64xf32>
    %c1_i32_162 = arith.constant 1 : i32
    %406 = tpu.dynamic_rotate %380 by %c1_i32_162 dim 0 : vector<16x32xf32>, i32 -> vector<16x32xf32>
    %407 = vector.broadcast %51 : vector<16x1xf32> to vector<16x32xf32>
    %408 = arith.mulf %406, %407 : vector<16x32xf32>
    %409 = arith.truncf %408 : vector<16x32xf32> to vector<16x32xbf16>
    %c12 = arith.constant 12 : index
    %c0_163 = arith.constant 0 : index
    %c0_164 = arith.constant 0 : index
    %410 = vector.load %arg10[%c12, %c0_163, %c0_164] : memref<18x32x64xbf16, #tpu.memory_space<vmem>>, vector<1x32x64xbf16>
    %411 = vector.shape_cast %410 : vector<1x32x64xbf16> to vector<32x64xbf16>
    %cst_165 = arith.constant dense<0.000000e+00> : vector<16x64xf32>
    %412 = tpu.matmul %409, %411, %cst_165 {dimension_numbers = #tpu.dot_dimension_numbers<[1], [0], [0], [1], [0, 0, 1, 1], [], []>} : vector<16x32xbf16>, vector<32x64xbf16>, vector<16x64xf32> -> vector<16x64xf32>
    %413 = arith.addf %405, %412 : vector<16x64xf32>
    %414 = arith.truncf %380 : vector<16x32xf32> to vector<16x32xbf16>
    %c13 = arith.constant 13 : index
    %c0_166 = arith.constant 0 : index
    %c0_167 = arith.constant 0 : index
    %415 = vector.load %arg10[%c13, %c0_166, %c0_167] : memref<18x32x64xbf16, #tpu.memory_space<vmem>>, vector<1x32x64xbf16>
    %416 = vector.shape_cast %415 : vector<1x32x64xbf16> to vector<32x64xbf16>
    %cst_168 = arith.constant dense<0.000000e+00> : vector<16x64xf32>
    %417 = tpu.matmul %414, %416, %cst_168 {dimension_numbers = #tpu.dot_dimension_numbers<[1], [0], [0], [1], [0, 0, 1, 1], [], []>} : vector<16x32xbf16>, vector<32x64xbf16>, vector<16x64xf32> -> vector<16x64xf32>
    %418 = arith.addf %413, %417 : vector<16x64xf32>
    %c15_i32_169 = arith.constant 15 : i32
    %419 = tpu.dynamic_rotate %380 by %c15_i32_169 dim 0 : vector<16x32xf32>, i32 -> vector<16x32xf32>
    %420 = vector.broadcast %62 : vector<16x1xf32> to vector<16x32xf32>
    %421 = arith.mulf %419, %420 : vector<16x32xf32>
    %422 = arith.truncf %421 : vector<16x32xf32> to vector<16x32xbf16>
    %c14 = arith.constant 14 : index
    %c0_170 = arith.constant 0 : index
    %c0_171 = arith.constant 0 : index
    %423 = vector.load %arg10[%c14, %c0_170, %c0_171] : memref<18x32x64xbf16, #tpu.memory_space<vmem>>, vector<1x32x64xbf16>
    %424 = vector.shape_cast %423 : vector<1x32x64xbf16> to vector<32x64xbf16>
    %cst_172 = arith.constant dense<0.000000e+00> : vector<16x64xf32>
    %425 = tpu.matmul %422, %424, %cst_172 {dimension_numbers = #tpu.dot_dimension_numbers<[1], [0], [0], [1], [0, 0, 1, 1], [], []>} : vector<16x32xbf16>, vector<32x64xbf16>, vector<16x64xf32> -> vector<16x64xf32>
    %426 = arith.addf %418, %425 : vector<16x64xf32>
    %c14_i32_173 = arith.constant 14 : i32
    %427 = tpu.dynamic_rotate %380 by %c14_i32_173 dim 0 : vector<16x32xf32>, i32 -> vector<16x32xf32>
    %428 = vector.broadcast %73 : vector<16x1xf32> to vector<16x32xf32>
    %429 = arith.mulf %427, %428 : vector<16x32xf32>
    %430 = arith.truncf %429 : vector<16x32xf32> to vector<16x32xbf16>
    %c15 = arith.constant 15 : index
    %c0_174 = arith.constant 0 : index
    %c0_175 = arith.constant 0 : index
    %431 = vector.load %arg10[%c15, %c0_174, %c0_175] : memref<18x32x64xbf16, #tpu.memory_space<vmem>>, vector<1x32x64xbf16>
    %432 = vector.shape_cast %431 : vector<1x32x64xbf16> to vector<32x64xbf16>
    %cst_176 = arith.constant dense<0.000000e+00> : vector<16x64xf32>
    %433 = tpu.matmul %430, %432, %cst_176 {dimension_numbers = #tpu.dot_dimension_numbers<[1], [0], [0], [1], [0, 0, 1, 1], [], []>} : vector<16x32xbf16>, vector<32x64xbf16>, vector<16x64xf32> -> vector<16x64xf32>
    %434 = arith.addf %426, %433 : vector<16x64xf32>
    %c13_i32_177 = arith.constant 13 : i32
    %435 = tpu.dynamic_rotate %380 by %c13_i32_177 dim 0 : vector<16x32xf32>, i32 -> vector<16x32xf32>
    %436 = vector.broadcast %84 : vector<16x1xf32> to vector<16x32xf32>
    %437 = arith.mulf %435, %436 : vector<16x32xf32>
    %438 = arith.truncf %437 : vector<16x32xf32> to vector<16x32xbf16>
    %c16 = arith.constant 16 : index
    %c0_178 = arith.constant 0 : index
    %c0_179 = arith.constant 0 : index
    %439 = vector.load %arg10[%c16, %c0_178, %c0_179] : memref<18x32x64xbf16, #tpu.memory_space<vmem>>, vector<1x32x64xbf16>
    %440 = vector.shape_cast %439 : vector<1x32x64xbf16> to vector<32x64xbf16>
    %cst_180 = arith.constant dense<0.000000e+00> : vector<16x64xf32>
    %441 = tpu.matmul %438, %440, %cst_180 {dimension_numbers = #tpu.dot_dimension_numbers<[1], [0], [0], [1], [0, 0, 1, 1], [], []>} : vector<16x32xbf16>, vector<32x64xbf16>, vector<16x64xf32> -> vector<16x64xf32>
    %442 = arith.addf %434, %441 : vector<16x64xf32>
    %c12_i32_181 = arith.constant 12 : i32
    %443 = tpu.dynamic_rotate %380 by %c12_i32_181 dim 0 : vector<16x32xf32>, i32 -> vector<16x32xf32>
    %444 = vector.broadcast %95 : vector<16x1xf32> to vector<16x32xf32>
    %445 = arith.mulf %443, %444 : vector<16x32xf32>
    %446 = arith.truncf %445 : vector<16x32xf32> to vector<16x32xbf16>
    %c17 = arith.constant 17 : index
    %c0_182 = arith.constant 0 : index
    %c0_183 = arith.constant 0 : index
    %447 = vector.load %arg10[%c17, %c0_182, %c0_183] : memref<18x32x64xbf16, #tpu.memory_space<vmem>>, vector<1x32x64xbf16>
    %448 = vector.shape_cast %447 : vector<1x32x64xbf16> to vector<32x64xbf16>
    %cst_184 = arith.constant dense<0.000000e+00> : vector<16x64xf32>
    %449 = tpu.matmul %446, %448, %cst_184 {dimension_numbers = #tpu.dot_dimension_numbers<[1], [0], [0], [1], [0, 0, 1, 1], [], []>} : vector<16x32xbf16>, vector<32x64xbf16>, vector<16x64xf32> -> vector<16x64xf32>
    %450 = arith.addf %442, %449 : vector<16x64xf32>
    %c1_185 = arith.constant 1 : index
    %c0_186 = arith.constant 0 : index
    %c0_187 = arith.constant 0 : index
    %451 = vector.load %arg11[%c1_185, %c0_186, %c0_187] : memref<2x1x64xf32, #tpu.memory_space<vmem>>, vector<1x1x64xf32>
    %452 = vector.shape_cast %451 : vector<1x1x64xf32> to vector<1x64xf32>
    %453 = vector.broadcast %452 : vector<1x64xf32> to vector<16x64xf32>
    %454 = arith.addf %450, %453 : vector<16x64xf32>
    %cst_188 = arith.constant 0.000000e+00 : f32
    %455 = vector.broadcast %cst_188 : f32 to vector<16x64xf32>
    %456 = arith.maximumf %454, %455 : vector<16x64xf32>
    %457 = arith.truncf %456 : vector<16x64xf32> to vector<16x64xbf16>
    %c1_189 = arith.constant 1 : index
    %c0_190 = arith.constant 0 : index
    %c0_191 = arith.constant 0 : index
    %458 = vector.load %arg12[%c1_189, %c0_190, %c0_191] : memref<2x64x32xbf16, #tpu.memory_space<vmem>>, vector<1x64x32xbf16>
    %459 = vector.shape_cast %458 : vector<1x64x32xbf16> to vector<64x32xbf16>
    %cst_192 = arith.constant dense<0.000000e+00> : vector<16x32xf32>
    %460 = tpu.matmul %457, %459, %cst_192 {dimension_numbers = #tpu.dot_dimension_numbers<[1], [0], [0], [1], [0, 0, 1, 1], [], []>} : vector<16x64xbf16>, vector<64x32xbf16>, vector<16x32xf32> -> vector<16x32xf32>
    %c1_193 = arith.constant 1 : index
    %c0_194 = arith.constant 0 : index
    %c0_195 = arith.constant 0 : index
    %461 = vector.load %arg13[%c1_193, %c0_194, %c0_195] : memref<2x1x32xf32, #tpu.memory_space<vmem>>, vector<1x1x32xf32>
    %462 = vector.shape_cast %461 : vector<1x1x32xf32> to vector<1x32xf32>
    %463 = vector.broadcast %462 : vector<1x32xf32> to vector<16x32xf32>
    %464 = arith.addf %460, %463 : vector<16x32xf32>
    %465 = arith.addf %464, %380 : vector<16x32xf32>
    %cst_196 = arith.constant dense<0.000000e+00> : vector<16xf32>
    %466 = vector.multi_reduction <add>, %465, %cst_196 [1] : vector<16x32xf32> to vector<16xf32>
    %467 = vector.shape_cast %466 : vector<16xf32> to vector<16x1xf32>
    %cst_197 = arith.constant 3.200000e+01 : f32
    %468 = vector.broadcast %cst_197 : f32 to vector<16x1xf32>
    %469 = arith.divf %467, %468 : vector<16x1xf32>
    %470 = vector.broadcast %469 : vector<16x1xf32> to vector<16x32xf32>
    %471 = arith.subf %465, %470 : vector<16x32xf32>
    %472 = arith.mulf %471, %471 : vector<16x32xf32>
    %cst_198 = arith.constant dense<0.000000e+00> : vector<16xf32>
    %473 = vector.multi_reduction <add>, %472, %cst_198 [1] : vector<16x32xf32> to vector<16xf32>
    %474 = vector.shape_cast %473 : vector<16xf32> to vector<16x1xf32>
    %cst_199 = arith.constant 3.200000e+01 : f32
    %475 = vector.broadcast %cst_199 : f32 to vector<16x1xf32>
    %476 = arith.divf %474, %475 : vector<16x1xf32>
    %477 = vector.broadcast %469 : vector<16x1xf32> to vector<16x32xf32>
    %478 = arith.subf %465, %477 : vector<16x32xf32>
    %cst_200 = arith.constant 9.99999974E-6 : f32
    %479 = vector.broadcast %cst_200 : f32 to vector<16x1xf32>
    %480 = arith.addf %476, %479 : vector<16x1xf32>
    %481 = math.rsqrt %480 : vector<16x1xf32>
    %482 = vector.broadcast %481 : vector<16x1xf32> to vector<16x32xf32>
    %483 = arith.mulf %478, %482 : vector<16x32xf32>
    %c1_201 = arith.constant 1 : index
    %c0_202 = arith.constant 0 : index
    %c0_203 = arith.constant 0 : index
    %484 = vector.load %arg14[%c1_201, %c0_202, %c0_203] : memref<2x1x32xf32, #tpu.memory_space<vmem>>, vector<1x1x32xf32>
    %485 = vector.shape_cast %484 : vector<1x1x32xf32> to vector<1x32xf32>
    %486 = vector.broadcast %485 : vector<1x32xf32> to vector<16x32xf32>
    %487 = arith.mulf %483, %486 : vector<16x32xf32>
    %c1_204 = arith.constant 1 : index
    %c0_205 = arith.constant 0 : index
    %c0_206 = arith.constant 0 : index
    %488 = vector.load %arg15[%c1_204, %c0_205, %c0_206] : memref<2x1x32xf32, #tpu.memory_space<vmem>>, vector<1x1x32xf32>
    %489 = vector.shape_cast %488 : vector<1x1x32xf32> to vector<1x32xf32>
    %490 = vector.broadcast %489 : vector<1x32xf32> to vector<16x32xf32>
    %491 = arith.addf %487, %490 : vector<16x32xf32>
    %492 = vector.broadcast %3 : vector<16x1xf32> to vector<16x32xf32>
    %493 = arith.mulf %491, %492 : vector<16x32xf32>
    %c0_207 = arith.constant 0 : index
    %c0_208 = arith.constant 0 : index
    %494 = vector.load %arg16[%c0_207, %c0_208] : memref<16x32xf32, #tpu.memory_space<vmem>>, vector<16x32xf32>
    tpu.vector_store %arg16[%c0_207, %c0_208], %493 {strides = array<i32>} : memref<16x32xf32, #tpu.memory_space<vmem>>, vector<16x32xf32>,
    return
  }
}

</mosaic_0001>

<llo_original>
// kernel: tpu_custom_call.1
$region0: #{tpu_custom_call.1}
  #allocation0 [shape = 'u32[]', space=smem, size = 0x4, offset = 0x4, fixed_abs, tag = 'smem constant byte address 0x4 - core index']
  #allocation1 [shape = 'u32[144,128]{1,0:T(1,128)}', space=vmem, size = 0x12000, scoped, tag = 'internal scratch']
  %s0 = inlined_call_operand.vmem [shape: f32[16,32], index: 0, kind: input, shape index: {}]
  %s1 = inlined_call_operand.vmem [shape: f32[16,32], index: 1, kind: input, shape index: {}]
  %s2 = inlined_call_operand.vmem [shape: f32[16,1], index: 2, kind: input, shape index: {}]
  %s3 = inlined_call_operand.vmem [shape: f32[16,16], index: 3, kind: input, shape index: {}]
  %s4 = inlined_call_operand.vmem [shape: bf16[2,32,96], index: 4, kind: input, shape index: {}]
  %s5 = inlined_call_operand.vmem [shape: f32[2,1,96], index: 5, kind: input, shape index: {}]
  %s6 = inlined_call_operand.vmem [shape: bf16[2,32,32], index: 6, kind: input, shape index: {}]
  %s7 = inlined_call_operand.vmem [shape: f32[2,1,32], index: 7, kind: input, shape index: {}]
  %s8 = inlined_call_operand.vmem [shape: f32[2,1,32], index: 8, kind: input, shape index: {}]
  %s9 = inlined_call_operand.vmem [shape: f32[2,1,32], index: 9, kind: input, shape index: {}]
  %s10 = inlined_call_operand.hbm [shape: bf16[18,32,64], index: 10, kind: input, shape index: {}]
  %s11 = inlined_call_operand.vmem [shape: f32[2,1,64], index: 11, kind: input, shape index: {}]
  %s12 = inlined_call_operand.vmem [shape: bf16[2,64,32], index: 12, kind: input, shape index: {}]
  %s13 = inlined_call_operand.vmem [shape: f32[2,1,32], index: 13, kind: input, shape index: {}]
  %s14 = inlined_call_operand.vmem [shape: f32[2,1,32], index: 14, kind: input, shape index: {}]
  %s15 = inlined_call_operand.vmem [shape: f32[2,1,32], index: 15, kind: input, shape index: {}]
  %s16 = inlined_call_operand.hbm [shape: f32[16,32], index: 16, kind: output, shape index: {}]
  %s17 = sld [smem:[#allocation0]]
  $region78: #{tpu_custom_call.1} parent=0
    _
  %s19 = ssub.s32 1, %s17
  %s20 = scalar_select 0, %s19, %s17
  $region1: #{tpu_custom_call.1} parent=0
    #allocation2 [shape = 'u8[147456]{0}', space=vmem, size = 0x24000, scoped, tag = 'input window, operand 10, single buffered']
    #allocation3 [shape = 's32[1]{0}', space=sflag, size = 0x4, scoped, tag = 'scoped memory for tpu_custom_call.1']
    #allocation4 [shape = 's32[1]{0}', space=sflag, size = 0x4, scoped, tag = 'scoped memory for tpu_custom_call.1']
    #allocation5 [shape = 'u8[8192]{0}', space=vmem, size = 0x2000, scoped, tag = 'output window, operand 0, single buffered']
    %21 = vsyncpa [#allocation3], 0
    %22 = vsyncpa [#allocation4], 0
    // Predicated region
    $region2: #{tpu_custom_call.1} parent=1 // pred_check
      _
    $region3: #{tpu_custom_call.1} parent=1 // pred_check_branch
      %24 = sbr.rel (0) target = $region5
    $region4: #{tpu_custom_call.1} parent=1 // pred_region
      _
    $region5: #{tpu_custom_call.1} parent=1 // pred_fallthru
      _
    // Predicated region
    $region6: #{tpu_custom_call.1} parent=1 // pred_check
      _
    $region7: #{tpu_custom_call.1} parent=1 // pred_check_branch
      %26 = sbr.rel (0) target = $region9
    $region8: #{tpu_custom_call.1} parent=1 // pred_region
      _
    $region9: #{tpu_custom_call.1} parent=1 // pred_fallthru
      _
    // Predicated region
    $region10: #{tpu_custom_call.1} parent=1 // pred_check
      _
    $region11: #{tpu_custom_call.1} parent=1 // pred_check_branch
      %28 = sbr.rel (0) target = $region13
    $region12: #{tpu_custom_call.1} parent=1 // pred_region
      _
    $region13: #{tpu_custom_call.1} parent=1 // pred_fallthru
      _
    // Predicated region
    $region14: #{tpu_custom_call.1} parent=1 // pred_check
      _
    $region15: #{tpu_custom_call.1} parent=1 // pred_check_branch
      %30 = sbr.rel (0) target = $region17
    $region16: #{tpu_custom_call.1} parent=1 // pred_region
      _
    $region17: #{tpu_custom_call.1} parent=1 // pred_fallthru
      _
    // Predicated region
    $region18: #{tpu_custom_call.1} parent=1 // pred_check
      _
    $region19: #{tpu_custom_call.1} parent=1 // pred_check_branch
      %32 = sbr.rel (0) target = $region21
    $region20: #{tpu_custom_call.1} parent=1 // pred_region
      _
    $region21: #{tpu_custom_call.1} parent=1 // pred_fallthru
      _
    // Predicated region
    $region22: #{tpu_custom_call.1} parent=1 // pred_check
      _
    $region23: #{tpu_custom_call.1} parent=1 // pred_check_branch
      %34 = sbr.rel (0) target = $region25
    $region24: #{tpu_custom_call.1} parent=1 // pred_region
      _
    $region25: #{tpu_custom_call.1} parent=1 // pred_fallthru
      _
    // Predicated region
    $region26: #{tpu_custom_call.1} parent=1 // pred_check
      _
    $region27: #{tpu_custom_call.1} parent=1 // pred_check_branch
      %36 = sbr.rel (0) target = $region29
    $region28: #{tpu_custom_call.1} parent=1 // pred_region
      _
    $region29: #{tpu_custom_call.1} parent=1 // pred_fallthru
      _
    // Predicated region
    $region30: #{tpu_custom_call.1} parent=1 // pred_check
      _
    $region31: #{tpu_custom_call.1} parent=1 // pred_check_branch
      %38 = sbr.rel (0) target = $region33
    $region32: #{tpu_custom_call.1} parent=1 // pred_region
      _
    $region33: #{tpu_custom_call.1} parent=1 // pred_fallthru
      _
    // Predicated region
    $region34: #{tpu_custom_call.1} parent=1 // pred_check
      _
    $region35: #{tpu_custom_call.1} parent=1 // pred_check_branch
      %40 = sbr.rel (0) target = $region37
    $region36: #{tpu_custom_call.1} parent=1 // pred_region
      _
    $region37: #{tpu_custom_call.1} parent=1 // pred_fallthru
      _
    // Predicated region
    $region38: #{tpu_custom_call.1} parent=1 // pred_check
      _
    $region39: #{tpu_custom_call.1} parent=1 // pred_check_branch
      %42 = sbr.rel (0) target = $region41
    $region40: #{tpu_custom_call.1} parent=1 // pred_region
      _
    $region41: #{tpu_custom_call.1} parent=1 // pred_fallthru
      _
    // Predicated region
    $region42: #{tpu_custom_call.1} parent=1 // pred_check
      _
    $region43: #{tpu_custom_call.1} parent=1 // pred_check_branch
      %44 = sbr.rel (0) target = $region45
    $region44: #{tpu_custom_call.1} parent=1 // pred_region
      %s46 = ssub.s32 4608, 4608
      %47 = vsyncadd [#allocation3], %s46
      %s48 = sshll.u32 [#allocation2], 4
      %s49 = int_to_ptr.vmem [resolvable:$true] %s48
      %54 = dma.hbm_to_vmem [thread:$0]  %s10, 4608, %s49, [#allocation3], 64, 64, 4
    $region45: #{tpu_custom_call.1} parent=1 // pred_fallthru
      _
    // Predicated region
    $region46: #{tpu_custom_call.1} parent=1 // pred_check
      _
    $region47: #{tpu_custom_call.1} parent=1 // pred_check_branch
      %56 = sbr.rel (0) target = $region49
    $region48: #{tpu_custom_call.1} parent=1 // pred_region
      _
    $region49: #{tpu_custom_call.1} parent=1 // pred_fallthru
      _
    // Predicated region
    $region50: #{tpu_custom_call.1} parent=1 // pred_check
      _
    $region51: #{tpu_custom_call.1} parent=1 // pred_check_branch
      %58 = sbr.rel (0) target = $region53
    $region52: #{tpu_custom_call.1} parent=1 // pred_region
      _
    $region53: #{tpu_custom_call.1} parent=1 // pred_fallthru
      _
    // Predicated region
    $region54: #{tpu_custom_call.1} parent=1 // pred_check
      _
    $region55: #{tpu_custom_call.1} parent=1 // pred_check_branch
      %60 = sbr.rel (0) target = $region57
    $region56: #{tpu_custom_call.1} parent=1 // pred_region
      _
    $region57: #{tpu_custom_call.1} parent=1 // pred_fallthru
      _
    // Predicated region
    $region58: #{tpu_custom_call.1} parent=1 // pred_check
      _
    $region59: #{tpu_custom_call.1} parent=1 // pred_check_branch
      %62 = sbr.rel (0) target = $region61
    $region60: #{tpu_custom_call.1} parent=1 // pred_region
      _
    $region61: #{tpu_custom_call.1} parent=1 // pred_fallthru
      _
    // Predicated region
    $region62: #{tpu_custom_call.1} parent=1 // pred_check
      _
    $region63: #{tpu_custom_call.1} parent=1 // pred_check_branch
      %64 = sbr.rel (0) target = $region65
    $region64: #{tpu_custom_call.1} parent=1 // pred_region
      _
    $region65: #{tpu_custom_call.1} parent=1 // pred_fallthru
      _
    // Predicated region
    $region66: #{tpu_custom_call.1} parent=1 // pred_check
      _
    $region67: #{tpu_custom_call.1} parent=1 // pred_check_branch
      %66 = sbr.rel (0) target = $region69
    $region68: #{tpu_custom_call.1} parent=1 // pred_region
      %67 = dma.done [#allocation3], 4608
    $region69: #{tpu_custom_call.1} parent=1 // pred_fallthru
      _
    %v69 = vld [vmem:[%s0] sm:$0xff]
    %v70 = vld [vmem:[%s0 + $0x8] sm:$0xff]
    %v71 = vld [vmem:[%s1] sm:$0xff]
    %v72 = vld [vmem:[%s1 + $0x8] sm:$0xff]
    %v73 = vadd.f32 %v69, %v71
    %v74 = vadd.f32 %v70, %v72
    %v75 = vld [vmem:[%s2] sm:$0xff]
    %v76 = vld [vmem:[%s2 + $0x8] sm:$0xff]
    %v77 = vld [vmem:[%s3] sm:$0xff]
    %v78 = vld [vmem:[%s3 + $0x8] sm:$0xff]
    %v79 = vlaneseq
    %v80 = vshrl.u32 %v79, 7
    %v81 = vadd.s32 %v80, 8
    %v82 = vand.u32 %v80, 7
    %v83 = vand.u32 %v81, 7
    %v84 = vadd.s32 %v82, 4294967292
    %v85 = vadd.s32 %v83, 4294967292
    %vm86 = vcmp.ge.s32.totalorder %v84, 0
    %vm87 = vcmp.ge.s32.totalorder %v85, 0
    %vm88 = vcmp.lt.s32.totalorder %v84, 8
    %vm89 = vcmp.lt.s32.totalorder %v85, 8
    %vm90 = vmand %vm86, %vm88
    %vm91 = vmand %vm87, %vm89
    %v92 = vsel %vm90, 1, 0
    %v93 = vsel %vm91, 1, 0
    %v94 = vcvt.s32.f32 %v92
    %v95 = vcvt.s32.f32 %v93
    %v96 = vadd.s32 %v82, 4294967293
    %v97 = vadd.s32 %v83, 4294967293
    %vm98 = vcmp.ge.s32.totalorder %v96, 0
    %vm99 = vcmp.ge.s32.totalorder %v97, 0
    %vm100 = vcmp.lt.s32.totalorder %v96, 8
    %vm101 = vcmp.lt.s32.totalorder %v97, 8
    %vm102 = vmand %vm98, %vm100
    %vm103 = vmand %vm99, %vm101
    %v104 = vsel %vm102, 1, 0
    %v105 = vsel %vm103, 1, 0
    %v106 = vcvt.s32.f32 %v104
    %v107 = vcvt.s32.f32 %v105
    %v108 = vadd.s32 %v82, 4294967294
    %v109 = vadd.s32 %v83, 4294967294
    %vm110 = vcmp.ge.s32.totalorder %v108, 0
    %vm111 = vcmp.ge.s32.totalorder %v109, 0
    %vm112 = vcmp.lt.s32.totalorder %v108, 8
    %vm113 = vcmp.lt.s32.totalorder %v109, 8
    %vm114 = vmand %vm110, %vm112
    %vm115 = vmand %vm111, %vm113
    %v116 = vsel %vm114, 1, 0
    %v117 = vsel %vm115, 1, 0
    %v118 = vcvt.s32.f32 %v116
    %v119 = vcvt.s32.f32 %v117
    %v120 = vadd.s32 %v82, 4294967295
    %v121 = vadd.s32 %v83, 4294967295
    %vm122 = vcmp.ge.s32.totalorder %v120, 0
    %vm123 = vcmp.ge.s32.totalorder %v121, 0
    %vm124 = vcmp.lt.s32.totalorder %v120, 8
    %vm125 = vcmp.lt.s32.totalorder %v121, 8
    %vm126 = vmand %vm122, %vm124
    %vm127 = vmand %vm123, %vm125
    %v128 = vsel %vm126, 1, 0
    %v129 = vsel %vm127, 1, 0
    %v130 = vcvt.s32.f32 %v128
    %v131 = vcvt.s32.f32 %v129
    %v132 = vadd.s32 %v82, 1
    %v133 = vadd.s32 %v83, 1
    %vm134 = vcmp.ge.s32.totalorder %v132, 0
    %vm135 = vcmp.ge.s32.totalorder %v133, 0
    %vm136 = vcmp.lt.s32.totalorder %v132, 8
    %vm137 = vcmp.lt.s32.totalorder %v133, 8
    %vm138 = vmand %vm134, %vm136
    %vm139 = vmand %vm135, %vm137
    %v140 = vsel %vm138, 1, 0
    %v141 = vsel %vm139, 1, 0
    %v142 = vcvt.s32.f32 %v140
    %v143 = vcvt.s32.f32 %v141
    %v144 = vadd.s32 %v82, 2
    %v145 = vadd.s32 %v83, 2
    %vm146 = vcmp.ge.s32.totalorder %v144, 0
    %vm147 = vcmp.ge.s32.totalorder %v145, 0
    %vm148 = vcmp.lt.s32.totalorder %v144, 8
    %vm149 = vcmp.lt.s32.totalorder %v145, 8
    %vm150 = vmand %vm146, %vm148
    %vm151 = vmand %vm147, %vm149
    %v152 = vsel %vm150, 1, 0
    %v153 = vsel %vm151, 1, 0
    %v154 = vcvt.s32.f32 %v152
    %v155 = vcvt.s32.f32 %v153
    %v156 = vadd.s32 %v82, 3
    %v157 = vadd.s32 %v83, 3
    %vm158 = vcmp.ge.s32.totalorder %v156, 0
    %vm159 = vcmp.ge.s32.totalorder %v157, 0
    %vm160 = vcmp.lt.s32.totalorder %v156, 8
    %vm161 = vcmp.lt.s32.totalorder %v157, 8
    %vm162 = vmand %vm158, %vm160
    %vm163 = vmand %vm159, %vm161
    %v164 = vsel %vm162, 1, 0
    %v165 = vsel %vm163, 1, 0
    %v166 = vcvt.s32.f32 %v164
    %v167 = vcvt.s32.f32 %v165
    %v168 = vadd.s32 %v82, 4
    %v169 = vadd.s32 %v83, 4
    %vm170 = vcmp.ge.s32.totalorder %v168, 0
    %vm171 = vcmp.ge.s32.totalorder %v169, 0
    %vm172 = vcmp.lt.s32.totalorder %v168, 8
    %vm173 = vcmp.lt.s32.totalorder %v169, 8
    %vm174 = vmand %vm170, %vm172
    %vm175 = vmand %vm171, %vm173
    %v176 = vsel %vm174, 1, 0
    %v177 = vsel %vm175, 1, 0
    %v178 = vcvt.s32.f32 %v176
    %v179 = vcvt.s32.f32 %v177
    %v180 = vpack.c.bf16 %v74, %v73
    %v181 = vld [vmem:[%s4] sm:$0xf]
    %v182 = vld [vmem:[%s4 + $0x4] sm:$0xf]
    %v183 = vld [vmem:[%s4 + $0x8] sm:$0xf]
    %v184 = vld [vmem:[%s4 + $0xc] sm:$0xf]
    %v185 = vld [vmem:[%s5] sm:$0x1]
    %v187 = vlaneseq
    %v188 = vshrl.u32 %v187, 7
    %v189 = vsub.s32 0, %v188
    %v190 = vrot.slane %v185, %v189
    %v196 = vunpack.c.l.b16 %v181
    %v197 = vunpack.c.l.b16 %v182
    %v198 = vunpack.c.l.b16 %v183
    %v199 = vunpack.c.l.b16 %v184
    %v200 = vpack.c.b16 %v197, %v196
    %v201 = vpack.c.b16 %v199, %v198
    %vm204 = vcmask 261120
    %v206 = vsel %vm204, %v180, 0
    %208 = vmatprep.subr.bf16.mxu0 0
    %209 = vmatpush1.bf16.msra.mxu0 %v200
    %210 = vmatprep.subr.bf16.mxu0 0
    %211 = vmatpush1.bf16.msra.mxu0 %v201
    %212 = vmatprep.subr.bf16.mxu0 0
    %213 = vmatpush1.bf16.msra.mxu0 0
    %214 = vmatprep.subr.bf16.mxu0 0
    %215 = vmatpush1.bf16.msra.mxu0 0
    %216 = vmatprep.subr.bf16.mxu0 0
    %217 = vmatpush1.bf16.msra.mxu0 0
    %218 = vmatprep.subr.bf16.mxu0 0
    %219 = vmatpush1.bf16.msra.mxu0 0
    %220 = vmatprep.subr.bf16.mxu0 0
    %221 = vmatpush1.bf16.msra.mxu0 0
    %222 = vmatprep.subr.bf16.mxu0 0
    %223 = vmatpush1.bf16.msra.mxu0 0
    %224 = vmatprep.subr.bf16.mxu0 0
    %225 = vmatpush1.bf16.msra.mxu0 0
    %226 = vmatprep.subr.bf16.mxu0 0
    %227 = vmatpush1.bf16.msra.mxu0 0
    %228 = vmatprep.subr.bf16.mxu0 0
    %229 = vmatpush1.bf16.msra.mxu0 0
    %230 = vmatprep.subr.bf16.mxu0 0
    %231 = vmatpush1.bf16.msra.mxu0 0
    %232 = vmatprep.subr.bf16.mxu0 0
    %233 = vmatpush1.bf16.msra.mxu0 0
    %234 = vmatprep.subr.bf16.mxu0 0
    %235 = vmatpush1.bf16.msra.mxu0 0
    %236 = vmatprep.subr.bf16.mxu0 0
    %237 = vmatpush1.bf16.msra.mxu0 0
    %238 = vmatprep.subr.bf16.mxu0 0
    %239 = vmatpush1.bf16.msra.mxu0 0
    %240 = vmatprep.mubr.bf16.mxu0 0
    %241 = vmatmul.mubr.bf16.gmra.mrb[0].mxu0 %v206
    %v242 = vpop.f32.mrb[0].mxu0
    %v243 = vadd.f32 %v190, %v242
    %v244 = vpop.f32.mrb[0].mxu0
    %v245 = vpop.f32.mrb[0].mxu0
    %v246 = vadd.f32 %v190, %v245
    %v247 = vpop.f32.mrb[0].mxu0
    %248 = vdwg.mxu0
    %v249 = vpack.c.bf16 %v246, %v243
    %251 = vrot.lane.b32.xlu0 %v249, 96
    %v252 = vpop.permute.xlu0 %251
    %vm253 = vcmask 130048
    %v255 = vsel %vm253, %v249, 0
    %v258 = vsel %vm253, %v252, 0
    %260 = vmatprep.subr.bf16.mxu0 0
    %261 = vmatpush1.bf16.xpose.msra.mxu0 %v258
    %262 = vmatprep.subr.bf16.mxu0 0
    %263 = vmatpush1.bf16.xpose.msra.mxu0 0
    %264 = vmatprep.subr.bf16.mxu0 0
    %265 = vmatpush1.bf16.xpose.msra.mxu0 0
    %266 = vmatprep.subr.bf16.mxu0 0
    %267 = vmatpush1.bf16.xpose.msra.mxu0 0
    %268 = vmatprep.subr.bf16.mxu0 0
    %269 = vmatpush1.bf16.xpose.msra.mxu0 0
    %270 = vmatprep.subr.bf16.mxu0 0
    %271 = vmatpush1.bf16.xpose.msra.mxu0 0
    %272 = vmatprep.subr.bf16.mxu0 0
    %273 = vmatpush1.bf16.xpose.msra.mxu0 0
    %274 = vmatprep.subr.bf16.mxu0 0
    %275 = vmatpush1.bf16.xpose.msra.mxu0 0
    %276 = vmatprep.subr.bf16.mxu0 0
    %277 = vmatpush1.bf16.xpose.msra.mxu0 0
    %278 = vmatprep.subr.bf16.mxu0 0
    %279 = vmatpush1.bf16.xpose.msra.mxu0 0
    %280 = vmatprep.subr.bf16.mxu0 0
    %281 = vmatpush1.bf16.xpose.msra.mxu0 0
    %282 = vmatprep.subr.bf16.mxu0 0
    %283 = vmatpush1.bf16.xpose.msra.mxu0 0
    %284 = vmatprep.subr.bf16.mxu0 0
    %285 = vmatpush1.bf16.xpose.msra.mxu0 0
    %286 = vmatprep.subr.bf16.mxu0 0
    %287 = vmatpush1.bf16.xpose.msra.mxu0 0
    %288 = vmatprep.subr.bf16.mxu0 0
    %289 = vmatpush1.bf16.xpose.msra.mxu0 0
    %290 = vmatprep.subr.bf16.mxu0 0
    %291 = vmatpush1.bf16.xpose.msra.mxu0 0
    %292 = vmatprep.mubr.bf16.mxu0 0
    %293 = vmatmul.mubr.bf16.gmra.mrb[0].mxu0 %v255
    %v294 = vpop.f32.mrb[0].mxu0
    %v295 = vadd.f32 %v77, %v294
    %v296 = vpop.f32.mrb[0].mxu0
    %v297 = vpop.f32.mrb[0].mxu0
    %v298 = vadd.f32 %v78, %v297
    %v299 = vpop.f32.mrb[0].mxu0
    %300 = vdwg.mxu0
    %v301 = vsel %vm253, %v295, -inf
    %302 = vmax.xlane.f32.xlu0 %v301
    %v303 = vpop.xlane.xlu0 %302
    %v304 = vsel %vm253, %v298, -inf
    %305 = vmax.xlane.f32.xlu0 %v304
    %v306 = vpop.xlane.xlu0 %305
    %v307 = vsub.f32 %v295, %v303
    %v308 = vsub.f32 %v298, %v306
    %v309 = vmul.f32 %v307, 1.442695
    %v310 = vpow.pop %v309
    %v311 = vmul.f32 %v308, 1.442695
    %v312 = vpow.pop %v311
    %v313 = vsel %vm253, %v310, 0.0
    %314 = vadd.xlane.f32.xlu0 %v313
    %v315 = vpop.xlane.xlu0 %314
    %v316 = vsel %vm253, %v312, 0.0
    %317 = vadd.xlane.f32.xlu0 %v316
    %v318 = vpop.xlane.xlu0 %317
    %v319 = vrcp.pop %v315
    %v320 = vrcp.pop %v318
    %v321 = vmul.f32 %v310, %v319
    %v322 = vmul.f32 %v312, %v320
    %v323 = vpack.c.bf16 %v322, %v321
    %324 = vrot.lane.b32.xlu0 %v249, 64
    %v325 = vpop.permute.xlu0 %324
    %v328 = vsel %vm253, %v323, 0
    %330 = vmatprep.subr.bf16.mxu0 0
    %331 = vmatpush1.bf16.msra.mxu0 %v325
    %332 = vmatprep.subr.bf16.mxu0 0
    %333 = vmatpush1.bf16.msra.mxu0 0
    %334 = vmatprep.subr.bf16.mxu0 0
    %335 = vmatpush1.bf16.msra.mxu0 0
    %336 = vmatprep.subr.bf16.mxu0 0
    %337 = vmatpush1.bf16.msra.mxu0 0
    %338 = vmatprep.subr.bf16.mxu0 0
    %339 = vmatpush1.bf16.msra.mxu0 0
    %340 = vmatprep.subr.bf16.mxu0 0
    %341 = vmatpush1.bf16.msra.mxu0 0
    %342 = vmatprep.subr.bf16.mxu0 0
    %343 = vmatpush1.bf16.msra.mxu0 0
    %344 = vmatprep.subr.bf16.mxu0 0
    %345 = vmatpush1.bf16.msra.mxu0 0
    %346 = vmatprep.subr.bf16.mxu0 0
    %347 = vmatpush1.bf16.msra.mxu0 0
    %348 = vmatprep.subr.bf16.mxu0 0
    %349 = vmatpush1.bf16.msra.mxu0 0
    %350 = vmatprep.subr.bf16.mxu0 0
    %351 = vmatpush1.bf16.msra.mxu0 0
    %352 = vmatprep.subr.bf16.mxu0 0
    %353 = vmatpush1.bf16.msra.mxu0 0
    %354 = vmatprep.subr.bf16.mxu0 0
    %355 = vmatpush1.bf16.msra.mxu0 0
    %356 = vmatprep.subr.bf16.mxu0 0
    %357 = vmatpush1.bf16.msra.mxu0 0
    %358 = vmatprep.subr.bf16.mxu0 0
    %359 = vmatpush1.bf16.msra.mxu0 0
    %360 = vmatprep.subr.bf16.mxu0 0
    %361 = vmatpush1.bf16.msra.mxu0 0
    %362 = vmatprep.mubr.bf16.mxu0 0
    %363 = vmatmul.mubr.bf16.gmra.mrb[0].mxu0 %v328
    %v364 = vpop.f32.mrb[0].mxu0
    %v365 = vadd.f32 0.0, %v364
    %v366 = vpop.f32.mrb[0].mxu0
    %v367 = vpop.f32.mrb[0].mxu0
    %v368 = vadd.f32 0.0, %v367
    %v369 = vpop.f32.mrb[0].mxu0
    %370 = vdwg.mxu0
    %371 = vrot.lane.b32.xlu0 %v249, 112
    %v372 = vpop.permute.xlu0 %371
    %373 = vrot.lane.b32.xlu0 %v249, 80
    %v374 = vpop.permute.xlu0 %373
    %v376 = vsel %vm253, %v372, 0
    %v379 = vsel %vm253, %v374, 0
    %381 = vmatprep.subr.bf16.mxu0 0
    %382 = vmatpush1.bf16.xpose.msra.mxu0 %v379
    %383 = vmatprep.subr.bf16.mxu0 0
    %384 = vmatpush1.bf16.xpose.msra.mxu0 0
    %385 = vmatprep.subr.bf16.mxu0 0
    %386 = vmatpush1.bf16.xpose.msra.mxu0 0
    %387 = vmatprep.subr.bf16.mxu0 0
    %388 = vmatpush1.bf16.xpose.msra.mxu0 0
    %389 = vmatprep.subr.bf16.mxu0 0
    %390 = vmatpush1.bf16.xpose.msra.mxu0 0
    %391 = vmatprep.subr.bf16.mxu0 0
    %392 = vmatpush1.bf16.xpose.msra.mxu0 0
    %393 = vmatprep.subr.bf16.mxu0 0
    %394 = vmatpush1.bf16.xpose.msra.mxu0 0
    %395 = vmatprep.subr.bf16.mxu0 0
    %396 = vmatpush1.bf16.xpose.msra.mxu0 0
    %397 = vmatprep.subr.bf16.mxu0 0
    %398 = vmatpush1.bf16.xpose.msra.mxu0 0
    %399 = vmatprep.subr.bf16.mxu0 0
    %400 = vmatpush1.bf16.xpose.msra.mxu0 0
    %401 = vmatprep.subr.bf16.mxu0 0
    %402 = vmatpush1.bf16.xpose.msra.mxu0 0
    %403 = vmatprep.subr.bf16.mxu0 0
    %404 = vmatpush1.bf16.xpose.msra.mxu0 0
    %405 = vmatprep.subr.bf16.mxu0 0
    %406 = vmatpush1.bf16.xpose.msra.mxu0 0
    %407 = vmatprep.subr.bf16.mxu0 0
    %408 = vmatpush1.bf16.xpose.msra.mxu0 0
    %409 = vmatprep.subr.bf16.mxu0 0
    %410 = vmatpush1.bf16.xpose.msra.mxu0 0
    %411 = vmatprep.subr.bf16.mxu0 0
    %412 = vmatpush1.bf16.xpose.msra.mxu0 0
    %413 = vmatprep.mubr.bf16.mxu0 0
    %414 = vmatmul.mubr.bf16.gmra.mrb[0].mxu0 %v376
    %v415 = vpop.f32.mrb[0].mxu0
    %v416 = vadd.f32 %v77, %v415
    %v417 = vpop.f32.mrb[0].mxu0
    %v418 = vpop.f32.mrb[0].mxu0
    %v419 = vadd.f32 %v78, %v418
    %v420 = vpop.f32.mrb[0].mxu0
    %421 = vdwg.mxu0
    %v422 = vsel %vm253, %v416, -inf
    %423 = vmax.xlane.f32.xlu0 %v422
    %v424 = vpop.xlane.xlu0 %423
    %v425 = vsel %vm253, %v419, -inf
    %426 = vmax.xlane.f32.xlu0 %v425
    %v427 = vpop.xlane.xlu0 %426
    %v428 = vsub.f32 %v416, %v424
    %v429 = vsub.f32 %v419, %v427
    %v430 = vmul.f32 %v428, 1.442695
    %v431 = vpow.pop %v430
    %v432 = vmul.f32 %v429, 1.442695
    %v433 = vpow.pop %v432
    %v434 = vsel %vm253, %v431, 0.0
    %435 = vadd.xlane.f32.xlu0 %v434
    %v436 = vpop.xlane.xlu0 %435
    %v437 = vsel %vm253, %v433, 0.0
    %438 = vadd.xlane.f32.xlu0 %v437
    %v439 = vpop.xlane.xlu0 %438
    %v440 = vrcp.pop %v436
    %v441 = vrcp.pop %v439
    %v442 = vmul.f32 %v431, %v440
    %v443 = vmul.f32 %v433, %v441
    %v444 = vpack.c.bf16 %v443, %v442
    %445 = vrot.lane.b32.xlu0 %v249, 48
    %v446 = vpop.permute.xlu0 %445
    %v449 = vsel %vm253, %v444, 0
    %451 = vmatprep.subr.bf16.mxu0 0
    %452 = vmatpush1.bf16.msra.mxu0 %v446
    %453 = vmatprep.subr.bf16.mxu0 0
    %454 = vmatpush1.bf16.msra.mxu0 0
    %455 = vmatprep.subr.bf16.mxu0 0
    %456 = vmatpush1.bf16.msra.mxu0 0
    %457 = vmatprep.subr.bf16.mxu0 0
    %458 = vmatpush1.bf16.msra.mxu0 0
    %459 = vmatprep.subr.bf16.mxu0 0
    %460 = vmatpush1.bf16.msra.mxu0 0
    %461 = vmatprep.subr.bf16.mxu0 0
    %462 = vmatpush1.bf16.msra.mxu0 0
    %463 = vmatprep.subr.bf16.mxu0 0
    %464 = vmatpush1.bf16.msra.mxu0 0
    %465 = vmatprep.subr.bf16.mxu0 0
    %466 = vmatpush1.bf16.msra.mxu0 0
    %467 = vmatprep.subr.bf16.mxu0 0
    %468 = vmatpush1.bf16.msra.mxu0 0
    %469 = vmatprep.subr.bf16.mxu0 0
    %470 = vmatpush1.bf16.msra.mxu0 0
    %471 = vmatprep.subr.bf16.mxu0 0
    %472 = vmatpush1.bf16.msra.mxu0 0
    %473 = vmatprep.subr.bf16.mxu0 0
    %474 = vmatpush1.bf16.msra.mxu0 0
    %475 = vmatprep.subr.bf16.mxu0 0
    %476 = vmatpush1.bf16.msra.mxu0 0
    %477 = vmatprep.subr.bf16.mxu0 0
    %478 = vmatpush1.bf16.msra.mxu0 0
    %479 = vmatprep.subr.bf16.mxu0 0
    %480 = vmatpush1.bf16.msra.mxu0 0
    %481 = vmatprep.subr.bf16.mxu0 0
    %482 = vmatpush1.bf16.msra.mxu0 0
    %483 = vmatprep.mubr.bf16.mxu0 0
    %484 = vmatmul.mubr.bf16.gmra.mrb[0].mxu0 %v449
    %v485 = vpop.f32.mrb[0].mxu0
    %v486 = vadd.f32 0.0, %v485
    %v487 = vpop.f32.mrb[0].mxu0
    %v488 = vpop.f32.mrb[0].mxu0
    %v489 = vadd.f32 0.0, %v488
    %v490 = vpop.f32.mrb[0].mxu0
    %491 = vdwg.mxu0
    %494 = vrot.lane.b32.xlu0 %v486, 16
    %v495 = vpop.permute.xlu0 %494
    %496 = vrot.lane.b32.xlu0 %v489, 16
    %v497 = vpop.permute.xlu0 %496
    %v500 = vsel %vm253, %v365, %v495
    %v501 = vsel %vm253, %v368, %v497
    %v502 = vpack.c.bf16 %v501, %v500
    %v503 = vld [vmem:[%s6] sm:$0xf]
    %v504 = vld [vmem:[%s6 + $0x4] sm:$0xf]
    %v505 = vld [vmem:[%s6 + $0x8] sm:$0xf]
    %v506 = vld [vmem:[%s6 + $0xc] sm:$0xf]
    %v507 = vld [vmem:[%s7] sm:$0x1]
    %v509 = vlaneseq
    %v510 = vshrl.u32 %v509, 7
    %v511 = vsub.s32 0, %v510
    %v512 = vrot.slane %v507, %v511
    %v518 = vunpack.c.l.b16 %v503
    %v519 = vunpack.c.l.b16 %v504
    %v520 = vunpack.c.l.b16 %v505
    %v521 = vunpack.c.l.b16 %v506
    %v522 = vpack.c.b16 %v519, %v518
    %v523 = vpack.c.b16 %v521, %v520
    %v527 = vsel %vm204, %v502, 0
    %529 = vmatprep.subr.bf16.mxu0 0
    %530 = vmatpush1.bf16.msra.mxu0 %v522
    %531 = vmatprep.subr.bf16.mxu0 0
    %532 = vmatpush1.bf16.msra.mxu0 %v523
    %533 = vmatprep.subr.bf16.mxu0 0
    %534 = vmatpush1.bf16.msra.mxu0 0
    %535 = vmatprep.subr.bf16.mxu0 0
    %536 = vmatpush1.bf16.msra.mxu0 0
    %537 = vmatprep.subr.bf16.mxu0 0
    %538 = vmatpush1.bf16.msra.mxu0 0
    %539 = vmatprep.subr.bf16.mxu0 0
    %540 = vmatpush1.bf16.msra.mxu0 0
    %541 = vmatprep.subr.bf16.mxu0 0
    %542 = vmatpush1.bf16.msra.mxu0 0
    %543 = vmatprep.subr.bf16.mxu0 0
    %544 = vmatpush1.bf16.msra.mxu0 0
    %545 = vmatprep.subr.bf16.mxu0 0
    %546 = vmatpush1.bf16.msra.mxu0 0
    %547 = vmatprep.subr.bf16.mxu0 0
    %548 = vmatpush1.bf16.msra.mxu0 0
    %549 = vmatprep.subr.bf16.mxu0 0
    %550 = vmatpush1.bf16.msra.mxu0 0
    %551 = vmatprep.subr.bf16.mxu0 0
    %552 = vmatpush1.bf16.msra.mxu0 0
    %553 = vmatprep.subr.bf16.mxu0 0
    %554 = vmatpush1.bf16.msra.mxu0 0
    %555 = vmatprep.subr.bf16.mxu0 0
    %556 = vmatpush1.bf16.msra.mxu0 0
    %557 = vmatprep.subr.bf16.mxu0 0
    %558 = vmatpush1.bf16.msra.mxu0 0
    %559 = vmatprep.subr.bf16.mxu0 0
    %560 = vmatpush1.bf16.msra.mxu0 0
    %561 = vmatprep.mubr.bf16.mxu0 0
    %562 = vmatmul.mubr.bf16.gmra.mrb[0].mxu0 %v527
    %v563 = vpop.f32.mrb[0].mxu0
    %v564 = vadd.f32 %v512, %v563
    %v565 = vpop.f32.mrb[0].mxu0
    %v566 = vpop.f32.mrb[0].mxu0
    %v567 = vadd.f32 %v512, %v566
    %v568 = vpop.f32.mrb[0].mxu0
    %569 = vdwg.mxu0
    %v570 = vadd.f32 %v564, %v73
    %v571 = vadd.f32 %v567, %v74
    %v572 = vsel %vm204, %v570, 0.0
    %573 = vadd.xlane.f32.xlu0 %v572
    %v574 = vpop.xlane.xlu0 %573
    %v575 = vsel %vm204, %v571, 0.0
    %576 = vadd.xlane.f32.xlu0 %v575
    %v577 = vpop.xlane.xlu0 %576
    %v578 = vrcp.pop 32.0
    %v579 = vmul.f32 %v574, %v578
    %v580 = vmul.f32 %v577, %v578
    %v581 = vsub.f32 %v570, %v579
    %v582 = vsub.f32 %v571, %v580
    %v583 = vmul.f32 %v581, %v581
    %v584 = vmul.f32 %v582, %v582
    %v585 = vsel %vm204, %v583, 0.0
    %586 = vadd.xlane.f32.xlu0 %v585
    %v587 = vpop.xlane.xlu0 %586
    %v588 = vsel %vm204, %v584, 0.0
    %589 = vadd.xlane.f32.xlu0 %v588
    %v590 = vpop.xlane.xlu0 %589
    %v591 = vmul.f32 %v587, %v578
    %v592 = vmul.f32 %v590, %v578
    %v593 = vadd.f32 %v591, 1e-05
    %v594 = vadd.f32 %v592, 1e-05
    %v595 = vrsqrt.pop %v593
    %v596 = vrsqrt.pop %v594
    %v597 = vmul.f32 %v581, %v595
    %v598 = vmul.f32 %v582, %v596
    %v599 = vld [vmem:[%s8] sm:$0x1]
    %v601 = vlaneseq
    %v602 = vshrl.u32 %v601, 7
    %v603 = vsub.s32 0, %v602
    %v604 = vrot.slane %v599, %v603
    %v606 = vmul.f32 %v597, %v604
    %v607 = vmul.f32 %v598, %v604
    %v608 = vld [vmem:[%s9] sm:$0x1]
    %v610 = vlaneseq
    %v611 = vshrl.u32 %v610, 7
    %v612 = vsub.s32 0, %v611
    %v613 = vrot.slane %v608, %v612
    %v615 = vadd.f32 %v606, %v613
    %v616 = vadd.f32 %v607, %v613
    %618 = vset.pattern.permute.xlu0 0
    %619 = vperm.xlu0 %618, %v75
    %v620 = vpop.permute.xlu0 %619
    %623 = vset.pattern.permute.xlu0 0
    %624 = vperm.xlu0 %623, %v76
    %v625 = vpop.permute.xlu0 %624
    %v627 = vmul.f32 %v615, %v620
    %v628 = vmul.f32 %v616, %v625
    %v629 = vrot.slane %v627, 4
    %v630 = vrot.slane %v628, 4
    %vm631 = vcmp.lt.s32.totalorder %v80, 4
    %v632 = vsel %vm631, %v629, %v630
    %v633 = vsel %vm631, %v630, %v629
    %v634 = vmul.f32 %v633, %v94
    %v635 = vmul.f32 %v632, %v95
    %v636 = vpack.c.bf16 %v635, %v634
    %v637 = vld [vmem:[#allocation2] sm:$0xf]
    %v638 = vld [vmem:[#allocation2 + $0x4] sm:$0xf]
    %v639 = vld [vmem:[#allocation2 + $0x8] sm:$0xf]
    %v640 = vld [vmem:[#allocation2 + $0xc] sm:$0xf]
    %v641 = vrot.slane %v627, 5
    %v642 = vrot.slane %v628, 5
    %vm643 = vcmp.lt.s32.totalorder %v80, 3
    %v644 = vsel %vm643, %v641, %v642
    %v645 = vsel %vm643, %v642, %v641
    %v646 = vmul.f32 %v645, %v106
    %v647 = vmul.f32 %v644, %v107
    %v648 = vpack.c.bf16 %v647, %v646
    %s649 = scalar_lea.vmem [#allocation2], 16
    %v650 = vld [vmem:[%s649] sm:$0xf]
    %v651 = vld [vmem:[%s649 + $0x4] sm:$0xf]
    %v652 = vld [vmem:[%s649 + $0x8] sm:$0xf]
    %v653 = vld [vmem:[%s649 + $0xc] sm:$0xf]
    %v658 = vunpack.c.l.b16 %v650
    %v659 = vunpack.c.l.b16 %v651
    %v660 = vunpack.c.l.b16 %v652
    %v661 = vunpack.c.l.b16 %v653
    %v662 = vpack.c.b16 %v659, %v658
    %v663 = vpack.c.b16 %v661, %v660
    %v667 = vsel %vm204, %v648, 0
    %669 = vmatprep.subr.bf16.mxu0 0
    %670 = vmatpush1.bf16.msra.mxu0 %v662
    %671 = vmatprep.subr.bf16.mxu0 0
    %672 = vmatpush1.bf16.msra.mxu0 %v663
    %673 = vmatprep.subr.bf16.mxu0 0
    %674 = vmatpush1.bf16.msra.mxu0 0
    %675 = vmatprep.subr.bf16.mxu0 0
    %676 = vmatpush1.bf16.msra.mxu0 0
    %677 = vmatprep.subr.bf16.mxu0 0
    %678 = vmatpush1.bf16.msra.mxu0 0
    %679 = vmatprep.subr.bf16.mxu0 0
    %680 = vmatpush1.bf16.msra.mxu0 0
    %681 = vmatprep.subr.bf16.mxu0 0
    %682 = vmatpush1.bf16.msra.mxu0 0
    %683 = vmatprep.subr.bf16.mxu0 0
    %684 = vmatpush1.bf16.msra.mxu0 0
    %685 = vmatprep.subr.bf16.mxu0 0
    %686 = vmatpush1.bf16.msra.mxu0 0
    %687 = vmatprep.subr.bf16.mxu0 0
    %688 = vmatpush1.bf16.msra.mxu0 0
    %689 = vmatprep.subr.bf16.mxu0 0
    %690 = vmatpush1.bf16.msra.mxu0 0
    %691 = vmatprep.subr.bf16.mxu0 0
    %692 = vmatpush1.bf16.msra.mxu0 0
    %693 = vmatprep.subr.bf16.mxu0 0
    %694 = vmatpush1.bf16.msra.mxu0 0
    %695 = vmatprep.subr.bf16.mxu0 0
    %696 = vmatpush1.bf16.msra.mxu0 0
    %697 = vmatprep.subr.bf16.mxu0 0
    %698 = vmatpush1.bf16.msra.mxu0 0
    %699 = vmatprep.subr.bf16.mxu0 0
    %700 = vmatpush1.bf16.msra.mxu0 0
    %701 = vmatprep.mubr.bf16.mxu0 0
    %702 = vmatmul.mubr.bf16.gmra.mrb[0].mxu0 %v667
    %v703 = vpop.f32.mrb[0].mxu0
    %v704 = vadd.f32 0.0, %v703
    %v705 = vpop.f32.mrb[0].mxu0
    %v706 = vpop.f32.mrb[0].mxu0
    %v707 = vadd.f32 0.0, %v706
    %v708 = vpop.f32.mrb[0].mxu0
    %709 = vdwg.mxu0
    %v714 = vunpack.c.l.b16 %v637
    %v715 = vunpack.c.l.b16 %v638
    %v716 = vunpack.c.l.b16 %v639
    %v717 = vunpack.c.l.b16 %v640
    %v718 = vpack.c.b16 %v715, %v714
    %v719 = vpack.c.b16 %v717, %v716
    %v723 = vsel %vm204, %v636, 0
    %725 = vmatprep.subr.bf16.mxu0 0
    %726 = vmatpush1.bf16.msra.mxu0 %v718
    %727 = vmatprep.subr.bf16.mxu0 0
    %728 = vmatpush1.bf16.msra.mxu0 %v719
    %729 = vmatprep.subr.bf16.mxu0 0
    %730 = vmatpush1.bf16.msra.mxu0 0
    %731 = vmatprep.subr.bf16.mxu0 0
    %732 = vmatpush1.bf16.msra.mxu0 0
    %733 = vmatprep.subr.bf16.mxu0 0
    %734 = vmatpush1.bf16.msra.mxu0 0
    %735 = vmatprep.subr.bf16.mxu0 0
    %736 = vmatpush1.bf16.msra.mxu0 0
    %737 = vmatprep.subr.bf16.mxu0 0
    %738 = vmatpush1.bf16.msra.mxu0 0
    %739 = vmatprep.subr.bf16.mxu0 0
    %740 = vmatpush1.bf16.msra.mxu0 0
    %741 = vmatprep.subr.bf16.mxu0 0
    %742 = vmatpush1.bf16.msra.mxu0 0
    %743 = vmatprep.subr.bf16.mxu0 0
    %744 = vmatpush1.bf16.msra.mxu0 0
    %745 = vmatprep.subr.bf16.mxu0 0
    %746 = vmatpush1.bf16.msra.mxu0 0
    %747 = vmatprep.subr.bf16.mxu0 0
    %748 = vmatpush1.bf16.msra.mxu0 0
    %749 = vmatprep.subr.bf16.mxu0 0
    %750 = vmatpush1.bf16.msra.mxu0 0
    %751 = vmatprep.subr.bf16.mxu0 0
    %752 = vmatpush1.bf16.msra.mxu0 0
    %753 = vmatprep.subr.bf16.mxu0 0
    %754 = vmatpush1.bf16.msra.mxu0 0
    %755 = vmatprep.subr.bf16.mxu0 0
    %756 = vmatpush1.bf16.msra.mxu0 0
    %757 = vmatprep.mubr.bf16.mxu0 0
    %758 = vmatmul.mubr.bf16.gmra.mrb[0].mxu0 %v723
    %v759 = vpop.f32.mrb[0].mxu0
    %v760 = vadd.f32 %v704, %v759
    %v761 = vpop.f32.mrb[0].mxu0
    %v762 = vpop.f32.mrb[0].mxu0
    %v763 = vadd.f32 %v707, %v762
    %v764 = vpop.f32.mrb[0].mxu0
    %765 = vdwg.mxu0
    %v766 = vrot.slane %v627, 6
    %v767 = vrot.slane %v628, 6
    %vm768 = vcmp.lt.s32.totalorder %v80, 2
    %v769 = vsel %vm768, %v766, %v767
    %v770 = vsel %vm768, %v767, %v766
    %v771 = vmul.f32 %v770, %v118
    %v772 = vmul.f32 %v769, %v119
    %v773 = vpack.c.bf16 %v772, %v771
    %s774 = scalar_lea.vmem [#allocation2], 32
    %v775 = vld [vmem:[%s774] sm:$0xf]
    %v776 = vld [vmem:[%s774 + $0x4] sm:$0xf]
    %v777 = vld [vmem:[%s774 + $0x8] sm:$0xf]
    %v778 = vld [vmem:[%s774 + $0xc] sm:$0xf]
    %v783 = vunpack.c.l.b16 %v775
    %v784 = vunpack.c.l.b16 %v776
    %v785 = vunpack.c.l.b16 %v777
    %v786 = vunpack.c.l.b16 %v778
    %v787 = vpack.c.b16 %v784, %v783
    %v788 = vpack.c.b16 %v786, %v785
    %v792 = vsel %vm204, %v773, 0
    %794 = vmatprep.subr.bf16.mxu0 0
    %795 = vmatpush1.bf16.msra.mxu0 %v787
    %796 = vmatprep.subr.bf16.mxu0 0
    %797 = vmatpush1.bf16.msra.mxu0 %v788
    %798 = vmatprep.subr.bf16.mxu0 0
    %799 = vmatpush1.bf16.msra.mxu0 0
    %800 = vmatprep.subr.bf16.mxu0 0
    %801 = vmatpush1.bf16.msra.mxu0 0
    %802 = vmatprep.subr.bf16.mxu0 0
    %803 = vmatpush1.bf16.msra.mxu0 0
    %804 = vmatprep.subr.bf16.mxu0 0
    %805 = vmatpush1.bf16.msra.mxu0 0
    %806 = vmatprep.subr.bf16.mxu0 0
    %807 = vmatpush1.bf16.msra.mxu0 0
    %808 = vmatprep.subr.bf16.mxu0 0
    %809 = vmatpush1.bf16.msra.mxu0 0
    %810 = vmatprep.subr.bf16.mxu0 0
    %811 = vmatpush1.bf16.msra.mxu0 0
    %812 = vmatprep.subr.bf16.mxu0 0
    %813 = vmatpush1.bf16.msra.mxu0 0
    %814 = vmatprep.subr.bf16.mxu0 0
    %815 = vmatpush1.bf16.msra.mxu0 0
    %816 = vmatprep.subr.bf16.mxu0 0
    %817 = vmatpush1.bf16.msra.mxu0 0
    %818 = vmatprep.subr.bf16.mxu0 0
    %819 = vmatpush1.bf16.msra.mxu0 0
    %820 = vmatprep.subr.bf16.mxu0 0
    %821 = vmatpush1.bf16.msra.mxu0 0
    %822 = vmatprep.subr.bf16.mxu0 0
    %823 = vmatpush1.bf16.msra.mxu0 0
    %824 = vmatprep.subr.bf16.mxu0 0
    %825 = vmatpush1.bf16.msra.mxu0 0
    %826 = vmatprep.mubr.bf16.mxu0 0
    %827 = vmatmul.mubr.bf16.gmra.mrb[0].mxu0 %v792
    %v828 = vpop.f32.mrb[0].mxu0
    %v829 = vadd.f32 0.0, %v828
    %v830 = vpop.f32.mrb[0].mxu0
    %v831 = vpop.f32.mrb[0].mxu0
    %v832 = vadd.f32 0.0, %v831
    %v833 = vpop.f32.mrb[0].mxu0
    %834 = vdwg.mxu0
    %v835 = vadd.f32 %v760, %v829
    %v836 = vadd.f32 %v763, %v832
    %v837 = vrot.slane %v627, 7
    %v838 = vrot.slane %v628, 7
    %vm839 = vcmp.lt.s32.totalorder %v80, 1
    %v840 = vsel %vm839, %v837, %v838
    %v841 = vsel %vm839, %v838, %v837
    %v842 = vmul.f32 %v841, %v130
    %v843 = vmul.f32 %v840, %v131
    %v844 = vpack.c.bf16 %v843, %v842
    %s845 = scalar_lea.vmem [#allocation2], 48
    %v846 = vld [vmem:[%s845] sm:$0xf]
    %v847 = vld [vmem:[%s845 + $0x4] sm:$0xf]
    %v848 = vld [vmem:[%s845 + $0x8] sm:$0xf]
    %v849 = vld [vmem:[%s845 + $0xc] sm:$0xf]
    %v854 = vunpack.c.l.b16 %v846
    %v855 = vunpack.c.l.b16 %v847
    %v856 = vunpack.c.l.b16 %v848
    %v857 = vunpack.c.l.b16 %v849
    %v858 = vpack.c.b16 %v855, %v854
    %v859 = vpack.c.b16 %v857, %v856
    %v863 = vsel %vm204, %v844, 0
    %865 = vmatprep.subr.bf16.mxu0 0
    %866 = vmatpush1.bf16.msra.mxu0 %v858
    %867 = vmatprep.subr.bf16.mxu0 0
    %868 = vmatpush1.bf16.msra.mxu0 %v859
    %869 = vmatprep.subr.bf16.mxu0 0
    %870 = vmatpush1.bf16.msra.mxu0 0
    %871 = vmatprep.subr.bf16.mxu0 0
    %872 = vmatpush1.bf16.msra.mxu0 0
    %873 = vmatprep.subr.bf16.mxu0 0
    %874 = vmatpush1.bf16.msra.mxu0 0
    %875 = vmatprep.subr.bf16.mxu0 0
    %876 = vmatpush1.bf16.msra.mxu0 0
    %877 = vmatprep.subr.bf16.mxu0 0
    %878 = vmatpush1.bf16.msra.mxu0 0
    %879 = vmatprep.subr.bf16.mxu0 0
    %880 = vmatpush1.bf16.msra.mxu0 0
    %881 = vmatprep.subr.bf16.mxu0 0
    %882 = vmatpush1.bf16.msra.mxu0 0
    %883 = vmatprep.subr.bf16.mxu0 0
    %884 = vmatpush1.bf16.msra.mxu0 0
    %885 = vmatprep.subr.bf16.mxu0 0
    %886 = vmatpush1.bf16.msra.mxu0 0
    %887 = vmatprep.subr.bf16.mxu0 0
    %888 = vmatpush1.bf16.msra.mxu0 0
    %889 = vmatprep.subr.bf16.mxu0 0
    %890 = vmatpush1.bf16.msra.mxu0 0
    %891 = vmatprep.subr.bf16.mxu0 0
    %892 = vmatpush1.bf16.msra.mxu0 0
    %893 = vmatprep.subr.bf16.mxu0 0
    %894 = vmatpush1.bf16.msra.mxu0 0
    %895 = vmatprep.subr.bf16.mxu0 0
    %896 = vmatpush1.bf16.msra.mxu0 0
    %897 = vmatprep.mubr.bf16.mxu0 0
    %898 = vmatmul.mubr.bf16.gmra.mrb[0].mxu0 %v863
    %v899 = vpop.f32.mrb[0].mxu0
    %v900 = vadd.f32 0.0, %v899
    %v901 = vpop.f32.mrb[0].mxu0
    %v902 = vpop.f32.mrb[0].mxu0
    %v903 = vadd.f32 0.0, %v902
    %v904 = vpop.f32.mrb[0].mxu0
    %905 = vdwg.mxu0
    %v906 = vadd.f32 %v835, %v900
    %v907 = vadd.f32 %v836, %v903
    %v908 = vpack.c.bf16 %v628, %v627
    %s909 = scalar_lea.vmem [#allocation2], 64
    %v910 = vld [vmem:[%s909] sm:$0xf]
    %v911 = vld [vmem:[%s909 + $0x4] sm:$0xf]
    %v912 = vld [vmem:[%s909 + $0x8] sm:$0xf]
    %v913 = vld [vmem:[%s909 + $0xc] sm:$0xf]
    %v918 = vunpack.c.l.b16 %v910
    %v919 = vunpack.c.l.b16 %v911
    %v920 = vunpack.c.l.b16 %v912
    %v921 = vunpack.c.l.b16 %v913
    %v922 = vpack.c.b16 %v919, %v918
    %v923 = vpack.c.b16 %v921, %v920
    %v927 = vsel %vm204, %v908, 0
    %929 = vmatprep.subr.bf16.mxu0 0
    %930 = vmatpush1.bf16.msra.mxu0 %v922
    %931 = vmatprep.subr.bf16.mxu0 0
    %932 = vmatpush1.bf16.msra.mxu0 %v923
    %933 = vmatprep.subr.bf16.mxu0 0
    %934 = vmatpush1.bf16.msra.mxu0 0
    %935 = vmatprep.subr.bf16.mxu0 0
    %936 = vmatpush1.bf16.msra.mxu0 0
    %937 = vmatprep.subr.bf16.mxu0 0
    %938 = vmatpush1.bf16.msra.mxu0 0
    %939 = vmatprep.subr.bf16.mxu0 0
    %940 = vmatpush1.bf16.msra.mxu0 0
    %941 = vmatprep.subr.bf16.mxu0 0
    %942 = vmatpush1.bf16.msra.mxu0 0
    %943 = vmatprep.subr.bf16.mxu0 0
    %944 = vmatpush1.bf16.msra.mxu0 0
    %945 = vmatprep.subr.bf16.mxu0 0
    %946 = vmatpush1.bf16.msra.mxu0 0
    %947 = vmatprep.subr.bf16.mxu0 0
    %948 = vmatpush1.bf16.msra.mxu0 0
    %949 = vmatprep.subr.bf16.mxu0 0
    %950 = vmatpush1.bf16.msra.mxu0 0
    %951 = vmatprep.subr.bf16.mxu0 0
    %952 = vmatpush1.bf16.msra.mxu0 0
    %953 = vmatprep.subr.bf16.mxu0 0
    %954 = vmatpush1.bf16.msra.mxu0 0
    %955 = vmatprep.subr.bf16.mxu0 0
    %956 = vmatpush1.bf16.msra.mxu0 0
    %957 = vmatprep.subr.bf16.mxu0 0
    %958 = vmatpush1.bf16.msra.mxu0 0
    %959 = vmatprep.subr.bf16.mxu0 0
    %960 = vmatpush1.bf16.msra.mxu0 0
    %961 = vmatprep.mubr.bf16.mxu0 0
    %962 = vmatmul.mubr.bf16.gmra.mrb[0].mxu0 %v927
    %v963 = vpop.f32.mrb[0].mxu0
    %v964 = vadd.f32 0.0, %v963
    %v965 = vpop.f32.mrb[0].mxu0
    %v966 = vpop.f32.mrb[0].mxu0
    %v967 = vadd.f32 0.0, %v966
    %v968 = vpop.f32.mrb[0].mxu0
    %969 = vdwg.mxu0
    %v970 = vadd.f32 %v906, %v964
    %v971 = vadd.f32 %v907, %v967
    %v972 = vrot.slane %v627, 1
    %v973 = vrot.slane %v628, 1
    %vm974 = vcmp.lt.s32.totalorder %v80, 7
    %v975 = vsel %vm974, %v972, %v973
    %v976 = vsel %vm974, %v973, %v972
    %v977 = vmul.f32 %v975, %v142
    %v978 = vmul.f32 %v976, %v143
    %v979 = vpack.c.bf16 %v978, %v977
    %s980 = scalar_lea.vmem [#allocation2], 80
    %v981 = vld [vmem:[%s980] sm:$0xf]
    %v982 = vld [vmem:[%s980 + $0x4] sm:$0xf]
    %v983 = vld [vmem:[%s980 + $0x8] sm:$0xf]
    %v984 = vld [vmem:[%s980 + $0xc] sm:$0xf]
    %v989 = vunpack.c.l.b16 %v981
    %v990 = vunpack.c.l.b16 %v982
    %v991 = vunpack.c.l.b16 %v983
    %v992 = vunpack.c.l.b16 %v984
    %v993 = vpack.c.b16 %v990, %v989
    %v994 = vpack.c.b16 %v992, %v991
    %v998 = vsel %vm204, %v979, 0
    %1000 = vmatprep.subr.bf16.mxu0 0
    %1001 = vmatpush1.bf16.msra.mxu0 %v993
    %1002 = vmatprep.subr.bf16.mxu0 0
    %1003 = vmatpush1.bf16.msra.mxu0 %v994
    %1004 = vmatprep.subr.bf16.mxu0 0
    %1005 = vmatpush1.bf16.msra.mxu0 0
    %1006 = vmatprep.subr.bf16.mxu0 0
    %1007 = vmatpush1.bf16.msra.mxu0 0
    %1008 = vmatprep.subr.bf16.mxu0 0
    %1009 = vmatpush1.bf16.msra.mxu0 0
    %1010 = vmatprep.subr.bf16.mxu0 0
    %1011 = vmatpush1.bf16.msra.mxu0 0
    %1012 = vmatprep.subr.bf16.mxu0 0
    %1013 = vmatpush1.bf16.msra.mxu0 0
    %1014 = vmatprep.subr.bf16.mxu0 0
    %1015 = vmatpush1.bf16.msra.mxu0 0
    %1016 = vmatprep.subr.bf16.mxu0 0
    %1017 = vmatpush1.bf16.msra.mxu0 0
    %1018 = vmatprep.subr.bf16.mxu0 0
    %1019 = vmatpush1.bf16.msra.mxu0 0
    %1020 = vmatprep.subr.bf16.mxu0 0
    %1021 = vmatpush1.bf16.msra.mxu0 0
    %1022 = vmatprep.subr.bf16.mxu0 0
    %1023 = vmatpush1.bf16.msra.mxu0 0
    %1024 = vmatprep.subr.bf16.mxu0 0
    %1025 = vmatpush1.bf16.msra.mxu0 0
    %1026 = vmatprep.subr.bf16.mxu0 0
    %1027 = vmatpush1.bf16.msra.mxu0 0
    %1028 = vmatprep.subr.bf16.mxu0 0
    %1029 = vmatpush1.bf16.msra.mxu0 0
    %1030 = vmatprep.subr.bf16.mxu0 0
    %1031 = vmatpush1.bf16.msra.mxu0 0
    %1032 = vmatprep.mubr.bf16.mxu0 0
    %1033 = vmatmul.mubr.bf16.gmra.mrb[0].mxu0 %v998
    %v1034 = vpop.f32.mrb[0].mxu0
    %v1035 = vadd.f32 0.0, %v1034
    %v1036 = vpop.f32.mrb[0].mxu0
    %v1037 = vpop.f32.mrb[0].mxu0
    %v1038 = vadd.f32 0.0, %v1037
    %v1039 = vpop.f32.mrb[0].mxu0
    %1040 = vdwg.mxu0
    %v1041 = vadd.f32 %v970, %v1035
    %v1042 = vadd.f32 %v971, %v1038
    %v1043 = vrot.slane %v627, 2
    %v1044 = vrot.slane %v628, 2
    %vm1045 = vcmp.lt.s32.totalorder %v80, 6
    %v1046 = vsel %vm1045, %v1043, %v1044
    %v1047 = vsel %vm1045, %v1044, %v1043
    %v1048 = vmul.f32 %v1046, %v154
    %v1049 = vmul.f32 %v1047, %v155
    %v1050 = vpack.c.bf16 %v1049, %v1048
    %s1051 = scalar_lea.vmem [#allocation2], 96
    %v1052 = vld [vmem:[%s1051] sm:$0xf]
    %v1053 = vld [vmem:[%s1051 + $0x4] sm:$0xf]
    %v1054 = vld [vmem:[%s1051 + $0x8] sm:$0xf]
    %v1055 = vld [vmem:[%s1051 + $0xc] sm:$0xf]
    %v1060 = vunpack.c.l.b16 %v1052
    %v1061 = vunpack.c.l.b16 %v1053
    %v1062 = vunpack.c.l.b16 %v1054
    %v1063 = vunpack.c.l.b16 %v1055
    %v1064 = vpack.c.b16 %v1061, %v1060
    %v1065 = vpack.c.b16 %v1063, %v1062
    %v1069 = vsel %vm204, %v1050, 0
    %1071 = vmatprep.subr.bf16.mxu0 0
    %1072 = vmatpush1.bf16.msra.mxu0 %v1064
    %1073 = vmatprep.subr.bf16.mxu0 0
    %1074 = vmatpush1.bf16.msra.mxu0 %v1065
    %1075 = vmatprep.subr.bf16.mxu0 0
    %1076 = vmatpush1.bf16.msra.mxu0 0
    %1077 = vmatprep.subr.bf16.mxu0 0
    %1078 = vmatpush1.bf16.msra.mxu0 0
    %1079 = vmatprep.subr.bf16.mxu0 0
    %1080 = vmatpush1.bf16.msra.mxu0 0
    %1081 = vmatprep.subr.bf16.mxu0 0
    %1082 = vmatpush1.bf16.msra.mxu0 0
    %1083 = vmatprep.subr.bf16.mxu0 0
    %1084 = vmatpush1.bf16.msra.mxu0 0
    %1085 = vmatprep.subr.bf16.mxu0 0
    %1086 = vmatpush1.bf16.msra.mxu0 0
    %1087 = vmatprep.subr.bf16.mxu0 0
    %1088 = vmatpush1.bf16.msra.mxu0 0
    %1089 = vmatprep.subr.bf16.mxu0 0
    %1090 = vmatpush1.bf16.msra.mxu0 0
    %1091 = vmatprep.subr.bf16.mxu0 0
    %1092 = vmatpush1.bf16.msra.mxu0 0
    %1093 = vmatprep.subr.bf16.mxu0 0
    %1094 = vmatpush1.bf16.msra.mxu0 0
    %1095 = vmatprep.subr.bf16.mxu0 0
    %1096 = vmatpush1.bf16.msra.mxu0 0
    %1097 = vmatprep.subr.bf16.mxu0 0
    %1098 = vmatpush1.bf16.msra.mxu0 0
    %1099 = vmatprep.subr.bf16.mxu0 0
    %1100 = vmatpush1.bf16.msra.mxu0 0
    %1101 = vmatprep.subr.bf16.mxu0 0
    %1102 = vmatpush1.bf16.msra.mxu0 0
    %1103 = vmatprep.mubr.bf16.mxu0 0
    %1104 = vmatmul.mubr.bf16.gmra.mrb[0].mxu0 %v1069
    %v1105 = vpop.f32.mrb[0].mxu0
    %v1106 = vadd.f32 0.0, %v1105
    %v1107 = vpop.f32.mrb[0].mxu0
    %v1108 = vpop.f32.mrb[0].mxu0
    %v1109 = vadd.f32 0.0, %v1108
    %v1110 = vpop.f32.mrb[0].mxu0
    %1111 = vdwg.mxu0
    %v1112 = vadd.f32 %v1041, %v1106
    %v1113 = vadd.f32 %v1042, %v1109
    %v1114 = vrot.slane %v627, 3
    %v1115 = vrot.slane %v628, 3
    %vm1116 = vcmp.lt.s32.totalorder %v80, 5
    %v1117 = vsel %vm1116, %v1114, %v1115
    %v1118 = vsel %vm1116, %v1115, %v1114
    %v1119 = vmul.f32 %v1117, %v166
    %v1120 = vmul.f32 %v1118, %v167
    %v1121 = vpack.c.bf16 %v1120, %v1119
    %s1122 = scalar_lea.vmem [#allocation2], 112
    %v1123 = vld [vmem:[%s1122] sm:$0xf]
    %v1124 = vld [vmem:[%s1122 + $0x4] sm:$0xf]
    %v1125 = vld [vmem:[%s1122 + $0x8] sm:$0xf]
    %v1126 = vld [vmem:[%s1122 + $0xc] sm:$0xf]
    %v1131 = vunpack.c.l.b16 %v1123
    %v1132 = vunpack.c.l.b16 %v1124
    %v1133 = vunpack.c.l.b16 %v1125
    %v1134 = vunpack.c.l.b16 %v1126
    %v1135 = vpack.c.b16 %v1132, %v1131
    %v1136 = vpack.c.b16 %v1134, %v1133
    %v1140 = vsel %vm204, %v1121, 0
    %1142 = vmatprep.subr.bf16.mxu0 0
    %1143 = vmatpush1.bf16.msra.mxu0 %v1135
    %1144 = vmatprep.subr.bf16.mxu0 0
    %1145 = vmatpush1.bf16.msra.mxu0 %v1136
    %1146 = vmatprep.subr.bf16.mxu0 0
    %1147 = vmatpush1.bf16.msra.mxu0 0
    %1148 = vmatprep.subr.bf16.mxu0 0
    %1149 = vmatpush1.bf16.msra.mxu0 0
    %1150 = vmatprep.subr.bf16.mxu0 0
    %1151 = vmatpush1.bf16.msra.mxu0 0
    %1152 = vmatprep.subr.bf16.mxu0 0
    %1153 = vmatpush1.bf16.msra.mxu0 0
    %1154 = vmatprep.subr.bf16.mxu0 0
    %1155 = vmatpush1.bf16.msra.mxu0 0
    %1156 = vmatprep.subr.bf16.mxu0 0
    %1157 = vmatpush1.bf16.msra.mxu0 0
    %1158 = vmatprep.subr.bf16.mxu0 0
    %1159 = vmatpush1.bf16.msra.mxu0 0
    %1160 = vmatprep.subr.bf16.mxu0 0
    %1161 = vmatpush1.bf16.msra.mxu0 0
    %1162 = vmatprep.subr.bf16.mxu0 0
    %1163 = vmatpush1.bf16.msra.mxu0 0
    %1164 = vmatprep.subr.bf16.mxu0 0
    %1165 = vmatpush1.bf16.msra.mxu0 0
    %1166 = vmatprep.subr.bf16.mxu0 0
    %1167 = vmatpush1.bf16.msra.mxu0 0
    %1168 = vmatprep.subr.bf16.mxu0 0
    %1169 = vmatpush1.bf16.msra.mxu0 0
    %1170 = vmatprep.subr.bf16.mxu0 0
    %1171 = vmatpush1.bf16.msra.mxu0 0
    %1172 = vmatprep.subr.bf16.mxu0 0
    %1173 = vmatpush1.bf16.msra.mxu0 0
    %1174 = vmatprep.mubr.bf16.mxu0 0
    %1175 = vmatmul.mubr.bf16.gmra.mrb[0].mxu0 %v1140
    %v1176 = vpop.f32.mrb[0].mxu0
    %v1177 = vadd.f32 0.0, %v1176
    %v1178 = vpop.f32.mrb[0].mxu0
    %v1179 = vpop.f32.mrb[0].mxu0
    %v1180 = vadd.f32 0.0, %v1179
    %v1181 = vpop.f32.mrb[0].mxu0
    %1182 = vdwg.mxu0
    %v1183 = vadd.f32 %v1112, %v1177
    %v1184 = vadd.f32 %v1113, %v1180
    %v1185 = vmul.f32 %v632, %v178
    %v1186 = vmul.f32 %v633, %v179
    %v1187 = vpack.c.bf16 %v1186, %v1185
    %s1188 = scalar_lea.vmem [#allocation2], 128
    %v1189 = vld [vmem:[%s1188] sm:$0xf]
    %v1190 = vld [vmem:[%s1188 + $0x4] sm:$0xf]
    %v1191 = vld [vmem:[%s1188 + $0x8] sm:$0xf]
    %v1192 = vld [vmem:[%s1188 + $0xc] sm:$0xf]
    %v1197 = vunpack.c.l.b16 %v1189
    %v1198 = vunpack.c.l.b16 %v1190
    %v1199 = vunpack.c.l.b16 %v1191
    %v1200 = vunpack.c.l.b16 %v1192
    %v1201 = vpack.c.b16 %v1198, %v1197
    %v1202 = vpack.c.b16 %v1200, %v1199
    %v1206 = vsel %vm204, %v1187, 0
    %1208 = vmatprep.subr.bf16.mxu0 0
    %1209 = vmatpush1.bf16.msra.mxu0 %v1201
    %1210 = vmatprep.subr.bf16.mxu0 0
    %1211 = vmatpush1.bf16.msra.mxu0 %v1202
    %1212 = vmatprep.subr.bf16.mxu0 0
    %1213 = vmatpush1.bf16.msra.mxu0 0
    %1214 = vmatprep.subr.bf16.mxu0 0
    %1215 = vmatpush1.bf16.msra.mxu0 0
    %1216 = vmatprep.subr.bf16.mxu0 0
    %1217 = vmatpush1.bf16.msra.mxu0 0
    %1218 = vmatprep.subr.bf16.mxu0 0
    %1219 = vmatpush1.bf16.msra.mxu0 0
    %1220 = vmatprep.subr.bf16.mxu0 0
    %1221 = vmatpush1.bf16.msra.mxu0 0
    %1222 = vmatprep.subr.bf16.mxu0 0
    %1223 = vmatpush1.bf16.msra.mxu0 0
    %1224 = vmatprep.subr.bf16.mxu0 0
    %1225 = vmatpush1.bf16.msra.mxu0 0
    %1226 = vmatprep.subr.bf16.mxu0 0
    %1227 = vmatpush1.bf16.msra.mxu0 0
    %1228 = vmatprep.subr.bf16.mxu0 0
    %1229 = vmatpush1.bf16.msra.mxu0 0
    %1230 = vmatprep.subr.bf16.mxu0 0
    %1231 = vmatpush1.bf16.msra.mxu0 0
    %1232 = vmatprep.subr.bf16.mxu0 0
    %1233 = vmatpush1.bf16.msra.mxu0 0
    %1234 = vmatprep.subr.bf16.mxu0 0
    %1235 = vmatpush1.bf16.msra.mxu0 0
    %1236 = vmatprep.subr.bf16.mxu0 0
    %1237 = vmatpush1.bf16.msra.mxu0 0
    %1238 = vmatprep.subr.bf16.mxu0 0
    %1239 = vmatpush1.bf16.msra.mxu0 0
    %1240 = vmatprep.mubr.bf16.mxu0 0
    %1241 = vmatmul.mubr.bf16.gmra.mrb[0].mxu0 %v1206
    %v1242 = vpop.f32.mrb[0].mxu0
    %v1243 = vadd.f32 0.0, %v1242
    %v1244 = vpop.f32.mrb[0].mxu0
    %v1245 = vpop.f32.mrb[0].mxu0
    %v1246 = vadd.f32 0.0, %v1245
    %v1247 = vpop.f32.mrb[0].mxu0
    %1248 = vdwg.mxu0
    %v1249 = vadd.f32 %v1183, %v1243
    %v1250 = vadd.f32 %v1184, %v1246
    %v1251 = vld [vmem:[%s11] sm:$0x1]
    %v1253 = vlaneseq
    %v1254 = vshrl.u32 %v1253, 7
    %v1255 = vsub.s32 0, %v1254
    %v1256 = vrot.slane %v1251, %v1255
    %v1258 = vadd.f32 %v1249, %v1256
    %v1259 = vadd.f32 %v1250, %v1256
    %v1260 = vmax.f32 %v1258, 0.0
    %v1261 = vmax.f32 %v1259, 0.0
    %v1262 = vpack.c.bf16 %v1261, %v1260
    %v1263 = vld [vmem:[%s12] sm:$0xf]
    %v1264 = vld [vmem:[%s12 + $0x4] sm:$0xf]
    %v1265 = vld [vmem:[%s12 + $0x8] sm:$0xf]
    %v1266 = vld [vmem:[%s12 + $0xc] sm:$0xf]
    %v1267 = vld [vmem:[%s12 + $0x10] sm:$0xf]
    %v1268 = vld [vmem:[%s12 + $0x14] sm:$0xf]
    %v1269 = vld [vmem:[%s12 + $0x18] sm:$0xf]
    %v1270 = vld [vmem:[%s12 + $0x1c] sm:$0xf]
    %v1271 = vld [vmem:[%s13] sm:$0x1]
    %v1273 = vlaneseq
    %v1274 = vshrl.u32 %v1273, 7
    %v1275 = vsub.s32 0, %v1274
    %v1276 = vrot.slane %v1271, %v1275
    %v1286 = vunpack.c.l.b16 %v1263
    %v1287 = vunpack.c.l.b16 %v1264
    %v1288 = vunpack.c.l.b16 %v1265
    %v1289 = vunpack.c.l.b16 %v1266
    %v1290 = vunpack.c.l.b16 %v1267
    %v1291 = vunpack.c.l.b16 %v1268
    %v1292 = vunpack.c.l.b16 %v1269
    %v1293 = vunpack.c.l.b16 %v1270
    %v1294 = vpack.c.b16 %v1287, %v1286
    %v1295 = vpack.c.b16 %v1289, %v1288
    %v1296 = vpack.c.b16 %v1291, %v1290
    %v1297 = vpack.c.b16 %v1293, %v1292
    %vm1302 = vcmask 523264
    %v1304 = vsel %vm1302, %v1262, 0
    %1306 = vmatprep.subr.bf16.mxu0 0
    %1307 = vmatpush1.bf16.msra.mxu0 %v1294
    %1308 = vmatprep.subr.bf16.mxu0 0
    %1309 = vmatpush1.bf16.msra.mxu0 %v1295
    %1310 = vmatprep.subr.bf16.mxu0 0
    %1311 = vmatpush1.bf16.msra.mxu0 %v1296
    %1312 = vmatprep.subr.bf16.mxu0 0
    %1313 = vmatpush1.bf16.msra.mxu0 %v1297
    %1314 = vmatprep.subr.bf16.mxu0 0
    %1315 = vmatpush1.bf16.msra.mxu0 0
    %1316 = vmatprep.subr.bf16.mxu0 0
    %1317 = vmatpush1.bf16.msra.mxu0 0
    %1318 = vmatprep.subr.bf16.mxu0 0
    %1319 = vmatpush1.bf16.msra.mxu0 0
    %1320 = vmatprep.subr.bf16.mxu0 0
    %1321 = vmatpush1.bf16.msra.mxu0 0
    %1322 = vmatprep.subr.bf16.mxu0 0
    %1323 = vmatpush1.bf16.msra.mxu0 0
    %1324 = vmatprep.subr.bf16.mxu0 0
    %1325 = vmatpush1.bf16.msra.mxu0 0
    %1326 = vmatprep.subr.bf16.mxu0 0
    %1327 = vmatpush1.bf16.msra.mxu0 0
    %1328 = vmatprep.subr.bf16.mxu0 0
    %1329 = vmatpush1.bf16.msra.mxu0 0
    %1330 = vmatprep.subr.bf16.mxu0 0
    %1331 = vmatpush1.bf16.msra.mxu0 0
    %1332 = vmatprep.subr.bf16.mxu0 0
    %1333 = vmatpush1.bf16.msra.mxu0 0
    %1334 = vmatprep.subr.bf16.mxu0 0
    %1335 = vmatpush1.bf16.msra.mxu0 0
    %1336 = vmatprep.subr.bf16.mxu0 0
    %1337 = vmatpush1.bf16.msra.mxu0 0
    %1338 = vmatprep.mubr.bf16.mxu0 0
    %1339 = vmatmul.mubr.bf16.gmra.mrb[0].mxu0 %v1304
    %v1340 = vpop.f32.mrb[0].mxu0
    %v1341 = vadd.f32 %v1276, %v1340
    %v1342 = vpop.f32.mrb[0].mxu0
    %v1343 = vpop.f32.mrb[0].mxu0
    %v1344 = vadd.f32 %v1276, %v1343
    %v1345 = vpop.f32.mrb[0].mxu0
    %1346 = vdwg.mxu0
    %v1347 = vadd.f32 %v1341, %v627
    %v1348 = vadd.f32 %v1344, %v628
    %v1349 = vsel %vm204, %v1347, 0.0
    %1350 = vadd.xlane.f32.xlu0 %v1349
    %v1351 = vpop.xlane.xlu0 %1350
    %v1352 = vsel %vm204, %v1348, 0.0
    %1353 = vadd.xlane.f32.xlu0 %v1352
    %v1354 = vpop.xlane.xlu0 %1353
    %v1355 = vmul.f32 %v1351, %v578
    %v1356 = vmul.f32 %v1354, %v578
    %v1357 = vsub.f32 %v1347, %v1355
    %v1358 = vsub.f32 %v1348, %v1356
    %v1359 = vmul.f32 %v1357, %v1357
    %v1360 = vmul.f32 %v1358, %v1358
    %v1361 = vsel %vm204, %v1359, 0.0
    %1362 = vadd.xlane.f32.xlu0 %v1361
    %v1363 = vpop.xlane.xlu0 %1362
    %v1364 = vsel %vm204, %v1360, 0.0
    %1365 = vadd.xlane.f32.xlu0 %v1364
    %v1366 = vpop.xlane.xlu0 %1365
    %v1367 = vmul.f32 %v1363, %v578
    %v1368 = vmul.f32 %v1366, %v578
    %v1369 = vadd.f32 %v1367, 1e-05
    %v1370 = vadd.f32 %v1368, 1e-05
    %v1371 = vrsqrt.pop %v1369
    %v1372 = vrsqrt.pop %v1370
    %v1373 = vmul.f32 %v1357, %v1371
    %v1374 = vmul.f32 %v1358, %v1372
    %v1375 = vld [vmem:[%s14] sm:$0x1]
    %v1377 = vlaneseq
    %v1378 = vshrl.u32 %v1377, 7
    %v1379 = vsub.s32 0, %v1378
    %v1380 = vrot.slane %v1375, %v1379
    %v1382 = vmul.f32 %v1373, %v1380
    %v1383 = vmul.f32 %v1374, %v1380
    %v1384 = vld [vmem:[%s15] sm:$0x1]
    %v1386 = vlaneseq
    %v1387 = vshrl.u32 %v1386, 7
    %v1388 = vsub.s32 0, %v1387
    %v1389 = vrot.slane %v1384, %v1388
    %v1391 = vadd.f32 %v1382, %v1389
    %v1392 = vadd.f32 %v1383, %v1389
    %v1393 = vmul.f32 %v1391, %v620
    %v1394 = vmul.f32 %v1392, %v625
    %v1395 = vpack.c.bf16 %v1394, %v1393
    %s1396 = scalar_lea.vmem %s4, 16
    %v1397 = vld [vmem:[%s1396] sm:$0xf]
    %v1398 = vld [vmem:[%s1396 + $0x4] sm:$0xf]
    %v1399 = vld [vmem:[%s1396 + $0x8] sm:$0xf]
    %v1400 = vld [vmem:[%s1396 + $0xc] sm:$0xf]
    %s1401 = scalar_lea.vmem %s5, 1
    %v1402 = vld [vmem:[%s1401] sm:$0x1]
    %v1404 = vlaneseq
    %v1405 = vshrl.u32 %v1404, 7
    %v1406 = vsub.s32 0, %v1405
    %v1407 = vrot.slane %v1402, %v1406
    %v1413 = vunpack.c.l.b16 %v1397
    %v1414 = vunpack.c.l.b16 %v1398
    %v1415 = vunpack.c.l.b16 %v1399
    %v1416 = vunpack.c.l.b16 %v1400
    %v1417 = vpack.c.b16 %v1414, %v1413
    %v1418 = vpack.c.b16 %v1416, %v1415
    %v1422 = vsel %vm204, %v1395, 0
    %1424 = vmatprep.subr.bf16.mxu0 0
    %1425 = vmatpush1.bf16.msra.mxu0 %v1417
    %1426 = vmatprep.subr.bf16.mxu0 0
    %1427 = vmatpush1.bf16.msra.mxu0 %v1418
    %1428 = vmatprep.subr.bf16.mxu0 0
    %1429 = vmatpush1.bf16.msra.mxu0 0
    %1430 = vmatprep.subr.bf16.mxu0 0
    %1431 = vmatpush1.bf16.msra.mxu0 0
    %1432 = vmatprep.subr.bf16.mxu0 0
    %1433 = vmatpush1.bf16.msra.mxu0 0
    %1434 = vmatprep.subr.bf16.mxu0 0
    %1435 = vmatpush1.bf16.msra.mxu0 0
    %1436 = vmatprep.subr.bf16.mxu0 0
    %1437 = vmatpush1.bf16.msra.mxu0 0
    %1438 = vmatprep.subr.bf16.mxu0 0
    %1439 = vmatpush1.bf16.msra.mxu0 0
    %1440 = vmatprep.subr.bf16.mxu0 0
    %1441 = vmatpush1.bf16.msra.mxu0 0
    %1442 = vmatprep.subr.bf16.mxu0 0
    %1443 = vmatpush1.bf16.msra.mxu0 0
    %1444 = vmatprep.subr.bf16.mxu0 0
    %1445 = vmatpush1.bf16.msra.mxu0 0
    %1446 = vmatprep.subr.bf16.mxu0 0
    %1447 = vmatpush1.bf16.msra.mxu0 0
    %1448 = vmatprep.subr.bf16.mxu0 0
    %1449 = vmatpush1.bf16.msra.mxu0 0
    %1450 = vmatprep.subr.bf16.mxu0 0
    %1451 = vmatpush1.bf16.msra.mxu0 0
    %1452 = vmatprep.subr.bf16.mxu0 0
    %1453 = vmatpush1.bf16.msra.mxu0 0
    %1454 = vmatprep.subr.bf16.mxu0 0
    %1455 = vmatpush1.bf16.msra.mxu0 0
    %1456 = vmatprep.mubr.bf16.mxu0 0
    %1457 = vmatmul.mubr.bf16.gmra.mrb[0].mxu0 %v1422
    %v1458 = vpop.f32.mrb[0].mxu0
    %v1459 = vadd.f32 %v1407, %v1458
    %v1460 = vpop.f32.mrb[0].mxu0
    %v1461 = vpop.f32.mrb[0].mxu0
    %v1462 = vadd.f32 %v1407, %v1461
    %v1463 = vpop.f32.mrb[0].mxu0
    %1464 = vdwg.mxu0
    %v1465 = vpack.c.bf16 %v1462, %v1459
    %1467 = vrot.lane.b32.xlu0 %v1465, 96
    %v1468 = vpop.permute.xlu0 %1467
    %v1470 = vsel %vm253, %v1465, 0
    %v1473 = vsel %vm253, %v1468, 0
    %1475 = vmatprep.subr.bf16.mxu0 0
    %1476 = vmatpush1.bf16.xpose.msra.mxu0 %v1473
    %1477 = vmatprep.subr.bf16.mxu0 0
    %1478 = vmatpush1.bf16.xpose.msra.mxu0 0
    %1479 = vmatprep.subr.bf16.mxu0 0
    %1480 = vmatpush1.bf16.xpose.msra.mxu0 0
    %1481 = vmatprep.subr.bf16.mxu0 0
    %1482 = vmatpush1.bf16.xpose.msra.mxu0 0
    %1483 = vmatprep.subr.bf16.mxu0 0
    %1484 = vmatpush1.bf16.xpose.msra.mxu0 0
    %1485 = vmatprep.subr.bf16.mxu0 0
    %1486 = vmatpush1.bf16.xpose.msra.mxu0 0
    %1487 = vmatprep.subr.bf16.mxu0 0
    %1488 = vmatpush1.bf16.xpose.msra.mxu0 0
    %1489 = vmatprep.subr.bf16.mxu0 0
    %1490 = vmatpush1.bf16.xpose.msra.mxu0 0
    %1491 = vmatprep.subr.bf16.mxu0 0
    %1492 = vmatpush1.bf16.xpose.msra.mxu0 0
    %1493 = vmatprep.subr.bf16.mxu0 0
    %1494 = vmatpush1.bf16.xpose.msra.mxu0 0
    %1495 = vmatprep.subr.bf16.mxu0 0
    %1496 = vmatpush1.bf16.xpose.msra.mxu0 0
    %1497 = vmatprep.subr.bf16.mxu0 0
    %1498 = vmatpush1.bf16.xpose.msra.mxu0 0
    %1499 = vmatprep.subr.bf16.mxu0 0
    %1500 = vmatpush1.bf16.xpose.msra.mxu0 0
    %1501 = vmatprep.subr.bf16.mxu0 0
    %1502 = vmatpush1.bf16.xpose.msra.mxu0 0
    %1503 = vmatprep.subr.bf16.mxu0 0
    %1504 = vmatpush1.bf16.xpose.msra.mxu0 0
    %1505 = vmatprep.subr.bf16.mxu0 0
    %1506 = vmatpush1.bf16.xpose.msra.mxu0 0
    %1507 = vmatprep.mubr.bf16.mxu0 0
    %1508 = vmatmul.mubr.bf16.gmra.mrb[0].mxu0 %v1470
    %v1509 = vpop.f32.mrb[0].mxu0
    %v1510 = vadd.f32 %v77, %v1509
    %v1511 = vpop.f32.mrb[0].mxu0
    %v1512 = vpop.f32.mrb[0].mxu0
    %v1513 = vadd.f32 %v78, %v1512
    %v1514 = vpop.f32.mrb[0].mxu0
    %1515 = vdwg.mxu0
    %v1516 = vsel %vm253, %v1510, -inf
    %1517 = vmax.xlane.f32.xlu0 %v1516
    %v1518 = vpop.xlane.xlu0 %1517
    %v1519 = vsel %vm253, %v1513, -inf
    %1520 = vmax.xlane.f32.xlu0 %v1519
    %v1521 = vpop.xlane.xlu0 %1520
    %v1522 = vsub.f32 %v1510, %v1518
    %v1523 = vsub.f32 %v1513, %v1521
    %v1524 = vmul.f32 %v1522, 1.442695
    %v1525 = vpow.pop %v1524
    %v1526 = vmul.f32 %v1523, 1.442695
    %v1527 = vpow.pop %v1526
    %v1528 = vsel %vm253, %v1525, 0.0
    %1529 = vadd.xlane.f32.xlu0 %v1528
    %v1530 = vpop.xlane.xlu0 %1529
    %v1531 = vsel %vm253, %v1527, 0.0
    %1532 = vadd.xlane.f32.xlu0 %v1531
    %v1533 = vpop.xlane.xlu0 %1532
    %v1534 = vrcp.pop %v1530
    %v1535 = vrcp.pop %v1533
    %v1536 = vmul.f32 %v1525, %v1534
    %v1537 = vmul.f32 %v1527, %v1535
    %v1538 = vpack.c.bf16 %v1537, %v1536
    %1539 = vrot.lane.b32.xlu0 %v1465, 64
    %v1540 = vpop.permute.xlu0 %1539
    %v1543 = vsel %vm253, %v1538, 0
    %1545 = vmatprep.subr.bf16.mxu0 0
    %1546 = vmatpush1.bf16.msra.mxu0 %v1540
    %1547 = vmatprep.subr.bf16.mxu0 0
    %1548 = vmatpush1.bf16.msra.mxu0 0
    %1549 = vmatprep.subr.bf16.mxu0 0
    %1550 = vmatpush1.bf16.msra.mxu0 0
    %1551 = vmatprep.subr.bf16.mxu0 0
    %1552 = vmatpush1.bf16.msra.mxu0 0
    %1553 = vmatprep.subr.bf16.mxu0 0
    %1554 = vmatpush1.bf16.msra.mxu0 0
    %1555 = vmatprep.subr.bf16.mxu0 0
    %1556 = vmatpush1.bf16.msra.mxu0 0
    %1557 = vmatprep.subr.bf16.mxu0 0
    %1558 = vmatpush1.bf16.msra.mxu0 0
    %1559 = vmatprep.subr.bf16.mxu0 0
    %1560 = vmatpush1.bf16.msra.mxu0 0
    %1561 = vmatprep.subr.bf16.mxu0 0
    %1562 = vmatpush1.bf16.msra.mxu0 0
    %1563 = vmatprep.subr.bf16.mxu0 0
    %1564 = vmatpush1.bf16.msra.mxu0 0
    %1565 = vmatprep.subr.bf16.mxu0 0
    %1566 = vmatpush1.bf16.msra.mxu0 0
    %1567 = vmatprep.subr.bf16.mxu0 0
    %1568 = vmatpush1.bf16.msra.mxu0 0
    %1569 = vmatprep.subr.bf16.mxu0 0
    %1570 = vmatpush1.bf16.msra.mxu0 0
    %1571 = vmatprep.subr.bf16.mxu0 0
    %1572 = vmatpush1.bf16.msra.mxu0 0
    %1573 = vmatprep.subr.bf16.mxu0 0
    %1574 = vmatpush1.bf16.msra.mxu0 0
    %1575 = vmatprep.subr.bf16.mxu0 0
    %1576 = vmatpush1.bf16.msra.mxu0 0
    %1577 = vmatprep.mubr.bf16.mxu0 0
    %1578 = vmatmul.mubr.bf16.gmra.mrb[0].mxu0 %v1543
    %v1579 = vpop.f32.mrb[0].mxu0
    %v1580 = vadd.f32 0.0, %v1579
    %v1581 = vpop.f32.mrb[0].mxu0
    %v1582 = vpop.f32.mrb[0].mxu0
    %v1583 = vadd.f32 0.0, %v1582
    %v1584 = vpop.f32.mrb[0].mxu0
    %1585 = vdwg.mxu0
    %1586 = vrot.lane.b32.xlu0 %v1465, 112
    %v1587 = vpop.permute.xlu0 %1586
    %1588 = vrot.lane.b32.xlu0 %v1465, 80
    %v1589 = vpop.permute.xlu0 %1588
    %v1591 = vsel %vm253, %v1587, 0
    %v1594 = vsel %vm253, %v1589, 0
    %1596 = vmatprep.subr.bf16.mxu0 0
    %1597 = vmatpush1.bf16.xpose.msra.mxu0 %v1594
    %1598 = vmatprep.subr.bf16.mxu0 0
    %1599 = vmatpush1.bf16.xpose.msra.mxu0 0
    %1600 = vmatprep.subr.bf16.mxu0 0
    %1601 = vmatpush1.bf16.xpose.msra.mxu0 0
    %1602 = vmatprep.subr.bf16.mxu0 0
    %1603 = vmatpush1.bf16.xpose.msra.mxu0 0
    %1604 = vmatprep.subr.bf16.mxu0 0
    %1605 = vmatpush1.bf16.xpose.msra.mxu0 0
    %1606 = vmatprep.subr.bf16.mxu0 0
    %1607 = vmatpush1.bf16.xpose.msra.mxu0 0
    %1608 = vmatprep.subr.bf16.mxu0 0
    %1609 = vmatpush1.bf16.xpose.msra.mxu0 0
    %1610 = vmatprep.subr.bf16.mxu0 0
    %1611 = vmatpush1.bf16.xpose.msra.mxu0 0
    %1612 = vmatprep.subr.bf16.mxu0 0
    %1613 = vmatpush1.bf16.xpose.msra.mxu0 0
    %1614 = vmatprep.subr.bf16.mxu0 0
    %1615 = vmatpush1.bf16.xpose.msra.mxu0 0
    %1616 = vmatprep.subr.bf16.mxu0 0
    %1617 = vmatpush1.bf16.xpose.msra.mxu0 0
    %1618 = vmatprep.subr.bf16.mxu0 0
    %1619 = vmatpush1.bf16.xpose.msra.mxu0 0
    %1620 = vmatprep.subr.bf16.mxu0 0
    %1621 = vmatpush1.bf16.xpose.msra.mxu0 0
    %1622 = vmatprep.subr.bf16.mxu0 0
    %1623 = vmatpush1.bf16.xpose.msra.mxu0 0
    %1624 = vmatprep.subr.bf16.mxu0 0
    %1625 = vmatpush1.bf16.xpose.msra.mxu0 0
    %1626 = vmatprep.subr.bf16.mxu0 0
    %1627 = vmatpush1.bf16.xpose.msra.mxu0 0
    %1628 = vmatprep.mubr.bf16.mxu0 0
    %1629 = vmatmul.mubr.bf16.gmra.mrb[0].mxu0 %v1591
    %v1630 = vpop.f32.mrb[0].mxu0
    %v1631 = vadd.f32 %v77, %v1630
    %v1632 = vpop.f32.mrb[0].mxu0
    %v1633 = vpop.f32.mrb[0].mxu0
    %v1634 = vadd.f32 %v78, %v1633
    %v1635 = vpop.f32.mrb[0].mxu0
    %1636 = vdwg.mxu0
    %v1637 = vsel %vm253, %v1631, -inf
    %1638 = vmax.xlane.f32.xlu0 %v1637
    %v1639 = vpop.xlane.xlu0 %1638
    %v1640 = vsel %vm253, %v1634, -inf
    %1641 = vmax.xlane.f32.xlu0 %v1640
    %v1642 = vpop.xlane.xlu0 %1641
    %v1643 = vsub.f32 %v1631, %v1639
    %v1644 = vsub.f32 %v1634, %v1642
    %v1645 = vmul.f32 %v1643, 1.442695
    %v1646 = vpow.pop %v1645
    %v1647 = vmul.f32 %v1644, 1.442695
    %v1648 = vpow.pop %v1647
    %v1649 = vsel %vm253, %v1646, 0.0
    %1650 = vadd.xlane.f32.xlu0 %v1649
    %v1651 = vpop.xlane.xlu0 %1650
    %v1652 = vsel %vm253, %v1648, 0.0
    %1653 = vadd.xlane.f32.xlu0 %v1652
    %v1654 = vpop.xlane.xlu0 %1653
    %v1655 = vrcp.pop %v1651
    %v1656 = vrcp.pop %v1654
    %v1657 = vmul.f32 %v1646, %v1655
    %v1658 = vmul.f32 %v1648, %v1656
    %v1659 = vpack.c.bf16 %v1658, %v1657
    %1660 = vrot.lane.b32.xlu0 %v1465, 48
    %v1661 = vpop.permute.xlu0 %1660
    %v1664 = vsel %vm253, %v1659, 0
    %1666 = vmatprep.subr.bf16.mxu0 0
    %1667 = vmatpush1.bf16.msra.mxu0 %v1661
    %1668 = vmatprep.subr.bf16.mxu0 0
    %1669 = vmatpush1.bf16.msra.mxu0 0
    %1670 = vmatprep.subr.bf16.mxu0 0
    %1671 = vmatpush1.bf16.msra.mxu0 0
    %1672 = vmatprep.subr.bf16.mxu0 0
    %1673 = vmatpush1.bf16.msra.mxu0 0
    %1674 = vmatprep.subr.bf16.mxu0 0
    %1675 = vmatpush1.bf16.msra.mxu0 0
    %1676 = vmatprep.subr.bf16.mxu0 0
    %1677 = vmatpush1.bf16.msra.mxu0 0
    %1678 = vmatprep.subr.bf16.mxu0 0
    %1679 = vmatpush1.bf16.msra.mxu0 0
    %1680 = vmatprep.subr.bf16.mxu0 0
    %1681 = vmatpush1.bf16.msra.mxu0 0
    %1682 = vmatprep.subr.bf16.mxu0 0
    %1683 = vmatpush1.bf16.msra.mxu0 0
    %1684 = vmatprep.subr.bf16.mxu0 0
    %1685 = vmatpush1.bf16.msra.mxu0 0
    %1686 = vmatprep.subr.bf16.mxu0 0
    %1687 = vmatpush1.bf16.msra.mxu0 0
    %1688 = vmatprep.subr.bf16.mxu0 0
    %1689 = vmatpush1.bf16.msra.mxu0 0
    %1690 = vmatprep.subr.bf16.mxu0 0
    %1691 = vmatpush1.bf16.msra.mxu0 0
    %1692 = vmatprep.subr.bf16.mxu0 0
    %1693 = vmatpush1.bf16.msra.mxu0 0
    %1694 = vmatprep.subr.bf16.mxu0 0
    %1695 = vmatpush1.bf16.msra.mxu0 0
    %1696 = vmatprep.subr.bf16.mxu0 0
    %1697 = vmatpush1.bf16.msra.mxu0 0
    %1698 = vmatprep.mubr.bf16.mxu0 0
    %1699 = vmatmul.mubr.bf16.gmra.mrb[0].mxu0 %v1664
    %v1700 = vpop.f32.mrb[0].mxu0
    %v1701 = vadd.f32 0.0, %v1700
    %v1702 = vpop.f32.mrb[0].mxu0
    %v1703 = vpop.f32.mrb[0].mxu0
    %v1704 = vadd.f32 0.0, %v1703
    %v1705 = vpop.f32.mrb[0].mxu0
    %1706 = vdwg.mxu0
    %1709 = vrot.lane.b32.xlu0 %v1701, 16
    %v1710 = vpop.permute.xlu0 %1709
    %1711 = vrot.lane.b32.xlu0 %v1704, 16
    %v1712 = vpop.permute.xlu0 %1711
    %v1715 = vsel %vm253, %v1580, %v1710
    %v1716 = vsel %vm253, %v1583, %v1712
    %v1717 = vpack.c.bf16 %v1716, %v1715
    %s1718 = scalar_lea.vmem %s6, 16
    %v1719 = vld [vmem:[%s1718] sm:$0xf]
    %v1720 = vld [vmem:[%s1718 + $0x4] sm:$0xf]
    %v1721 = vld [vmem:[%s1718 + $0x8] sm:$0xf]
    %v1722 = vld [vmem:[%s1718 + $0xc] sm:$0xf]
    %s1723 = scalar_lea.vmem %s7, 1
    %v1724 = vld [vmem:[%s1723] sm:$0x1]
    %v1726 = vlaneseq
    %v1727 = vshrl.u32 %v1726, 7
    %v1728 = vsub.s32 0, %v1727
    %v1729 = vrot.slane %v1724, %v1728
    %v1735 = vunpack.c.l.b16 %v1719
    %v1736 = vunpack.c.l.b16 %v1720
    %v1737 = vunpack.c.l.b16 %v1721
    %v1738 = vunpack.c.l.b16 %v1722
    %v1739 = vpack.c.b16 %v1736, %v1735
    %v1740 = vpack.c.b16 %v1738, %v1737
    %v1744 = vsel %vm204, %v1717, 0
    %1746 = vmatprep.subr.bf16.mxu0 0
    %1747 = vmatpush1.bf16.msra.mxu0 %v1739
    %1748 = vmatprep.subr.bf16.mxu0 0
    %1749 = vmatpush1.bf16.msra.mxu0 %v1740
    %1750 = vmatprep.subr.bf16.mxu0 0
    %1751 = vmatpush1.bf16.msra.mxu0 0
    %1752 = vmatprep.subr.bf16.mxu0 0
    %1753 = vmatpush1.bf16.msra.mxu0 0
    %1754 = vmatprep.subr.bf16.mxu0 0
    %1755 = vmatpush1.bf16.msra.mxu0 0
    %1756 = vmatprep.subr.bf16.mxu0 0
    %1757 = vmatpush1.bf16.msra.mxu0 0
    %1758 = vmatprep.subr.bf16.mxu0 0
    %1759 = vmatpush1.bf16.msra.mxu0 0
    %1760 = vmatprep.subr.bf16.mxu0 0
    %1761 = vmatpush1.bf16.msra.mxu0 0
    %1762 = vmatprep.subr.bf16.mxu0 0
    %1763 = vmatpush1.bf16.msra.mxu0 0
    %1764 = vmatprep.subr.bf16.mxu0 0
    %1765 = vmatpush1.bf16.msra.mxu0 0
    %1766 = vmatprep.subr.bf16.mxu0 0
    %1767 = vmatpush1.bf16.msra.mxu0 0
    %1768 = vmatprep.subr.bf16.mxu0 0
    %1769 = vmatpush1.bf16.msra.mxu0 0
    %1770 = vmatprep.subr.bf16.mxu0 0
    %1771 = vmatpush1.bf16.msra.mxu0 0
    %1772 = vmatprep.subr.bf16.mxu0 0
    %1773 = vmatpush1.bf16.msra.mxu0 0
    %1774 = vmatprep.subr.bf16.mxu0 0
    %1775 = vmatpush1.bf16.msra.mxu0 0
    %1776 = vmatprep.subr.bf16.mxu0 0
    %1777 = vmatpush1.bf16.msra.mxu0 0
    %1778 = vmatprep.mubr.bf16.mxu0 0
    %1779 = vmatmul.mubr.bf16.gmra.mrb[0].mxu0 %v1744
    %v1780 = vpop.f32.mrb[0].mxu0
    %v1781 = vadd.f32 %v1729, %v1780
    %v1782 = vpop.f32.mrb[0].mxu0
    %v1783 = vpop.f32.mrb[0].mxu0
    %v1784 = vadd.f32 %v1729, %v1783
    %v1785 = vpop.f32.mrb[0].mxu0
    %1786 = vdwg.mxu0
    %v1787 = vadd.f32 %v1781, %v1393
    %v1788 = vadd.f32 %v1784, %v1394
    %v1789 = vsel %vm204, %v1787, 0.0
    %1790 = vadd.xlane.f32.xlu0 %v1789
    %v1791 = vpop.xlane.xlu0 %1790
    %v1792 = vsel %vm204, %v1788, 0.0
    %1793 = vadd.xlane.f32.xlu0 %v1792
    %v1794 = vpop.xlane.xlu0 %1793
    %v1795 = vmul.f32 %v1791, %v578
    %v1796 = vmul.f32 %v1794, %v578
    %v1797 = vsub.f32 %v1787, %v1795
    %v1798 = vsub.f32 %v1788, %v1796
    %v1799 = vmul.f32 %v1797, %v1797
    %v1800 = vmul.f32 %v1798, %v1798
    %v1801 = vsel %vm204, %v1799, 0.0
    %1802 = vadd.xlane.f32.xlu0 %v1801
    %v1803 = vpop.xlane.xlu0 %1802
    %v1804 = vsel %vm204, %v1800, 0.0
    %1805 = vadd.xlane.f32.xlu0 %v1804
    %v1806 = vpop.xlane.xlu0 %1805
    %v1807 = vmul.f32 %v1803, %v578
    %v1808 = vmul.f32 %v1806, %v578
    %v1809 = vadd.f32 %v1807, 1e-05
    %v1810 = vadd.f32 %v1808, 1e-05
    %v1811 = vrsqrt.pop %v1809
    %v1812 = vrsqrt.pop %v1810
    %v1813 = vmul.f32 %v1797, %v1811
    %v1814 = vmul.f32 %v1798, %v1812
    %s1815 = scalar_lea.vmem %s8, 1
    %v1816 = vld [vmem:[%s1815] sm:$0x1]
    %v1818 = vlaneseq
    %v1819 = vshrl.u32 %v1818, 7
    %v1820 = vsub.s32 0, %v1819
    %v1821 = vrot.slane %v1816, %v1820
    %v1823 = vmul.f32 %v1813, %v1821
    %v1824 = vmul.f32 %v1814, %v1821
    %s1825 = scalar_lea.vmem %s9, 1
    %v1826 = vld [vmem:[%s1825] sm:$0x1]
    %v1828 = vlaneseq
    %v1829 = vshrl.u32 %v1828, 7
    %v1830 = vsub.s32 0, %v1829
    %v1831 = vrot.slane %v1826, %v1830
    %v1833 = vadd.f32 %v1823, %v1831
    %v1834 = vadd.f32 %v1824, %v1831
    %v1835 = vmul.f32 %v1833, %v620
    %v1836 = vmul.f32 %v1834, %v625
    %v1837 = vrot.slane %v1835, 4
    %v1838 = vrot.slane %v1836, 4
    %v1839 = vsel %vm631, %v1837, %v1838
    %v1840 = vsel %vm631, %v1838, %v1837
    %v1841 = vmul.f32 %v1840, %v94
    %v1842 = vmul.f32 %v1839, %v95
    %v1843 = vpack.c.bf16 %v1842, %v1841
    %s1844 = scalar_lea.vmem [#allocation2], 144
    %v1845 = vld [vmem:[%s1844] sm:$0xf]
    %v1846 = vld [vmem:[%s1844 + $0x4] sm:$0xf]
    %v1847 = vld [vmem:[%s1844 + $0x8] sm:$0xf]
    %v1848 = vld [vmem:[%s1844 + $0xc] sm:$0xf]
    %v1849 = vrot.slane %v1835, 5
    %v1850 = vrot.slane %v1836, 5
    %v1851 = vsel %vm643, %v1849, %v1850
    %v1852 = vsel %vm643, %v1850, %v1849
    %v1853 = vmul.f32 %v1852, %v106
    %v1854 = vmul.f32 %v1851, %v107
    %v1855 = vpack.c.bf16 %v1854, %v1853
    %s1856 = scalar_lea.vmem [#allocation2], 160
    %v1857 = vld [vmem:[%s1856] sm:$0xf]
    %v1858 = vld [vmem:[%s1856 + $0x4] sm:$0xf]
    %v1859 = vld [vmem:[%s1856 + $0x8] sm:$0xf]
    %v1860 = vld [vmem:[%s1856 + $0xc] sm:$0xf]
    %v1865 = vunpack.c.l.b16 %v1857
    %v1866 = vunpack.c.l.b16 %v1858
    %v1867 = vunpack.c.l.b16 %v1859
    %v1868 = vunpack.c.l.b16 %v1860
    %v1869 = vpack.c.b16 %v1866, %v1865
    %v1870 = vpack.c.b16 %v1868, %v1867
    %v1874 = vsel %vm204, %v1855, 0
    %1876 = vmatprep.subr.bf16.mxu0 0
    %1877 = vmatpush1.bf16.msra.mxu0 %v1869
    %1878 = vmatprep.subr.bf16.mxu0 0
    %1879 = vmatpush1.bf16.msra.mxu0 %v1870
    %1880 = vmatprep.subr.bf16.mxu0 0
    %1881 = vmatpush1.bf16.msra.mxu0 0
    %1882 = vmatprep.subr.bf16.mxu0 0
    %1883 = vmatpush1.bf16.msra.mxu0 0
    %1884 = vmatprep.subr.bf16.mxu0 0
    %1885 = vmatpush1.bf16.msra.mxu0 0
    %1886 = vmatprep.subr.bf16.mxu0 0
    %1887 = vmatpush1.bf16.msra.mxu0 0
    %1888 = vmatprep.subr.bf16.mxu0 0
    %1889 = vmatpush1.bf16.msra.mxu0 0
    %1890 = vmatprep.subr.bf16.mxu0 0
    %1891 = vmatpush1.bf16.msra.mxu0 0
    %1892 = vmatprep.subr.bf16.mxu0 0
    %1893 = vmatpush1.bf16.msra.mxu0 0
    %1894 = vmatprep.subr.bf16.mxu0 0
    %1895 = vmatpush1.bf16.msra.mxu0 0
    %1896 = vmatprep.subr.bf16.mxu0 0
    %1897 = vmatpush1.bf16.msra.mxu0 0
    %1898 = vmatprep.subr.bf16.mxu0 0
    %1899 = vmatpush1.bf16.msra.mxu0 0
    %1900 = vmatprep.subr.bf16.mxu0 0
    %1901 = vmatpush1.bf16.msra.mxu0 0
    %1902 = vmatprep.subr.bf16.mxu0 0
    %1903 = vmatpush1.bf16.msra.mxu0 0
    %1904 = vmatprep.subr.bf16.mxu0 0
    %1905 = vmatpush1.bf16.msra.mxu0 0
    %1906 = vmatprep.subr.bf16.mxu0 0
    %1907 = vmatpush1.bf16.msra.mxu0 0
    %1908 = vmatprep.mubr.bf16.mxu0 0
    %1909 = vmatmul.mubr.bf16.gmra.mrb[0].mxu0 %v1874
    %v1910 = vpop.f32.mrb[0].mxu0
    %v1911 = vadd.f32 0.0, %v1910
    %v1912 = vpop.f32.mrb[0].mxu0
    %v1913 = vpop.f32.mrb[0].mxu0
    %v1914 = vadd.f32 0.0, %v1913
    %v1915 = vpop.f32.mrb[0].mxu0
    %1916 = vdwg.mxu0
    %v1921 = vunpack.c.l.b16 %v1845
    %v1922 = vunpack.c.l.b16 %v1846
    %v1923 = vunpack.c.l.b16 %v1847
    %v1924 = vunpack.c.l.b16 %v1848
    %v1925 = vpack.c.b16 %v1922, %v1921
    %v1926 = vpack.c.b16 %v1924, %v1923
    %v1930 = vsel %vm204, %v1843, 0
    %1932 = vmatprep.subr.bf16.mxu0 0
    %1933 = vmatpush1.bf16.msra.mxu0 %v1925
    %1934 = vmatprep.subr.bf16.mxu0 0
    %1935 = vmatpush1.bf16.msra.mxu0 %v1926
    %1936 = vmatprep.subr.bf16.mxu0 0
    %1937 = vmatpush1.bf16.msra.mxu0 0
    %1938 = vmatprep.subr.bf16.mxu0 0
    %1939 = vmatpush1.bf16.msra.mxu0 0
    %1940 = vmatprep.subr.bf16.mxu0 0
    %1941 = vmatpush1.bf16.msra.mxu0 0
    %1942 = vmatprep.subr.bf16.mxu0 0
    %1943 = vmatpush1.bf16.msra.mxu0 0
    %1944 = vmatprep.subr.bf16.mxu0 0
    %1945 = vmatpush1.bf16.msra.mxu0 0
    %1946 = vmatprep.subr.bf16.mxu0 0
    %1947 = vmatpush1.bf16.msra.mxu0 0
    %1948 = vmatprep.subr.bf16.mxu0 0
    %1949 = vmatpush1.bf16.msra.mxu0 0
    %1950 = vmatprep.subr.bf16.mxu0 0
    %1951 = vmatpush1.bf16.msra.mxu0 0
    %1952 = vmatprep.subr.bf16.mxu0 0
    %1953 = vmatpush1.bf16.msra.mxu0 0
    %1954 = vmatprep.subr.bf16.mxu0 0
    %1955 = vmatpush1.bf16.msra.mxu0 0
    %1956 = vmatprep.subr.bf16.mxu0 0
    %1957 = vmatpush1.bf16.msra.mxu0 0
    %1958 = vmatprep.subr.bf16.mxu0 0
    %1959 = vmatpush1.bf16.msra.mxu0 0
    %1960 = vmatprep.subr.bf16.mxu0 0
    %1961 = vmatpush1.bf16.msra.mxu0 0
    %1962 = vmatprep.subr.bf16.mxu0 0
    %1963 = vmatpush1.bf16.msra.mxu0 0
    %1964 = vmatprep.mubr.bf16.mxu0 0
    %1965 = vmatmul.mubr.bf16.gmra.mrb[0].mxu0 %v1930
    %v1966 = vpop.f32.mrb[0].mxu0
    %v1967 = vadd.f32 %v1911, %v1966
    %v1968 = vpop.f32.mrb[0].mxu0
    %v1969 = vpop.f32.mrb[0].mxu0
    %v1970 = vadd.f32 %v1914, %v1969
    %v1971 = vpop.f32.mrb[0].mxu0
    %1972 = vdwg.mxu0
    %v1973 = vrot.slane %v1835, 6
    %v1974 = vrot.slane %v1836, 6
    %v1975 = vsel %vm768, %v1973, %v1974
    %v1976 = vsel %vm768, %v1974, %v1973
    %v1977 = vmul.f32 %v1976, %v118
    %v1978 = vmul.f32 %v1975, %v119
    %v1979 = vpack.c.bf16 %v1978, %v1977
    %s1980 = scalar_lea.vmem [#allocation2], 176
    %v1981 = vld [vmem:[%s1980] sm:$0xf]
    %v1982 = vld [vmem:[%s1980 + $0x4] sm:$0xf]
    %v1983 = vld [vmem:[%s1980 + $0x8] sm:$0xf]
    %v1984 = vld [vmem:[%s1980 + $0xc] sm:$0xf]
    %v1989 = vunpack.c.l.b16 %v1981
    %v1990 = vunpack.c.l.b16 %v1982
    %v1991 = vunpack.c.l.b16 %v1983
    %v1992 = vunpack.c.l.b16 %v1984
    %v1993 = vpack.c.b16 %v1990, %v1989
    %v1994 = vpack.c.b16 %v1992, %v1991
    %v1998 = vsel %vm204, %v1979, 0
    %2000 = vmatprep.subr.bf16.mxu0 0
    %2001 = vmatpush1.bf16.msra.mxu0 %v1993
    %2002 = vmatprep.subr.bf16.mxu0 0
    %2003 = vmatpush1.bf16.msra.mxu0 %v1994
    %2004 = vmatprep.subr.bf16.mxu0 0
    %2005 = vmatpush1.bf16.msra.mxu0 0
    %2006 = vmatprep.subr.bf16.mxu0 0
    %2007 = vmatpush1.bf16.msra.mxu0 0
    %2008 = vmatprep.subr.bf16.mxu0 0
    %2009 = vmatpush1.bf16.msra.mxu0 0
    %2010 = vmatprep.subr.bf16.mxu0 0
    %2011 = vmatpush1.bf16.msra.mxu0 0
    %2012 = vmatprep.subr.bf16.mxu0 0
    %2013 = vmatpush1.bf16.msra.mxu0 0
    %2014 = vmatprep.subr.bf16.mxu0 0
    %2015 = vmatpush1.bf16.msra.mxu0 0
    %2016 = vmatprep.subr.bf16.mxu0 0
    %2017 = vmatpush1.bf16.msra.mxu0 0
    %2018 = vmatprep.subr.bf16.mxu0 0
    %2019 = vmatpush1.bf16.msra.mxu0 0
    %2020 = vmatprep.subr.bf16.mxu0 0
    %2021 = vmatpush1.bf16.msra.mxu0 0
    %2022 = vmatprep.subr.bf16.mxu0 0
    %2023 = vmatpush1.bf16.msra.mxu0 0
    %2024 = vmatprep.subr.bf16.mxu0 0
    %2025 = vmatpush1.bf16.msra.mxu0 0
    %2026 = vmatprep.subr.bf16.mxu0 0
    %2027 = vmatpush1.bf16.msra.mxu0 0
    %2028 = vmatprep.subr.bf16.mxu0 0
    %2029 = vmatpush1.bf16.msra.mxu0 0
    %2030 = vmatprep.subr.bf16.mxu0 0
    %2031 = vmatpush1.bf16.msra.mxu0 0
    %2032 = vmatprep.mubr.bf16.mxu0 0
    %2033 = vmatmul.mubr.bf16.gmra.mrb[0].mxu0 %v1998
    %v2034 = vpop.f32.mrb[0].mxu0
    %v2035 = vadd.f32 0.0, %v2034
    %v2036 = vpop.f32.mrb[0].mxu0
    %v2037 = vpop.f32.mrb[0].mxu0
    %v2038 = vadd.f32 0.0, %v2037
    %v2039 = vpop.f32.mrb[0].mxu0
    %2040 = vdwg.mxu0
    %v2041 = vadd.f32 %v1967, %v2035
    %v2042 = vadd.f32 %v1970, %v2038
    %v2043 = vrot.slane %v1835, 7
    %v2044 = vrot.slane %v1836, 7
    %v2045 = vsel %vm839, %v2043, %v2044
    %v2046 = vsel %vm839, %v2044, %v2043
    %v2047 = vmul.f32 %v2046, %v130
    %v2048 = vmul.f32 %v2045, %v131
    %v2049 = vpack.c.bf16 %v2048, %v2047
    %s2050 = scalar_lea.vmem [#allocation2], 192
    %v2051 = vld [vmem:[%s2050] sm:$0xf]
    %v2052 = vld [vmem:[%s2050 + $0x4] sm:$0xf]
    %v2053 = vld [vmem:[%s2050 + $0x8] sm:$0xf]
    %v2054 = vld [vmem:[%s2050 + $0xc] sm:$0xf]
    %v2059 = vunpack.c.l.b16 %v2051
    %v2060 = vunpack.c.l.b16 %v2052
    %v2061 = vunpack.c.l.b16 %v2053
    %v2062 = vunpack.c.l.b16 %v2054
    %v2063 = vpack.c.b16 %v2060, %v2059
    %v2064 = vpack.c.b16 %v2062, %v2061
    %v2068 = vsel %vm204, %v2049, 0
    %2070 = vmatprep.subr.bf16.mxu0 0
    %2071 = vmatpush1.bf16.msra.mxu0 %v2063
    %2072 = vmatprep.subr.bf16.mxu0 0
    %2073 = vmatpush1.bf16.msra.mxu0 %v2064
    %2074 = vmatprep.subr.bf16.mxu0 0
    %2075 = vmatpush1.bf16.msra.mxu0 0
    %2076 = vmatprep.subr.bf16.mxu0 0
    %2077 = vmatpush1.bf16.msra.mxu0 0
    %2078 = vmatprep.subr.bf16.mxu0 0
    %2079 = vmatpush1.bf16.msra.mxu0 0
    %2080 = vmatprep.subr.bf16.mxu0 0
    %2081 = vmatpush1.bf16.msra.mxu0 0
    %2082 = vmatprep.subr.bf16.mxu0 0
    %2083 = vmatpush1.bf16.msra.mxu0 0
    %2084 = vmatprep.subr.bf16.mxu0 0
    %2085 = vmatpush1.bf16.msra.mxu0 0
    %2086 = vmatprep.subr.bf16.mxu0 0
    %2087 = vmatpush1.bf16.msra.mxu0 0
    %2088 = vmatprep.subr.bf16.mxu0 0
    %2089 = vmatpush1.bf16.msra.mxu0 0
    %2090 = vmatprep.subr.bf16.mxu0 0
    %2091 = vmatpush1.bf16.msra.mxu0 0
    %2092 = vmatprep.subr.bf16.mxu0 0
    %2093 = vmatpush1.bf16.msra.mxu0 0
    %2094 = vmatprep.subr.bf16.mxu0 0
    %2095 = vmatpush1.bf16.msra.mxu0 0
    %2096 = vmatprep.subr.bf16.mxu0 0
    %2097 = vmatpush1.bf16.msra.mxu0 0
    %2098 = vmatprep.subr.bf16.mxu0 0
    %2099 = vmatpush1.bf16.msra.mxu0 0
    %2100 = vmatprep.subr.bf16.mxu0 0
    %2101 = vmatpush1.bf16.msra.mxu0 0
    %2102 = vmatprep.mubr.bf16.mxu0 0
    %2103 = vmatmul.mubr.bf16.gmra.mrb[0].mxu0 %v2068
    %v2104 = vpop.f32.mrb[0].mxu0
    %v2105 = vadd.f32 0.0, %v2104
    %v2106 = vpop.f32.mrb[0].mxu0
    %v2107 = vpop.f32.mrb[0].mxu0
    %v2108 = vadd.f32 0.0, %v2107
    %v2109 = vpop.f32.mrb[0].mxu0
    %2110 = vdwg.mxu0
    %v2111 = vadd.f32 %v2041, %v2105
    %v2112 = vadd.f32 %v2042, %v2108
    %v2113 = vpack.c.bf16 %v1836, %v1835
    %s2114 = scalar_lea.vmem [#allocation2], 208
    %v2115 = vld [vmem:[%s2114] sm:$0xf]
    %v2116 = vld [vmem:[%s2114 + $0x4] sm:$0xf]
    %v2117 = vld [vmem:[%s2114 + $0x8] sm:$0xf]
    %v2118 = vld [vmem:[%s2114 + $0xc] sm:$0xf]
    %v2123 = vunpack.c.l.b16 %v2115
    %v2124 = vunpack.c.l.b16 %v2116
    %v2125 = vunpack.c.l.b16 %v2117
    %v2126 = vunpack.c.l.b16 %v2118
    %v2127 = vpack.c.b16 %v2124, %v2123
    %v2128 = vpack.c.b16 %v2126, %v2125
    %v2132 = vsel %vm204, %v2113, 0
    %2134 = vmatprep.subr.bf16.mxu0 0
    %2135 = vmatpush1.bf16.msra.mxu0 %v2127
    %2136 = vmatprep.subr.bf16.mxu0 0
    %2137 = vmatpush1.bf16.msra.mxu0 %v2128
    %2138 = vmatprep.subr.bf16.mxu0 0
    %2139 = vmatpush1.bf16.msra.mxu0 0
    %2140 = vmatprep.subr.bf16.mxu0 0
    %2141 = vmatpush1.bf16.msra.mxu0 0
    %2142 = vmatprep.subr.bf16.mxu0 0
    %2143 = vmatpush1.bf16.msra.mxu0 0
    %2144 = vmatprep.subr.bf16.mxu0 0
    %2145 = vmatpush1.bf16.msra.mxu0 0
    %2146 = vmatprep.subr.bf16.mxu0 0
    %2147 = vmatpush1.bf16.msra.mxu0 0
    %2148 = vmatprep.subr.bf16.mxu0 0
    %2149 = vmatpush1.bf16.msra.mxu0 0
    %2150 = vmatprep.subr.bf16.mxu0 0
    %2151 = vmatpush1.bf16.msra.mxu0 0
    %2152 = vmatprep.subr.bf16.mxu0 0
    %2153 = vmatpush1.bf16.msra.mxu0 0
    %2154 = vmatprep.subr.bf16.mxu0 0
    %2155 = vmatpush1.bf16.msra.mxu0 0
    %2156 = vmatprep.subr.bf16.mxu0 0
    %2157 = vmatpush1.bf16.msra.mxu0 0
    %2158 = vmatprep.subr.bf16.mxu0 0
    %2159 = vmatpush1.bf16.msra.mxu0 0
    %2160 = vmatprep.subr.bf16.mxu0 0
    %2161 = vmatpush1.bf16.msra.mxu0 0
    %2162 = vmatprep.subr.bf16.mxu0 0
    %2163 = vmatpush1.bf16.msra.mxu0 0
    %2164 = vmatprep.subr.bf16.mxu0 0
    %2165 = vmatpush1.bf16.msra.mxu0 0
    %2166 = vmatprep.mubr.bf16.mxu0 0
    %2167 = vmatmul.mubr.bf16.gmra.mrb[0].mxu0 %v2132
    %v2168 = vpop.f32.mrb[0].mxu0
    %v2169 = vadd.f32 0.0, %v2168
    %v2170 = vpop.f32.mrb[0].mxu0
    %v2171 = vpop.f32.mrb[0].mxu0
    %v2172 = vadd.f32 0.0, %v2171
    %v2173 = vpop.f32.mrb[0].mxu0
    %2174 = vdwg.mxu0
    %v2175 = vadd.f32 %v2111, %v2169
    %v2176 = vadd.f32 %v2112, %v2172
    %v2177 = vrot.slane %v1835, 1
    %v2178 = vrot.slane %v1836, 1
    %v2179 = vsel %vm974, %v2177, %v2178
    %v2180 = vsel %vm974, %v2178, %v2177
    %v2181 = vmul.f32 %v2179, %v142
    %v2182 = vmul.f32 %v2180, %v143
    %v2183 = vpack.c.bf16 %v2182, %v2181
    %s2184 = scalar_lea.vmem [#allocation2], 224
    %v2185 = vld [vmem:[%s2184] sm:$0xf]
    %v2186 = vld [vmem:[%s2184 + $0x4] sm:$0xf]
    %v2187 = vld [vmem:[%s2184 + $0x8] sm:$0xf]
    %v2188 = vld [vmem:[%s2184 + $0xc] sm:$0xf]
    %v2193 = vunpack.c.l.b16 %v2185
    %v2194 = vunpack.c.l.b16 %v2186
    %v2195 = vunpack.c.l.b16 %v2187
    %v2196 = vunpack.c.l.b16 %v2188
    %v2197 = vpack.c.b16 %v2194, %v2193
    %v2198 = vpack.c.b16 %v2196, %v2195
    %v2202 = vsel %vm204, %v2183, 0
    %2204 = vmatprep.subr.bf16.mxu0 0
    %2205 = vmatpush1.bf16.msra.mxu0 %v2197
    %2206 = vmatprep.subr.bf16.mxu0 0
    %2207 = vmatpush1.bf16.msra.mxu0 %v2198
    %2208 = vmatprep.subr.bf16.mxu0 0
    %2209 = vmatpush1.bf16.msra.mxu0 0
    %2210 = vmatprep.subr.bf16.mxu0 0
    %2211 = vmatpush1.bf16.msra.mxu0 0
    %2212 = vmatprep.subr.bf16.mxu0 0
    %2213 = vmatpush1.bf16.msra.mxu0 0
    %2214 = vmatprep.subr.bf16.mxu0 0
    %2215 = vmatpush1.bf16.msra.mxu0 0
    %2216 = vmatprep.subr.bf16.mxu0 0
    %2217 = vmatpush1.bf16.msra.mxu0 0
    %2218 = vmatprep.subr.bf16.mxu0 0
    %2219 = vmatpush1.bf16.msra.mxu0 0
    %2220 = vmatprep.subr.bf16.mxu0 0
    %2221 = vmatpush1.bf16.msra.mxu0 0
    %2222 = vmatprep.subr.bf16.mxu0 0
    %2223 = vmatpush1.bf16.msra.mxu0 0
    %2224 = vmatprep.subr.bf16.mxu0 0
    %2225 = vmatpush1.bf16.msra.mxu0 0
    %2226 = vmatprep.subr.bf16.mxu0 0
    %2227 = vmatpush1.bf16.msra.mxu0 0
    %2228 = vmatprep.subr.bf16.mxu0 0
    %2229 = vmatpush1.bf16.msra.mxu0 0
    %2230 = vmatprep.subr.bf16.mxu0 0
    %2231 = vmatpush1.bf16.msra.mxu0 0
    %2232 = vmatprep.subr.bf16.mxu0 0
    %2233 = vmatpush1.bf16.msra.mxu0 0
    %2234 = vmatprep.subr.bf16.mxu0 0
    %2235 = vmatpush1.bf16.msra.mxu0 0
    %2236 = vmatprep.mubr.bf16.mxu0 0
    %2237 = vmatmul.mubr.bf16.gmra.mrb[0].mxu0 %v2202
    %v2238 = vpop.f32.mrb[0].mxu0
    %v2239 = vadd.f32 0.0, %v2238
    %v2240 = vpop.f32.mrb[0].mxu0
    %v2241 = vpop.f32.mrb[0].mxu0
    %v2242 = vadd.f32 0.0, %v2241
    %v2243 = vpop.f32.mrb[0].mxu0
    %2244 = vdwg.mxu0
    %v2245 = vadd.f32 %v2175, %v2239
    %v2246 = vadd.f32 %v2176, %v2242
    %v2247 = vrot.slane %v1835, 2
    %v2248 = vrot.slane %v1836, 2
    %v2249 = vsel %vm1045, %v2247, %v2248
    %v2250 = vsel %vm1045, %v2248, %v2247
    %v2251 = vmul.f32 %v2249, %v154
    %v2252 = vmul.f32 %v2250, %v155
    %v2253 = vpack.c.bf16 %v2252, %v2251
    %s2254 = scalar_lea.vmem [#allocation2], 240
    %v2255 = vld [vmem:[%s2254] sm:$0xf]
    %v2256 = vld [vmem:[%s2254 + $0x4] sm:$0xf]
    %v2257 = vld [vmem:[%s2254 + $0x8] sm:$0xf]
    %v2258 = vld [vmem:[%s2254 + $0xc] sm:$0xf]
    %v2263 = vunpack.c.l.b16 %v2255
    %v2264 = vunpack.c.l.b16 %v2256
    %v2265 = vunpack.c.l.b16 %v2257
    %v2266 = vunpack.c.l.b16 %v2258
    %v2267 = vpack.c.b16 %v2264, %v2263
    %v2268 = vpack.c.b16 %v2266, %v2265
    %v2272 = vsel %vm204, %v2253, 0
    %2274 = vmatprep.subr.bf16.mxu0 0
    %2275 = vmatpush1.bf16.msra.mxu0 %v2267
    %2276 = vmatprep.subr.bf16.mxu0 0
    %2277 = vmatpush1.bf16.msra.mxu0 %v2268
    %2278 = vmatprep.subr.bf16.mxu0 0
    %2279 = vmatpush1.bf16.msra.mxu0 0
    %2280 = vmatprep.subr.bf16.mxu0 0
    %2281 = vmatpush1.bf16.msra.mxu0 0
    %2282 = vmatprep.subr.bf16.mxu0 0
    %2283 = vmatpush1.bf16.msra.mxu0 0
    %2284 = vmatprep.subr.bf16.mxu0 0
    %2285 = vmatpush1.bf16.msra.mxu0 0
    %2286 = vmatprep.subr.bf16.mxu0 0
    %2287 = vmatpush1.bf16.msra.mxu0 0
    %2288 = vmatprep.subr.bf16.mxu0 0
    %2289 = vmatpush1.bf16.msra.mxu0 0
    %2290 = vmatprep.subr.bf16.mxu0 0
    %2291 = vmatpush1.bf16.msra.mxu0 0
    %2292 = vmatprep.subr.bf16.mxu0 0
    %2293 = vmatpush1.bf16.msra.mxu0 0
    %2294 = vmatprep.subr.bf16.mxu0 0
    %2295 = vmatpush1.bf16.msra.mxu0 0
    %2296 = vmatprep.subr.bf16.mxu0 0
    %2297 = vmatpush1.bf16.msra.mxu0 0
    %2298 = vmatprep.subr.bf16.mxu0 0
    %2299 = vmatpush1.bf16.msra.mxu0 0
    %2300 = vmatprep.subr.bf16.mxu0 0
    %2301 = vmatpush1.bf16.msra.mxu0 0
    %2302 = vmatprep.subr.bf16.mxu0 0
    %2303 = vmatpush1.bf16.msra.mxu0 0
    %2304 = vmatprep.subr.bf16.mxu0 0
    %2305 = vmatpush1.bf16.msra.mxu0 0
    %2306 = vmatprep.mubr.bf16.mxu0 0
    %2307 = vmatmul.mubr.bf16.gmra.mrb[0].mxu0 %v2272
    %v2308 = vpop.f32.mrb[0].mxu0
    %v2309 = vadd.f32 0.0, %v2308
    %v2310 = vpop.f32.mrb[0].mxu0
    %v2311 = vpop.f32.mrb[0].mxu0
    %v2312 = vadd.f32 0.0, %v2311
    %v2313 = vpop.f32.mrb[0].mxu0
    %2314 = vdwg.mxu0
    %v2315 = vadd.f32 %v2245, %v2309
    %v2316 = vadd.f32 %v2246, %v2312
    %v2317 = vrot.slane %v1835, 3
    %v2318 = vrot.slane %v1836, 3
    %v2319 = vsel %vm1116, %v2317, %v2318
    %v2320 = vsel %vm1116, %v2318, %v2317
    %v2321 = vmul.f32 %v2319, %v166
    %v2322 = vmul.f32 %v2320, %v167
    %v2323 = vpack.c.bf16 %v2322, %v2321
    %s2324 = scalar_lea.vmem [#allocation2], 256
    %v2325 = vld [vmem:[%s2324] sm:$0xf]
    %v2326 = vld [vmem:[%s2324 + $0x4] sm:$0xf]
    %v2327 = vld [vmem:[%s2324 + $0x8] sm:$0xf]
    %v2328 = vld [vmem:[%s2324 + $0xc] sm:$0xf]
    %v2333 = vunpack.c.l.b16 %v2325
    %v2334 = vunpack.c.l.b16 %v2326
    %v2335 = vunpack.c.l.b16 %v2327
    %v2336 = vunpack.c.l.b16 %v2328
    %v2337 = vpack.c.b16 %v2334, %v2333
    %v2338 = vpack.c.b16 %v2336, %v2335
    %v2342 = vsel %vm204, %v2323, 0
    %2344 = vmatprep.subr.bf16.mxu0 0
    %2345 = vmatpush1.bf16.msra.mxu0 %v2337
    %2346 = vmatprep.subr.bf16.mxu0 0
    %2347 = vmatpush1.bf16.msra.mxu0 %v2338
    %2348 = vmatprep.subr.bf16.mxu0 0
    %2349 = vmatpush1.bf16.msra.mxu0 0
    %2350 = vmatprep.subr.bf16.mxu0 0
    %2351 = vmatpush1.bf16.msra.mxu0 0
    %2352 = vmatprep.subr.bf16.mxu0 0
    %2353 = vmatpush1.bf16.msra.mxu0 0
    %2354 = vmatprep.subr.bf16.mxu0 0
    %2355 = vmatpush1.bf16.msra.mxu0 0
    %2356 = vmatprep.subr.bf16.mxu0 0
    %2357 = vmatpush1.bf16.msra.mxu0 0
    %2358 = vmatprep.subr.bf16.mxu0 0
    %2359 = vmatpush1.bf16.msra.mxu0 0
    %2360 = vmatprep.subr.bf16.mxu0 0
    %2361 = vmatpush1.bf16.msra.mxu0 0
    %2362 = vmatprep.subr.bf16.mxu0 0
    %2363 = vmatpush1.bf16.msra.mxu0 0
    %2364 = vmatprep.subr.bf16.mxu0 0
    %2365 = vmatpush1.bf16.msra.mxu0 0
    %2366 = vmatprep.subr.bf16.mxu0 0
    %2367 = vmatpush1.bf16.msra.mxu0 0
    %2368 = vmatprep.subr.bf16.mxu0 0
    %2369 = vmatpush1.bf16.msra.mxu0 0
    %2370 = vmatprep.subr.bf16.mxu0 0
    %2371 = vmatpush1.bf16.msra.mxu0 0
    %2372 = vmatprep.subr.bf16.mxu0 0
    %2373 = vmatpush1.bf16.msra.mxu0 0
    %2374 = vmatprep.subr.bf16.mxu0 0
    %2375 = vmatpush1.bf16.msra.mxu0 0
    %2376 = vmatprep.mubr.bf16.mxu0 0
    %2377 = vmatmul.mubr.bf16.gmra.mrb[0].mxu0 %v2342
    %v2378 = vpop.f32.mrb[0].mxu0
    %v2379 = vadd.f32 0.0, %v2378
    %v2380 = vpop.f32.mrb[0].mxu0
    %v2381 = vpop.f32.mrb[0].mxu0
    %v2382 = vadd.f32 0.0, %v2381
    %v2383 = vpop.f32.mrb[0].mxu0
    %2384 = vdwg.mxu0
    %v2385 = vadd.f32 %v2315, %v2379
    %v2386 = vadd.f32 %v2316, %v2382
    %v2387 = vmul.f32 %v1839, %v178
    %v2388 = vmul.f32 %v1840, %v179
    %v2389 = vpack.c.bf16 %v2388, %v2387
    %s2390 = scalar_lea.vmem [#allocation2], 272
    %v2391 = vld [vmem:[%s2390] sm:$0xf]
    %v2392 = vld [vmem:[%s2390 + $0x4] sm:$0xf]
    %v2393 = vld [vmem:[%s2390 + $0x8] sm:$0xf]
    %v2394 = vld [vmem:[%s2390 + $0xc] sm:$0xf]
    %v2399 = vunpack.c.l.b16 %v2391
    %v2400 = vunpack.c.l.b16 %v2392
    %v2401 = vunpack.c.l.b16 %v2393
    %v2402 = vunpack.c.l.b16 %v2394
    %v2403 = vpack.c.b16 %v2400, %v2399
    %v2404 = vpack.c.b16 %v2402, %v2401
    %v2408 = vsel %vm204, %v2389, 0
    %2410 = vmatprep.subr.bf16.mxu0 0
    %2411 = vmatpush1.bf16.msra.mxu0 %v2403
    %2412 = vmatprep.subr.bf16.mxu0 0
    %2413 = vmatpush1.bf16.msra.mxu0 %v2404
    %2414 = vmatprep.subr.bf16.mxu0 0
    %2415 = vmatpush1.bf16.msra.mxu0 0
    %2416 = vmatprep.subr.bf16.mxu0 0
    %2417 = vmatpush1.bf16.msra.mxu0 0
    %2418 = vmatprep.subr.bf16.mxu0 0
    %2419 = vmatpush1.bf16.msra.mxu0 0
    %2420 = vmatprep.subr.bf16.mxu0 0
    %2421 = vmatpush1.bf16.msra.mxu0 0
    %2422 = vmatprep.subr.bf16.mxu0 0
    %2423 = vmatpush1.bf16.msra.mxu0 0
    %2424 = vmatprep.subr.bf16.mxu0 0
    %2425 = vmatpush1.bf16.msra.mxu0 0
    %2426 = vmatprep.subr.bf16.mxu0 0
    %2427 = vmatpush1.bf16.msra.mxu0 0
    %2428 = vmatprep.subr.bf16.mxu0 0
    %2429 = vmatpush1.bf16.msra.mxu0 0
    %2430 = vmatprep.subr.bf16.mxu0 0
    %2431 = vmatpush1.bf16.msra.mxu0 0
    %2432 = vmatprep.subr.bf16.mxu0 0
    %2433 = vmatpush1.bf16.msra.mxu0 0
    %2434 = vmatprep.subr.bf16.mxu0 0
    %2435 = vmatpush1.bf16.msra.mxu0 0
    %2436 = vmatprep.subr.bf16.mxu0 0
    %2437 = vmatpush1.bf16.msra.mxu0 0
    %2438 = vmatprep.subr.bf16.mxu0 0
    %2439 = vmatpush1.bf16.msra.mxu0 0
    %2440 = vmatprep.subr.bf16.mxu0 0
    %2441 = vmatpush1.bf16.msra.mxu0 0
    %2442 = vmatprep.mubr.bf16.mxu0 0
    %2443 = vmatmul.mubr.bf16.gmra.mrb[0].mxu0 %v2408
    %v2444 = vpop.f32.mrb[0].mxu0
    %v2445 = vadd.f32 0.0, %v2444
    %v2446 = vpop.f32.mrb[0].mxu0
    %v2447 = vpop.f32.mrb[0].mxu0
    %v2448 = vadd.f32 0.0, %v2447
    %v2449 = vpop.f32.mrb[0].mxu0
    %2450 = vdwg.mxu0
    %v2451 = vadd.f32 %v2385, %v2445
    %v2452 = vadd.f32 %v2386, %v2448
    %s2453 = scalar_lea.vmem %s11, 1
    %v2454 = vld [vmem:[%s2453] sm:$0x1]
    %v2456 = vlaneseq
    %v2457 = vshrl.u32 %v2456, 7
    %v2458 = vsub.s32 0, %v2457
    %v2459 = vrot.slane %v2454, %v2458
    %v2461 = vadd.f32 %v2451, %v2459
    %v2462 = vadd.f32 %v2452, %v2459
    %v2463 = vmax.f32 %v2461, 0.0
    %v2464 = vmax.f32 %v2462, 0.0
    %v2465 = vpack.c.bf16 %v2464, %v2463
    %s2466 = scalar_lea.vmem %s12, 32
    %v2467 = vld [vmem:[%s2466] sm:$0xf]
    %v2468 = vld [vmem:[%s2466 + $0x4] sm:$0xf]
    %v2469 = vld [vmem:[%s2466 + $0x8] sm:$0xf]
    %v2470 = vld [vmem:[%s2466 + $0xc] sm:$0xf]
    %v2471 = vld [vmem:[%s2466 + $0x10] sm:$0xf]
    %v2472 = vld [vmem:[%s2466 + $0x14] sm:$0xf]
    %v2473 = vld [vmem:[%s2466 + $0x18] sm:$0xf]
    %v2474 = vld [vmem:[%s2466 + $0x1c] sm:$0xf]
    %s2475 = scalar_lea.vmem %s13, 1
    %v2476 = vld [vmem:[%s2475] sm:$0x1]
    %v2478 = vlaneseq
    %v2479 = vshrl.u32 %v2478, 7
    %v2480 = vsub.s32 0, %v2479
    %v2481 = vrot.slane %v2476, %v2480
    %v2491 = vunpack.c.l.b16 %v2467
    %v2492 = vunpack.c.l.b16 %v2468
    %v2493 = vunpack.c.l.b16 %v2469
    %v2494 = vunpack.c.l.b16 %v2470
    %v2495 = vunpack.c.l.b16 %v2471
    %v2496 = vunpack.c.l.b16 %v2472
    %v2497 = vunpack.c.l.b16 %v2473
    %v2498 = vunpack.c.l.b16 %v2474
    %v2499 = vpack.c.b16 %v2492, %v2491
    %v2500 = vpack.c.b16 %v2494, %v2493
    %v2501 = vpack.c.b16 %v2496, %v2495
    %v2502 = vpack.c.b16 %v2498, %v2497
    %v2508 = vsel %vm1302, %v2465, 0
    %2510 = vmatprep.subr.bf16.mxu0 0
    %2511 = vmatpush1.bf16.msra.mxu0 %v2499
    %2512 = vmatprep.subr.bf16.mxu0 0
    %2513 = vmatpush1.bf16.msra.mxu0 %v2500
    %2514 = vmatprep.subr.bf16.mxu0 0
    %2515 = vmatpush1.bf16.msra.mxu0 %v2501
    %2516 = vmatprep.subr.bf16.mxu0 0
    %2517 = vmatpush1.bf16.msra.mxu0 %v2502
    %2518 = vmatprep.subr.bf16.mxu0 0
    %2519 = vmatpush1.bf16.msra.mxu0 0
    %2520 = vmatprep.subr.bf16.mxu0 0
    %2521 = vmatpush1.bf16.msra.mxu0 0
    %2522 = vmatprep.subr.bf16.mxu0 0
    %2523 = vmatpush1.bf16.msra.mxu0 0
    %2524 = vmatprep.subr.bf16.mxu0 0
    %2525 = vmatpush1.bf16.msra.mxu0 0
    %2526 = vmatprep.subr.bf16.mxu0 0
    %2527 = vmatpush1.bf16.msra.mxu0 0
    %2528 = vmatprep.subr.bf16.mxu0 0
    %2529 = vmatpush1.bf16.msra.mxu0 0
    %2530 = vmatprep.subr.bf16.mxu0 0
    %2531 = vmatpush1.bf16.msra.mxu0 0
    %2532 = vmatprep.subr.bf16.mxu0 0
    %2533 = vmatpush1.bf16.msra.mxu0 0
    %2534 = vmatprep.subr.bf16.mxu0 0
    %2535 = vmatpush1.bf16.msra.mxu0 0
    %2536 = vmatprep.subr.bf16.mxu0 0
    %2537 = vmatpush1.bf16.msra.mxu0 0
    %2538 = vmatprep.subr.bf16.mxu0 0
    %2539 = vmatpush1.bf16.msra.mxu0 0
    %2540 = vmatprep.subr.bf16.mxu0 0
    %2541 = vmatpush1.bf16.msra.mxu0 0
    %2542 = vmatprep.mubr.bf16.mxu0 0
    %2543 = vmatmul.mubr.bf16.gmra.mrb[0].mxu0 %v2508
    %v2544 = vpop.f32.mrb[0].mxu0
    %v2545 = vadd.f32 %v2481, %v2544
    %v2546 = vpop.f32.mrb[0].mxu0
    %v2547 = vpop.f32.mrb[0].mxu0
    %v2548 = vadd.f32 %v2481, %v2547
    %v2549 = vpop.f32.mrb[0].mxu0
    %2550 = vdwg.mxu0
    %v2551 = vadd.f32 %v2545, %v1835
    %v2552 = vadd.f32 %v2548, %v1836
    %v2553 = vsel %vm204, %v2551, 0.0
    %2554 = vadd.xlane.f32.xlu0 %v2553
    %v2555 = vpop.xlane.xlu0 %2554
    %v2556 = vsel %vm204, %v2552, 0.0
    %2557 = vadd.xlane.f32.xlu0 %v2556
    %v2558 = vpop.xlane.xlu0 %2557
    %v2559 = vmul.f32 %v2555, %v578
    %v2560 = vmul.f32 %v2558, %v578
    %v2561 = vsub.f32 %v2551, %v2559
    %v2562 = vsub.f32 %v2552, %v2560
    %v2563 = vmul.f32 %v2561, %v2561
    %v2564 = vmul.f32 %v2562, %v2562
    %v2565 = vsel %vm204, %v2563, 0.0
    %2566 = vadd.xlane.f32.xlu0 %v2565
    %v2567 = vpop.xlane.xlu0 %2566
    %v2568 = vsel %vm204, %v2564, 0.0
    %2569 = vadd.xlane.f32.xlu0 %v2568
    %v2570 = vpop.xlane.xlu0 %2569
    %v2571 = vmul.f32 %v2567, %v578
    %v2572 = vmul.f32 %v2570, %v578
    %v2573 = vadd.f32 %v2571, 1e-05
    %v2574 = vadd.f32 %v2572, 1e-05
    %v2575 = vrsqrt.pop %v2573
    %v2576 = vrsqrt.pop %v2574
    %v2577 = vmul.f32 %v2561, %v2575
    %v2578 = vmul.f32 %v2562, %v2576
    %s2579 = scalar_lea.vmem %s14, 1
    %v2580 = vld [vmem:[%s2579] sm:$0x1]
    %v2582 = vlaneseq
    %v2583 = vshrl.u32 %v2582, 7
    %v2584 = vsub.s32 0, %v2583
    %v2585 = vrot.slane %v2580, %v2584
    %v2587 = vmul.f32 %v2577, %v2585
    %v2588 = vmul.f32 %v2578, %v2585
    %s2589 = scalar_lea.vmem %s15, 1
    %v2590 = vld [vmem:[%s2589] sm:$0x1]
    %v2592 = vlaneseq
    %v2593 = vshrl.u32 %v2592, 7
    %v2594 = vsub.s32 0, %v2593
    %v2595 = vrot.slane %v2590, %v2594
    %v2597 = vadd.f32 %v2587, %v2595
    %v2598 = vadd.f32 %v2588, %v2595
    %v2599 = vmul.f32 %v2597, %v620
    %v2600 = vmul.f32 %v2598, %v625
    %2601 = vst.msk [vmem:[#allocation5] sm:$0xff] %vm204, %v2599
    %2602 = vst.msk [vmem:[#allocation5 + $0x8] sm:$0xff] %vm204, %v2600
    // Predicated region
    $region70: #{tpu_custom_call.1} parent=1 // pred_check
      _
    $region71: #{tpu_custom_call.1} parent=1 // pred_check_branch
      %2604 = sbr.rel (0) target = $region73
    $region72: #{tpu_custom_call.1} parent=1 // pred_region
      %s2606 = ssub.s32 256, 256
      %2607 = vsyncadd [#allocation4], %s2606
      %s2608 = sshll.u32 [#allocation5], 4
      %s2609 = int_to_ptr.vmem [resolvable:$true] %s2608
      %2614 = dma.vmem_to_hbm [thread:$0]  %s2609, 256, %s16, [#allocation4], 128, 128, 8
    $region73: #{tpu_custom_call.1} parent=1 // pred_fallthru
      _
    // Predicated region
    $region74: #{tpu_custom_call.1} parent=1 // pred_check
      _
    $region75: #{tpu_custom_call.1} parent=1 // pred_check_branch
      %2616 = sbr.rel (0) target = $region77
    $region76: #{tpu_custom_call.1} parent=1 // pred_region
      %2617 = dma.done [#allocation4], 256
    $region77: #{tpu_custom_call.1} parent=1 // pred_fallthru
      _
    %2618 = vsyncpa [#allocation3], 1
    %2619 = vsyncpa [#allocation4], 1

</llo_original>
